<compile_context>
chip_gen: v5e
topology: v5e:2x2
jax: 0.10.0
libtpu: 0.0.40
codegen_flags: <defaults>
</compile_context>

<pallas_src>
import numpy as np

import jax
import jax.numpy as jnp
from jax.experimental import pallas as pl
from jax.experimental.pallas import tpu as pltpu

_BN_EPS = 1e-5
_H0 = 4          # spatial size after the fc layer
_W0 = 4
_NBLK = 4        # number of up-blocks: 4 -> 8 -> 16 -> 32 -> 64


# ------------------------------ kernel factory --------------------------------

def _make_kernel(batch, mu_size, ncm):
    h0, w0 = _H0, _W0
    row_w = w0 * ncm            # lane width of every up-block activation (== 128)
    f32, bf16 = jnp.float32, jnp.bfloat16

    def kernel(emb_ref, eps_ref, noise_ref,
               caw_ref, cab_ref, fcw_ref, fcg_ref, fcb_ref, *rest):
        blk_refs = [rest[6 * i: 6 * i + 6] for i in range(_NBLK)]
        afin_ref = rest[6 * _NBLK]
        img_ref, m_ref, s_ref = rest[6 * _NBLK + 1: 6 * _NBLK + 4]
        x0_buf, zup_buf = rest[6 * _NBLK + 4: 6 * _NBLK + 6]

        # ---------------- head: C_Net + fc + BatchNorm1d + ReLU ----------------
        emb = emb_ref[...]
        h = jnp.maximum(
            jnp.dot(emb, caw_ref[...], preferred_element_type=f32) + cab_ref[...], 0.0)
        m = h[:, :mu_size]
        s = h[:, mu_size:]
        m_ref[...] = m
        s_ref[...] = s
        c0 = m + jnp.exp(0.5 * s) * eps_ref[...]

        d = jnp.concatenate([c0, noise_ref[...]], axis=1)              # (B, ncm)
        y = jnp.dot(d, fcw_ref[...], preferred_element_type=f32)       # (B, 16*ncm)
        mean = jnp.sum(y, axis=0, keepdims=True) * (1.0 / batch)
        diff = y - mean
        var = jnp.sum(diff * diff, axis=0, keepdims=True) * (1.0 / batch)
        yn = jnp.maximum(
            diff * (fcg_ref[...] * jax.lax.rsqrt(var + _BN_EPS)) + fcb_ref[...], 0.0)

        # scatter the (B, h0*row_w) rows into the lane-dense (B*h0, row_w) layout
        # (VMEM scratch only; never touches HBM).
        for b in range(batch):
            for hh in range(h0):
                x0_buf[b * h0 + hh: b * h0 + hh + 1, :] = \
                    yn[b: b + 1, hh * row_w: (hh + 1) * row_w]
        x = x0_buf[...]                                                # (B*h0, 128)

        # ----------------------------- 4 up-blocks -----------------------------
        h_in = h0
        for i in range(_NBLK):
            u_ref, a_ref, pr_ref, pe_ref, g_ref, b_ref = blk_refs[i]
            h_out = 2 * h_in
            m_out = batch * h_out

            # nearest-2x H-upsample: per-sample 0/1 repeat matmul (O(1) in batch size)
            u = u_ref[...]
            for b in range(batch):
                zup_buf[b * h_out:(b + 1) * h_out, :] = jnp.dot(
                    u, x[b * h_in:(b + 1) * h_in, :], preferred_element_type=f32)
            z_up = zup_buf[0:m_out, :]

            # dy = 0 / 2 conv taps: sublane roll + per-sample boundary-row masking
            hpos = jax.lax.broadcasted_iota(jnp.int32, (m_out, 1), 0) % h_out
            z_m = pltpu.roll(z_up, shift=1, axis=0) * (hpos != 0).astype(f32)
            z_p = (pltpu.roll(z_up, shift=m_out - 1, axis=0)
                   * (hpos != h_out - 1).astype(f32))
            z_cat = jnp.concatenate([z_m, z_up, z_p], axis=1)          # (m_out, 384)

            # 3x3 conv (W-upsample/pad/dx folded into a_cat): one K=384 bf16 matmul
            acc = jnp.dot(z_cat.astype(bf16), a_ref[...], preferred_element_type=f32)

            # BatchNorm2d (training-mode batch stats, two-pass variance) + ReLU
            inv_n = 1.0 / m_out
            ch_mean = jnp.dot(jnp.sum(acc, axis=0, keepdims=True), pr_ref[...],
                              preferred_element_type=f32) * inv_n
            mean_cols = jnp.dot(ch_mean, pe_ref[...], preferred_element_type=f32)
            dlt = acc - mean_cols
            ch_var = jnp.dot(jnp.sum(dlt * dlt, axis=0, keepdims=True), pr_ref[...],
                             preferred_element_type=f32) * inv_n
            var_cols = jnp.dot(ch_var, pe_ref[...], preferred_element_type=f32)
            scale = g_ref[...] * jax.lax.rsqrt(var_cols + _BN_EPS)
            x = jnp.maximum(dlt * scale + b_ref[...], 0.0)
            h_in = h_out

        # ---------------- final 3x3 conv (no upsample, no BN) + tanh ----------------
        m_fin = batch * h_in
        hpos = jax.lax.broadcasted_iota(jnp.int32, (m_fin, 1), 0) % h_in
        z_m = pltpu.roll(x, shift=1, axis=0) * (hpos != 0).astype(f32)
        z_p = pltpu.roll(x, shift=m_fin - 1, axis=0) * (hpos != h_in - 1).astype(f32)
        z_cat = jnp.concatenate([z_m, x, z_p], axis=1)
        acc = jnp.dot(z_cat.astype(bf16), afin_ref[...], preferred_element_type=f32)
        img_ref[...] = jnp.tanh(acc)     # lane-dense (B*64, 4*64) slab, cols = (c, w)

    return kernel


# ------------------------ constant matrices / weight folds --------------------

def _up_col_select(w_in):
    """M[dx][wi, wo] = 1 iff upsampled column (wo+dx-1) is in range and maps to wi."""
    w_out = 2 * w_in
    m = np.zeros((3, w_in, w_out), np.float32)
    for dx in range(3):
        for wo in range(w_out):
            wu = wo + dx - 1
            if 0 <= wu < w_out:
                m[dx, wu // 2, wo] = 1.0
    return m


def _plain_col_select(w):
    m = np.zeros((3, w, w), np.float32)
    for dx in range(3):
        for wo in range(w):
            wi = wo + dx - 1
            if 0 <= wi < w:
                m[dx, wi, wo] = 1.0
    return m


def _expand_up_weights(w_hwio, col_sel):
    """Fold W-upsample + W-padding + the 3 dx taps of a 3x3 HWIO conv into
    A_cat : (3*Win*Cin, Wout*Cout); rows ordered (dy, w, c), cols (w, c)."""
    _, _, c_in, c_out = w_hwio.shape
    w_in, w_out = col_sel.shape[1], col_sel.shape[2]
    a = jnp.einsum('yxio,xwv->ywivo', w_hwio, jnp.asarray(col_sel))
    return a.reshape(3 * w_in * c_in, w_out * c_out)


def _expand_final_weights(w_hwio, col_sel, c_pad=4):
    """Same fold for the last conv; output columns channel-major (c, w) and the 3
    channels zero-padded to c_pad so the output slab is a multiple of 128 lanes."""
    _, _, c_in, c_out = w_hwio.shape
    w_in, w_out = col_sel.shape[1], col_sel.shape[2]
    a = jnp.einsum('yxio,xwv->ywiov', w_hwio, jnp.asarray(col_sel))
    a = jnp.pad(a, ((0, 0), (0, 0), (0, 0), (0, c_pad - c_out), (0, 0)))
    return a.reshape(3 * w_in * c_in, c_pad * w_out)


def prepare_operands(params):
    """One-time weight preprocessing, hoisted out of the per-call forward path."""
    f32, bf16 = jnp.float32, jnp.bfloat16
    h0, w0 = _H0, _W0
    ncm = params["fc_w"].shape[0]

    ca_w = params["ca_w"].astype(f32)
    ca_b = params["ca_b"].astype(f32).reshape(1, -1)

    # fc output feature j in (h, w, c) order == torch .view(B, C, 4, 4) feature (c, h, w)
    perm = np.empty((h0 * w0 * ncm,), np.int32)
    for hh in range(h0):
        for ww in range(w0):
            for cc in range(ncm):
                perm[(hh * w0 + ww) * ncm + cc] = (cc * h0 + hh) * w0 + ww
    fc_w = params["fc_w"].astype(f32)[:, perm]
    fc_g = params["fc_bn_g"].astype(f32)[perm].reshape(1, -1)
    fc_b = params["fc_bn_b"].astype(f32)[perm].reshape(1, -1)

    ops = [ca_w, ca_b, fc_w, fc_g, fc_b]

    h, c = h0, ncm
    for blk in params["up"]:
        h_out, c_out = 2 * h, c // 2
        # per-sample nearest-2x row repeat matrix (batch-size independent)
        u = np.zeros((h_out, h), np.float32)
        u[np.arange(h_out), np.arange(h_out) // 2] = 1.0
        # dy-concatenated, W-folded conv weights in bf16 (K = 384 matmul operand)
        a_cat = _expand_up_weights(blk["w"].astype(f32), _up_col_select(h)).astype(bf16)
        # factored channel-averaging matrices for in-kernel BatchNorm2d statistics
        p_red = np.kron(np.ones((h_out, 1), np.float32) / h_out,
                        np.eye(c_out, dtype=np.float32))
        p_exp = np.kron(np.ones((1, h_out), np.float32), np.eye(c_out, dtype=np.float32))
        g_cols = jnp.tile(blk["g"].astype(f32), h_out).reshape(1, -1)
        b_cols = jnp.tile(blk["b"].astype(f32), h_out).reshape(1, -1)
        ops += [jnp.asarray(u), a_cat, jnp.asarray(p_red), jnp.asarray(p_exp),
                g_cols, b_cols]
        h, c = h_out, c_out

    a_fin = _expand_final_weights(params["last_w"].astype(f32),
                                  _plain_col_select(h)).astype(bf16)
    ops.append(a_fin)
    return tuple(ops)


# -------------------------------- parameters -----------------------------------

def init_params(key, embedding_size, mu_size, noise_size):
    ncm = noise_size + mu_size
    ks = jax.random.split(key, 8)

    def w(k, shape, fan_in):
        return jax.random.normal(k, shape, jnp.float32) / jnp.sqrt(float(fan_in))

    p = {
        "ca_w": w(ks[0], (embedding_size, 2 * mu_size), embedding_size),
        "ca_b": jnp.zeros((2 * mu_size,), jnp.float32),
        "fc_w": w(ks[1], (ncm, ncm * 16), ncm),
        "fc_bn_g": jnp.ones((ncm * 16,), jnp.float32),
        "fc_bn_b": jnp.zeros((ncm * 16,), jnp.float32),
        "up": [],
        "last_w": w(ks[6], (3, 3, ncm // 16, 3), 9 * (ncm // 16)),
    }
    chans = [ncm, ncm // 2, ncm // 4, ncm // 8, ncm // 16]
    for i in range(4):
        cin, cout = chans[i], chans[i + 1]
        p["up"].append({
            "w": w(ks[2 + i], (3, 3, cin, cout), 9 * cin),
            "g": jnp.ones((cout,), jnp.float32),
            "b": jnp.zeros((cout,), jnp.float32),
        })
    return p


# ---------------------------------- forward ------------------------------------

def stage1_generator_forward(prepared, embedding, noise, eps):
    """Fused Pallas forward.  Returns (image NCHW (B, 3, 64, 64), mu, logvar)."""
    f32 = jnp.float32
    batch = embedding.shape[0]
    mu_size = eps.shape[1]
    ncm = noise.shape[1] + mu_size
    h_fin = _H0 * (2 ** _NBLK)          # 64

    kernel = _make_kernel(batch, mu_size, ncm)
    slab, m, s = pl.pallas_call(
        kernel,
        out_shape=(
            jax.ShapeDtypeStruct((batch * h_fin, 4 * h_fin), f32),   # (b*h, c*w) slab
            jax.ShapeDtypeStruct((batch, mu_size), f32),
            jax.ShapeDtypeStruct((batch, mu_size), f32),
        ),
        scratch_shapes=[
            pltpu.VMEM((batch * _H0, _W0 * ncm), f32),     # head -> block-0 layout buffer
            pltpu.VMEM((batch * h_fin, _W0 * ncm), f32),   # shared H-upsample buffer
        ],
    )(embedding.astype(f32), eps.astype(f32), noise.astype(f32), *prepared)

    # Wrapper-side layout plumbing only: lane-dense slab -> NCHW, drop the pad channel.
    img = slab.reshape(batch, h_fin, 4, h_fin).transpose(0, 2, 1, 3)[:, :3]
    return img, m, s


# -------------------------- plain-JAX reference check ---------------------------

def _reference_forward(params, embedding, noise, eps):
    mu_size = eps.shape[1]
    ncm = noise.shape[1] + mu_size
    batch = embedding.shape[0]
    h = jnp.maximum(embedding @ params["ca_w"] + params["ca_b"], 0.0)
    m, s = h[:, :mu_size], h[:, mu_size:]
    c0 = m + jnp.exp(0.5 * s) * eps
    d = jnp.concatenate([c0, noise], axis=1)
    y = d @ params["fc_w"]
    mean = jnp.mean(y, axis=0)
    var = jnp.mean((y - mean) ** 2, axis=0)
    y = jnp.maximum((y - mean) * params["fc_bn_g"] * jax.lax.rsqrt(var + _BN_EPS)
                    + params["fc_bn_b"], 0.0)
    x = y.reshape(batch, ncm, 4, 4).transpose(0, 2, 3, 1)          # NHWC
    for blk in params["up"]:
        x = jnp.repeat(jnp.repeat(x, 2, axis=1), 2, axis=2)         # nearest x2
        x = jax.lax.conv_general_dilated(
            x, blk["w"], (1, 1), "SAME", dimension_numbers=("NHWC", "HWIO", "NHWC"))
        mean = jnp.mean(x, axis=(0, 1, 2))
        var = jnp.mean((x - mean) ** 2, axis=(0, 1, 2))
        x = jnp.maximum((x - mean) * blk["g"] * jax.lax.rsqrt(var + _BN_EPS) + blk["b"], 0.0)
    x = jax.lax.conv_general_dilated(
        x, params["last_w"], (1, 1), "SAME", dimension_numbers=("NHWC", "HWIO", "NHWC"))
    return jnp.tanh(x).transpose(0, 3, 1, 2), m, s


# ------------------------------------- main -------------------------------------

if __name__ == "__main__":
    embedding_size, mu_size, noise_size = 32, 16, 16      # ncm = 32 -> 64x64 RGB output
    batch = 2

    key = jax.random.PRNGKey(0)
    kp, ke, kn, kz = jax.random.split(key, 4)
    params = init_params(kp, embedding_size, mu_size, noise_size)
    embedding = jax.random.normal(ke, (batch, embedding_size), jnp.float32)
    noise = jax.random.normal(kn, (batch, noise_size), jnp.float32)
    eps = jax.random.normal(kz, (batch, mu_size), jnp.float32)

    prepared = prepare_operands(params)          # one-time weight preprocessing (hoisted)

    fwd = jax.jit(stage1_generator_forward)
    img, m, s = fwd(prepared, embedding, noise, eps)
    jax.block_until_ready((img, m, s))

    assert img.shape == (batch, 3, 64, 64), img.shape
    assert m.shape == (batch, mu_size) and s.shape == (batch, mu_size)
    assert bool(jnp.all(jnp.isfinite(img)))

    # Numerical check against a plain-XLA f32 implementation of the same module.
    img_r, m_r, s_r = jax.jit(_reference_forward)(params, embedding, noise, eps)
    np.testing.assert_allclose(np.asarray(m), np.asarray(m_r), rtol=2e-3, atol=2e-3)
    np.testing.assert_allclose(np.asarray(s), np.asarray(s_r), rtol=2e-3, atol=2e-3)
    # conv weights / matmul operands run in bf16 on the MXU -> looser image tolerance
    np.testing.assert_allclose(np.asarray(img), np.asarray(img_r), rtol=1e-1, atol=1e-1)
    assert float(jnp.mean(jnp.abs(img - img_r))) < 2e-2

    print("KERNEL_OK")
</pallas_src>

<mosaic_0001>
module attributes {stable_mosaic.version = 11 : i64} {
  func.func @kernel(%arg0: memref<2x32xf32, #tpu.memory_space<vmem>>, %arg1: memref<2x16xf32, #tpu.memory_space<vmem>>, %arg2: memref<2x16xf32, #tpu.memory_space<vmem>>, %arg3: memref<32x32xf32, #tpu.memory_space<vmem>>, %arg4: memref<1x32xf32, #tpu.memory_space<vmem>>, %arg5: memref<32x512xf32, #tpu.memory_space<vmem>>, %arg6: memref<1x512xf32, #tpu.memory_space<vmem>>, %arg7: memref<1x512xf32, #tpu.memory_space<vmem>>, %arg8: memref<8x4xf32, #tpu.memory_space<vmem>>, %arg9: memref<384x128xbf16, #tpu.memory_space<vmem>>, %arg10: memref<128x16xf32, #tpu.memory_space<vmem>>, %arg11: memref<16x128xf32, #tpu.memory_space<vmem>>, %arg12: memref<1x128xf32, #tpu.memory_space<vmem>>, %arg13: memref<1x128xf32, #tpu.memory_space<vmem>>, %arg14: memref<16x8xf32, #tpu.memory_space<vmem>>, %arg15: memref<384x128xbf16, #tpu.memory_space<vmem>>, %arg16: memref<128x8xf32, #tpu.memory_space<vmem>>, %arg17: memref<8x128xf32, #tpu.memory_space<vmem>>, %arg18: memref<1x128xf32, #tpu.memory_space<vmem>>, %arg19: memref<1x128xf32, #tpu.memory_space<vmem>>, %arg20: memref<32x16xf32, #tpu.memory_space<vmem>>, %arg21: memref<384x128xbf16, #tpu.memory_space<vmem>>, %arg22: memref<128x4xf32, #tpu.memory_space<vmem>>, %arg23: memref<4x128xf32, #tpu.memory_space<vmem>>, %arg24: memref<1x128xf32, #tpu.memory_space<vmem>>, %arg25: memref<1x128xf32, #tpu.memory_space<vmem>>, %arg26: memref<64x32xf32, #tpu.memory_space<vmem>>, %arg27: memref<384x128xbf16, #tpu.memory_space<vmem>>, %arg28: memref<128x2xf32, #tpu.memory_space<vmem>>, %arg29: memref<2x128xf32, #tpu.memory_space<vmem>>, %arg30: memref<1x128xf32, #tpu.memory_space<vmem>>, %arg31: memref<1x128xf32, #tpu.memory_space<vmem>>, %arg32: memref<384x256xbf16, #tpu.memory_space<vmem>>, %arg33: memref<128x256xf32, #tpu.memory_space<vmem>>, %arg34: memref<2x16xf32, #tpu.memory_space<vmem>>, %arg35: memref<2x16xf32, #tpu.memory_space<vmem>>, %arg36: memref<8x128xf32, #tpu.memory_space<vmem>>, %arg37: memref<128x128xf32, #tpu.memory_space<vmem>>) attributes {dimension_semantics = [], scalar_prefetch = 0 : i64, scratch_operands = 2 : i64, tpu.core_type = #tpu.core_type<tc>} {
    %c0 = arith.constant 0 : index
    %c0_0 = arith.constant 0 : index
    %0 = vector.load %arg0[%c0, %c0_0] : memref<2x32xf32, #tpu.memory_space<vmem>>, vector<2x32xf32>
    %c0_1 = arith.constant 0 : index
    %c0_2 = arith.constant 0 : index
    %1 = vector.load %arg3[%c0_1, %c0_2] : memref<32x32xf32, #tpu.memory_space<vmem>>, vector<32x32xf32>
    %cst = arith.constant dense<0.000000e+00> : vector<2x32xf32>
    %2 = tpu.matmul %0, %1, %cst {dimension_numbers = #tpu.dot_dimension_numbers<[1], [0], [0], [1], [0, 0, 1, 1], [], []>} : vector<2x32xf32>, vector<32x32xf32>, vector<2x32xf32> -> vector<2x32xf32>
    %c0_3 = arith.constant 0 : index
    %c0_4 = arith.constant 0 : index
    %3 = vector.load %arg4[%c0_3, %c0_4] : memref<1x32xf32, #tpu.memory_space<vmem>>, vector<1x32xf32>
    %4 = vector.broadcast %3 : vector<1x32xf32> to vector<2x32xf32>
    %5 = arith.addf %2, %4 : vector<2x32xf32>
    %cst_5 = arith.constant 0.000000e+00 : f32
    %6 = vector.broadcast %cst_5 : f32 to vector<2x32xf32>
    %7 = arith.maximumf %5, %6 : vector<2x32xf32>
    %8 = vector.extract_strided_slice %7 {offsets = [0, 0], sizes = [2, 16], strides = [1, 1]} : vector<2x32xf32> to vector<2x16xf32>
    %9 = vector.extract_strided_slice %7 {offsets = [0, 16], sizes = [2, 16], strides = [1, 1]} : vector<2x32xf32> to vector<2x16xf32>
    %c0_6 = arith.constant 0 : index
    %c0_7 = arith.constant 0 : index
    %10 = vector.load %arg34[%c0_6, %c0_7] : memref<2x16xf32, #tpu.memory_space<vmem>>, vector<2x16xf32>
    tpu.vector_store %arg34[%c0_6, %c0_7], %8 {strides = array<i32>} : memref<2x16xf32, #tpu.memory_space<vmem>>, vector<2x16xf32>,
    %c0_8 = arith.constant 0 : index
    %c0_9 = arith.constant 0 : index
    %11 = vector.load %arg35[%c0_8, %c0_9] : memref<2x16xf32, #tpu.memory_space<vmem>>, vector<2x16xf32>
    tpu.vector_store %arg35[%c0_8, %c0_9], %9 {strides = array<i32>} : memref<2x16xf32, #tpu.memory_space<vmem>>, vector<2x16xf32>,
    %cst_10 = arith.constant 5.000000e-01 : f32
    %12 = vector.broadcast %cst_10 : f32 to vector<2x16xf32>
    %13 = arith.mulf %12, %9 : vector<2x16xf32>
    %14 = math.exp %13 : vector<2x16xf32>
    %c0_11 = arith.constant 0 : index
    %c0_12 = arith.constant 0 : index
    %15 = vector.load %arg1[%c0_11, %c0_12] : memref<2x16xf32, #tpu.memory_space<vmem>>, vector<2x16xf32>
    %16 = arith.mulf %14, %15 : vector<2x16xf32>
    %17 = arith.addf %8, %16 : vector<2x16xf32>
    %c0_13 = arith.constant 0 : index
    %c0_14 = arith.constant 0 : index
    %18 = vector.load %arg2[%c0_13, %c0_14] : memref<2x16xf32, #tpu.memory_space<vmem>>, vector<2x16xf32>
    %19 = tpu.concatenate %17, %18 in 1 : vector<2x16xf32>, vector<2x16xf32> -> vector<2x32xf32>
    %c0_15 = arith.constant 0 : index
    %c0_16 = arith.constant 0 : index
    %20 = vector.load %arg5[%c0_15, %c0_16] : memref<32x512xf32, #tpu.memory_space<vmem>>, vector<32x512xf32>
    %cst_17 = arith.constant dense<0.000000e+00> : vector<2x512xf32>
    %21 = tpu.matmul %19, %20, %cst_17 {dimension_numbers = #tpu.dot_dimension_numbers<[1], [0], [0], [1], [0, 0, 1, 1], [], []>} : vector<2x32xf32>, vector<32x512xf32>, vector<2x512xf32> -> vector<2x512xf32>
    %cst_18 = arith.constant dense<0.000000e+00> : vector<512xf32>
    %22 = vector.multi_reduction <add>, %21, %cst_18 [0] : vector<2x512xf32> to vector<512xf32>
    %23 = vector.shape_cast %22 : vector<512xf32> to vector<1x512xf32>
    %cst_19 = arith.constant 5.000000e-01 : f32
    %24 = vector.broadcast %cst_19 : f32 to vector<1x512xf32>
    %25 = arith.mulf %23, %24 : vector<1x512xf32>
    %26 = vector.broadcast %25 : vector<1x512xf32> to vector<2x512xf32>
    %27 = arith.subf %21, %26 : vector<2x512xf32>
    %28 = arith.mulf %27, %27 : vector<2x512xf32>
    %cst_20 = arith.constant dense<0.000000e+00> : vector<512xf32>
    %29 = vector.multi_reduction <add>, %28, %cst_20 [0] : vector<2x512xf32> to vector<512xf32>
    %30 = vector.shape_cast %29 : vector<512xf32> to vector<1x512xf32>
    %cst_21 = arith.constant 5.000000e-01 : f32
    %31 = vector.broadcast %cst_21 : f32 to vector<1x512xf32>
    %32 = arith.mulf %30, %31 : vector<1x512xf32>
    %c0_22 = arith.constant 0 : index
    %c0_23 = arith.constant 0 : index
    %33 = vector.load %arg6[%c0_22, %c0_23] : memref<1x512xf32, #tpu.memory_space<vmem>>, vector<1x512xf32>
    %cst_24 = arith.constant 9.99999974E-6 : f32
    %34 = vector.broadcast %cst_24 : f32 to vector<1x512xf32>
    %35 = arith.addf %32, %34 : vector<1x512xf32>
    %36 = math.rsqrt %35 : vector<1x512xf32>
    %37 = arith.mulf %33, %36 : vector<1x512xf32>
    %38 = vector.broadcast %37 : vector<1x512xf32> to vector<2x512xf32>
    %39 = arith.mulf %27, %38 : vector<2x512xf32>
    %c0_25 = arith.constant 0 : index
    %c0_26 = arith.constant 0 : index
    %40 = vector.load %arg7[%c0_25, %c0_26] : memref<1x512xf32, #tpu.memory_space<vmem>>, vector<1x512xf32>
    %41 = vector.broadcast %40 : vector<1x512xf32> to vector<2x512xf32>
    %42 = arith.addf %39, %41 : vector<2x512xf32>
    %cst_27 = arith.constant 0.000000e+00 : f32
    %43 = vector.broadcast %cst_27 : f32 to vector<2x512xf32>
    %44 = arith.maximumf %42, %43 : vector<2x512xf32>
    %45 = vector.extract_strided_slice %44 {offsets = [0, 0], sizes = [1, 128], strides = [1, 1]} : vector<2x512xf32> to vector<1x128xf32>
    %c0_28 = arith.constant 0 : index
    %c0_29 = arith.constant 0 : index
    %46 = vector.load %arg36[%c0_28, %c0_29] : memref<8x128xf32, #tpu.memory_space<vmem>>, vector<1x128xf32>
    tpu.vector_store %arg36[%c0_28, %c0_29], %45 {strides = array<i32>} : memref<8x128xf32, #tpu.memory_space<vmem>>, vector<1x128xf32>,
    %47 = vector.extract_strided_slice %44 {offsets = [0, 128], sizes = [1, 128], strides = [1, 1]} : vector<2x512xf32> to vector<1x128xf32>
    %c1 = arith.constant 1 : index
    %c0_30 = arith.constant 0 : index
    %48 = vector.load %arg36[%c1, %c0_30] : memref<8x128xf32, #tpu.memory_space<vmem>>, vector<1x128xf32>
    tpu.vector_store %arg36[%c1, %c0_30], %47 {strides = array<i32>} : memref<8x128xf32, #tpu.memory_space<vmem>>, vector<1x128xf32>,
    %49 = vector.extract_strided_slice %44 {offsets = [0, 256], sizes = [1, 128], strides = [1, 1]} : vector<2x512xf32> to vector<1x128xf32>
    %c2 = arith.constant 2 : index
    %c0_31 = arith.constant 0 : index
    %50 = vector.load %arg36[%c2, %c0_31] : memref<8x128xf32, #tpu.memory_space<vmem>>, vector<1x128xf32>
    tpu.vector_store %arg36[%c2, %c0_31], %49 {strides = array<i32>} : memref<8x128xf32, #tpu.memory_space<vmem>>, vector<1x128xf32>,
    %51 = vector.extract_strided_slice %44 {offsets = [0, 384], sizes = [1, 128], strides = [1, 1]} : vector<2x512xf32> to vector<1x128xf32>
    %c3 = arith.constant 3 : index
    %c0_32 = arith.constant 0 : index
    %52 = vector.load %arg36[%c3, %c0_32] : memref<8x128xf32, #tpu.memory_space<vmem>>, vector<1x128xf32>
    tpu.vector_store %arg36[%c3, %c0_32], %51 {strides = array<i32>} : memref<8x128xf32, #tpu.memory_space<vmem>>, vector<1x128xf32>,
    %53 = vector.extract_strided_slice %44 {offsets = [1, 0], sizes = [1, 128], strides = [1, 1]} : vector<2x512xf32> to vector<1x128xf32>
    %c4 = arith.constant 4 : index
    %c0_33 = arith.constant 0 : index
    %54 = vector.load %arg36[%c4, %c0_33] : memref<8x128xf32, #tpu.memory_space<vmem>>, vector<1x128xf32>
    tpu.vector_store %arg36[%c4, %c0_33], %53 {strides = array<i32>} : memref<8x128xf32, #tpu.memory_space<vmem>>, vector<1x128xf32>,
    %55 = vector.extract_strided_slice %44 {offsets = [1, 128], sizes = [1, 128], strides = [1, 1]} : vector<2x512xf32> to vector<1x128xf32>
    %c5 = arith.constant 5 : index
    %c0_34 = arith.constant 0 : index
    %56 = vector.load %arg36[%c5, %c0_34] : memref<8x128xf32, #tpu.memory_space<vmem>>, vector<1x128xf32>
    tpu.vector_store %arg36[%c5, %c0_34], %55 {strides = array<i32>} : memref<8x128xf32, #tpu.memory_space<vmem>>, vector<1x128xf32>,
    %57 = vector.extract_strided_slice %44 {offsets = [1, 256], sizes = [1, 128], strides = [1, 1]} : vector<2x512xf32> to vector<1x128xf32>
    %c6 = arith.constant 6 : index
    %c0_35 = arith.constant 0 : index
    %58 = vector.load %arg36[%c6, %c0_35] : memref<8x128xf32, #tpu.memory_space<vmem>>, vector<1x128xf32>
    tpu.vector_store %arg36[%c6, %c0_35], %57 {strides = array<i32>} : memref<8x128xf32, #tpu.memory_space<vmem>>, vector<1x128xf32>,
    %59 = vector.extract_strided_slice %44 {offsets = [1, 384], sizes = [1, 128], strides = [1, 1]} : vector<2x512xf32> to vector<1x128xf32>
    %c7 = arith.constant 7 : index
    %c0_36 = arith.constant 0 : index
    %60 = vector.load %arg36[%c7, %c0_36] : memref<8x128xf32, #tpu.memory_space<vmem>>, vector<1x128xf32>
    tpu.vector_store %arg36[%c7, %c0_36], %59 {strides = array<i32>} : memref<8x128xf32, #tpu.memory_space<vmem>>, vector<1x128xf32>,
    %c0_37 = arith.constant 0 : index
    %c0_38 = arith.constant 0 : index
    %61 = vector.load %arg36[%c0_37, %c0_38] : memref<8x128xf32, #tpu.memory_space<vmem>>, vector<8x128xf32>
    %c0_39 = arith.constant 0 : index
    %c0_40 = arith.constant 0 : index
    %62 = vector.load %arg8[%c0_39, %c0_40] : memref<8x4xf32, #tpu.memory_space<vmem>>, vector<8x4xf32>
    %63 = vector.extract_strided_slice %61 {offsets = [0, 0], sizes = [4, 128], strides = [1, 1]} : vector<8x128xf32> to vector<4x128xf32>
    %cst_41 = arith.constant dense<0.000000e+00> : vector<8x128xf32>
    %64 = tpu.matmul %62, %63, %cst_41 {dimension_numbers = #tpu.dot_dimension_numbers<[1], [0], [0], [1], [0, 0, 1, 1], [], []>} : vector<8x4xf32>, vector<4x128xf32>, vector<8x128xf32> -> vector<8x128xf32>
    %c0_42 = arith.constant 0 : index
    %c0_43 = arith.constant 0 : index
    %65 = vector.load %arg37[%c0_42, %c0_43] : memref<128x128xf32, #tpu.memory_space<vmem>>, vector<8x128xf32>
    tpu.vector_store %arg37[%c0_42, %c0_43], %64 {strides = array<i32>} : memref<128x128xf32, #tpu.memory_space<vmem>>, vector<8x128xf32>,
    %66 = vector.extract_strided_slice %61 {offsets = [4, 0], sizes = [4, 128], strides = [1, 1]} : vector<8x128xf32> to vector<4x128xf32>
    %cst_44 = arith.constant dense<0.000000e+00> : vector<8x128xf32>
    %67 = tpu.matmul %62, %66, %cst_44 {dimension_numbers = #tpu.dot_dimension_numbers<[1], [0], [0], [1], [0, 0, 1, 1], [], []>} : vector<8x4xf32>, vector<4x128xf32>, vector<8x128xf32> -> vector<8x128xf32>
    %c8 = arith.constant 8 : index
    %c0_45 = arith.constant 0 : index
    %68 = vector.load %arg37[%c8, %c0_45] : memref<128x128xf32, #tpu.memory_space<vmem>>, vector<8x128xf32>
    tpu.vector_store %arg37[%c8, %c0_45], %67 {strides = array<i32>} : memref<128x128xf32, #tpu.memory_space<vmem>>, vector<8x128xf32>,
    %c0_46 = arith.constant 0 : index
    %c0_47 = arith.constant 0 : index
    %69 = vector.load %arg37[%c0_46, %c0_47] : memref<128x128xf32, #tpu.memory_space<vmem>>, vector<16x128xf32>
    %70 = tpu.iota {dimensions = array<i32: 0>} : vector<16x1xi32>
    %c8_i32 = arith.constant 8 : i32
    %c0_i32 = arith.constant 0 : i32
    %71 = arith.cmpi eq, %c8_i32, %c0_i32 : i32
    %c1_i32 = arith.constant 1 : i32
    %72 = arith.select %71, %c1_i32, %c8_i32 : i32
    %73 = vector.broadcast %72 : i32 to vector<16x1xi32>
    %74 = arith.remsi %70, %73 : vector<16x1xi32>
    %c0_i32_48 = arith.constant 0 : i32
    %75 = vector.broadcast %c0_i32_48 : i32 to vector<16x1xi32>
    %76 = arith.cmpi ne, %74, %75 : vector<16x1xi32>
    %c0_i32_49 = arith.constant 0 : i32
    %77 = vector.broadcast %c0_i32_49 : i32 to vector<16x1xi32>
    %78 = arith.cmpi slt, %74, %77 : vector<16x1xi32>
    %c0_i32_50 = arith.constant 0 : i32
    %79 = arith.cmpi slt, %72, %c0_i32_50 : i32
    %80 = vector.broadcast %79 : i1 to vector<16x1xi1>
    %81 = vector.broadcast %80 : vector<16x1xi1> to vector<16x1xi1>
    %82 = arith.xori %78, %81 : vector<16x1xi1>
    %83 = arith.andi %82, %76 : vector<16x1xi1>
    %84 = vector.broadcast %72 : i32 to vector<16x1xi32>
    %85 = arith.addi %74, %84 : vector<16x1xi32>
    %86 = arith.select %83, %85, %74 : vector<16x1xi1>, vector<16x1xi32>
    %c1_i32_51 = arith.constant 1 : i32
    %87 = tpu.dynamic_rotate %69 by %c1_i32_51 dim 0 : vector<16x128xf32>, i32 -> vector<16x128xf32>
    %c0_i32_52 = arith.constant 0 : i32
    %88 = vector.broadcast %c0_i32_52 : i32 to vector<16x1xi32>
    %89 = arith.cmpi ne, %86, %88 : vector<16x1xi32>
    %90 = arith.extui %89 : vector<16x1xi1> to vector<16x1xi32>
    %91 = arith.sitofp %90 : vector<16x1xi32> to vector<16x1xf32>
    %92 = vector.broadcast %91 : vector<16x1xf32> to vector<16x128xf32>
    %93 = arith.mulf %87, %92 : vector<16x128xf32>
    %c15_i32 = arith.constant 15 : i32
    %94 = tpu.dynamic_rotate %69 by %c15_i32 dim 0 : vector<16x128xf32>, i32 -> vector<16x128xf32>
    %c7_i32 = arith.constant 7 : i32
    %95 = vector.broadcast %c7_i32 : i32 to vector<16x1xi32>
    %96 = arith.cmpi ne, %86, %95 : vector<16x1xi32>
    %97 = arith.extui %96 : vector<16x1xi1> to vector<16x1xi32>
    %98 = arith.sitofp %97 : vector<16x1xi32> to vector<16x1xf32>
    %99 = vector.broadcast %98 : vector<16x1xf32> to vector<16x128xf32>
    %100 = arith.mulf %94, %99 : vector<16x128xf32>
    %101 = tpu.concatenate %93, %69, %100 in 1 : vector<16x128xf32>, vector<16x128xf32>, vector<16x128xf32> -> vector<16x384xf32>
    %102 = arith.truncf %101 : vector<16x384xf32> to vector<16x384xbf16>
    %c0_53 = arith.constant 0 : index
    %c0_54 = arith.constant 0 : index
    %103 = vector.load %arg9[%c0_53, %c0_54] : memref<384x128xbf16, #tpu.memory_space<vmem>>, vector<384x128xbf16>
    %cst_55 = arith.constant dense<0.000000e+00> : vector<16x128xf32>
    %104 = tpu.matmul %102, %103, %cst_55 {dimension_numbers = #tpu.dot_dimension_numbers<[1], [0], [0], [1], [0, 0, 1, 1], [], []>} : vector<16x384xbf16>, vector<384x128xbf16>, vector<16x128xf32> -> vector<16x128xf32>
    %cst_56 = arith.constant dense<0.000000e+00> : vector<128xf32>
    %105 = vector.multi_reduction <add>, %104, %cst_56 [0] : vector<16x128xf32> to vector<128xf32>
    %106 = vector.shape_cast %105 : vector<128xf32> to vector<1x128xf32>
    %c0_57 = arith.constant 0 : index
    %c0_58 = arith.constant 0 : index
    %107 = vector.load %arg10[%c0_57, %c0_58] : memref<128x16xf32, #tpu.memory_space<vmem>>, vector<128x16xf32>
    %cst_59 = arith.constant dense<0.000000e+00> : vector<1x16xf32>
    %108 = tpu.matmul %106, %107, %cst_59 {dimension_numbers = #tpu.dot_dimension_numbers<[1], [0], [0], [1], [0, 0, 1, 1], [], []>} : vector<1x128xf32>, vector<128x16xf32>, vector<1x16xf32> -> vector<1x16xf32>
    %cst_60 = arith.constant 6.250000e-02 : f32
    %109 = vector.broadcast %cst_60 : f32 to vector<1x16xf32>
    %110 = arith.mulf %108, %109 : vector<1x16xf32>
    %c0_61 = arith.constant 0 : index
    %c0_62 = arith.constant 0 : index
    %111 = vector.load %arg11[%c0_61, %c0_62] : memref<16x128xf32, #tpu.memory_space<vmem>>, vector<16x128xf32>
    %cst_63 = arith.constant dense<0.000000e+00> : vector<1x128xf32>
    %112 = tpu.matmul %110, %111, %cst_63 {dimension_numbers = #tpu.dot_dimension_numbers<[1], [0], [0], [1], [0, 0, 1, 1], [], []>} : vector<1x16xf32>, vector<16x128xf32>, vector<1x128xf32> -> vector<1x128xf32>
    %113 = vector.broadcast %112 : vector<1x128xf32> to vector<16x128xf32>
    %114 = arith.subf %104, %113 : vector<16x128xf32>
    %115 = arith.mulf %114, %114 : vector<16x128xf32>
    %cst_64 = arith.constant dense<0.000000e+00> : vector<128xf32>
    %116 = vector.multi_reduction <add>, %115, %cst_64 [0] : vector<16x128xf32> to vector<128xf32>
    %117 = vector.shape_cast %116 : vector<128xf32> to vector<1x128xf32>
    %c0_65 = arith.constant 0 : index
    %c0_66 = arith.constant 0 : index
    %118 = vector.load %arg10[%c0_65, %c0_66] : memref<128x16xf32, #tpu.memory_space<vmem>>, vector<128x16xf32>
    %cst_67 = arith.constant dense<0.000000e+00> : vector<1x16xf32>
    %119 = tpu.matmul %117, %118, %cst_67 {dimension_numbers = #tpu.dot_dimension_numbers<[1], [0], [0], [1], [0, 0, 1, 1], [], []>} : vector<1x128xf32>, vector<128x16xf32>, vector<1x16xf32> -> vector<1x16xf32>
    %cst_68 = arith.constant 6.250000e-02 : f32
    %120 = vector.broadcast %cst_68 : f32 to vector<1x16xf32>
    %121 = arith.mulf %119, %120 : vector<1x16xf32>
    %c0_69 = arith.constant 0 : index
    %c0_70 = arith.constant 0 : index
    %122 = vector.load %arg11[%c0_69, %c0_70] : memref<16x128xf32, #tpu.memory_space<vmem>>, vector<16x128xf32>
    %cst_71 = arith.constant dense<0.000000e+00> : vector<1x128xf32>
    %123 = tpu.matmul %121, %122, %cst_71 {dimension_numbers = #tpu.dot_dimension_numbers<[1], [0], [0], [1], [0, 0, 1, 1], [], []>} : vector<1x16xf32>, vector<16x128xf32>, vector<1x128xf32> -> vector<1x128xf32>
    %c0_72 = arith.constant 0 : index
    %c0_73 = arith.constant 0 : index
    %124 = vector.load %arg12[%c0_72, %c0_73] : memref<1x128xf32, #tpu.memory_space<vmem>>, vector<1x128xf32>
    %cst_74 = arith.constant 9.99999974E-6 : f32
    %125 = vector.broadcast %cst_74 : f32 to vector<1x128xf32>
    %126 = arith.addf %123, %125 : vector<1x128xf32>
    %127 = math.rsqrt %126 : vector<1x128xf32>
    %128 = arith.mulf %124, %127 : vector<1x128xf32>
    %129 = vector.broadcast %128 : vector<1x128xf32> to vector<16x128xf32>
    %130 = arith.mulf %114, %129 : vector<16x128xf32>
    %c0_75 = arith.constant 0 : index
    %c0_76 = arith.constant 0 : index
    %131 = vector.load %arg13[%c0_75, %c0_76] : memref<1x128xf32, #tpu.memory_space<vmem>>, vector<1x128xf32>
    %132 = vector.broadcast %131 : vector<1x128xf32> to vector<16x128xf32>
    %133 = arith.addf %130, %132 : vector<16x128xf32>
    %cst_77 = arith.constant 0.000000e+00 : f32
    %134 = vector.broadcast %cst_77 : f32 to vector<16x128xf32>
    %135 = arith.maximumf %133, %134 : vector<16x128xf32>
    %c0_78 = arith.constant 0 : index
    %c0_79 = arith.constant 0 : index
    %136 = vector.load %arg14[%c0_78, %c0_79] : memref<16x8xf32, #tpu.memory_space<vmem>>, vector<16x8xf32>
    %137 = vector.extract_strided_slice %135 {offsets = [0, 0], sizes = [8, 128], strides = [1, 1]} : vector<16x128xf32> to vector<8x128xf32>
    %cst_80 = arith.constant dense<0.000000e+00> : vector<16x128xf32>
    %138 = tpu.matmul %136, %137, %cst_80 {dimension_numbers = #tpu.dot_dimension_numbers<[1], [0], [0], [1], [0, 0, 1, 1], [], []>} : vector<16x8xf32>, vector<8x128xf32>, vector<16x128xf32> -> vector<16x128xf32>
    %c0_81 = arith.constant 0 : index
    %c0_82 = arith.constant 0 : index
    %139 = vector.load %arg37[%c0_81, %c0_82] : memref<128x128xf32, #tpu.memory_space<vmem>>, vector<16x128xf32>
    tpu.vector_store %arg37[%c0_81, %c0_82], %138 {strides = array<i32>} : memref<128x128xf32, #tpu.memory_space<vmem>>, vector<16x128xf32>,
    %140 = vector.extract_strided_slice %135 {offsets = [8, 0], sizes = [8, 128], strides = [1, 1]} : vector<16x128xf32> to vector<8x128xf32>
    %cst_83 = arith.constant dense<0.000000e+00> : vector<16x128xf32>
    %141 = tpu.matmul %136, %140, %cst_83 {dimension_numbers = #tpu.dot_dimension_numbers<[1], [0], [0], [1], [0, 0, 1, 1], [], []>} : vector<16x8xf32>, vector<8x128xf32>, vector<16x128xf32> -> vector<16x128xf32>
    %c16 = arith.constant 16 : index
    %c0_84 = arith.constant 0 : index
    %142 = vector.load %arg37[%c16, %c0_84] : memref<128x128xf32, #tpu.memory_space<vmem>>, vector<16x128xf32>
    tpu.vector_store %arg37[%c16, %c0_84], %141 {strides = array<i32>} : memref<128x128xf32, #tpu.memory_space<vmem>>, vector<16x128xf32>,
    %c0_85 = arith.constant 0 : index
    %c0_86 = arith.constant 0 : index
    %143 = vector.load %arg37[%c0_85, %c0_86] : memref<128x128xf32, #tpu.memory_space<vmem>>, vector<32x128xf32>
    %144 = tpu.iota {dimensions = array<i32: 0>} : vector<32x1xi32>
    %c16_i32 = arith.constant 16 : i32
    %c0_i32_87 = arith.constant 0 : i32
    %145 = arith.cmpi eq, %c16_i32, %c0_i32_87 : i32
    %c1_i32_88 = arith.constant 1 : i32
    %146 = arith.select %145, %c1_i32_88, %c16_i32 : i32
    %147 = vector.broadcast %146 : i32 to vector<32x1xi32>
    %148 = arith.remsi %144, %147 : vector<32x1xi32>
    %c0_i32_89 = arith.constant 0 : i32
    %149 = vector.broadcast %c0_i32_89 : i32 to vector<32x1xi32>
    %150 = arith.cmpi ne, %148, %149 : vector<32x1xi32>
    %c0_i32_90 = arith.constant 0 : i32
    %151 = vector.broadcast %c0_i32_90 : i32 to vector<32x1xi32>
    %152 = arith.cmpi slt, %148, %151 : vector<32x1xi32>
    %c0_i32_91 = arith.constant 0 : i32
    %153 = arith.cmpi slt, %146, %c0_i32_91 : i32
    %154 = vector.broadcast %153 : i1 to vector<32x1xi1>
    %155 = vector.broadcast %154 : vector<32x1xi1> to vector<32x1xi1>
    %156 = arith.xori %152, %155 : vector<32x1xi1>
    %157 = arith.andi %156, %150 : vector<32x1xi1>
    %158 = vector.broadcast %146 : i32 to vector<32x1xi32>
    %159 = arith.addi %148, %158 : vector<32x1xi32>
    %160 = arith.select %157, %159, %148 : vector<32x1xi1>, vector<32x1xi32>
    %c1_i32_92 = arith.constant 1 : i32
    %161 = tpu.dynamic_rotate %143 by %c1_i32_92 dim 0 : vector<32x128xf32>, i32 -> vector<32x128xf32>
    %c0_i32_93 = arith.constant 0 : i32
    %162 = vector.broadcast %c0_i32_93 : i32 to vector<32x1xi32>
    %163 = arith.cmpi ne, %160, %162 : vector<32x1xi32>
    %164 = arith.extui %163 : vector<32x1xi1> to vector<32x1xi32>
    %165 = arith.sitofp %164 : vector<32x1xi32> to vector<32x1xf32>
    %166 = vector.broadcast %165 : vector<32x1xf32> to vector<32x128xf32>
    %167 = arith.mulf %161, %166 : vector<32x128xf32>
    %c31_i32 = arith.constant 31 : i32
    %168 = tpu.dynamic_rotate %143 by %c31_i32 dim 0 : vector<32x128xf32>, i32 -> vector<32x128xf32>
    %c15_i32_94 = arith.constant 15 : i32
    %169 = vector.broadcast %c15_i32_94 : i32 to vector<32x1xi32>
    %170 = arith.cmpi ne, %160, %169 : vector<32x1xi32>
    %171 = arith.extui %170 : vector<32x1xi1> to vector<32x1xi32>
    %172 = arith.sitofp %171 : vector<32x1xi32> to vector<32x1xf32>
    %173 = vector.broadcast %172 : vector<32x1xf32> to vector<32x128xf32>
    %174 = arith.mulf %168, %173 : vector<32x128xf32>
    %175 = tpu.concatenate %167, %143, %174 in 1 : vector<32x128xf32>, vector<32x128xf32>, vector<32x128xf32> -> vector<32x384xf32>
    %176 = arith.truncf %175 : vector<32x384xf32> to vector<32x384xbf16>
    %c0_95 = arith.constant 0 : index
    %c0_96 = arith.constant 0 : index
    %177 = vector.load %arg15[%c0_95, %c0_96] : memref<384x128xbf16, #tpu.memory_space<vmem>>, vector<384x128xbf16>
    %cst_97 = arith.constant dense<0.000000e+00> : vector<32x128xf32>
    %178 = tpu.matmul %176, %177, %cst_97 {dimension_numbers = #tpu.dot_dimension_numbers<[1], [0], [0], [1], [0, 0, 1, 1], [], []>} : vector<32x384xbf16>, vector<384x128xbf16>, vector<32x128xf32> -> vector<32x128xf32>
    %cst_98 = arith.constant dense<0.000000e+00> : vector<128xf32>
    %179 = vector.multi_reduction <add>, %178, %cst_98 [0] : vector<32x128xf32> to vector<128xf32>
    %180 = vector.shape_cast %179 : vector<128xf32> to vector<1x128xf32>
    %c0_99 = arith.constant 0 : index
    %c0_100 = arith.constant 0 : index
    %181 = vector.load %arg16[%c0_99, %c0_100] : memref<128x8xf32, #tpu.memory_space<vmem>>, vector<128x8xf32>
    %cst_101 = arith.constant dense<0.000000e+00> : vector<1x8xf32>
    %182 = tpu.matmul %180, %181, %cst_101 {dimension_numbers = #tpu.dot_dimension_numbers<[1], [0], [0], [1], [0, 0, 1, 1], [], []>} : vector<1x128xf32>, vector<128x8xf32>, vector<1x8xf32> -> vector<1x8xf32>
    %cst_102 = arith.constant 3.125000e-02 : f32
    %183 = vector.broadcast %cst_102 : f32 to vector<1x8xf32>
    %184 = arith.mulf %182, %183 : vector<1x8xf32>
    %c0_103 = arith.constant 0 : index
    %c0_104 = arith.constant 0 : index
    %185 = vector.load %arg17[%c0_103, %c0_104] : memref<8x128xf32, #tpu.memory_space<vmem>>, vector<8x128xf32>
    %cst_105 = arith.constant dense<0.000000e+00> : vector<1x128xf32>
    %186 = tpu.matmul %184, %185, %cst_105 {dimension_numbers = #tpu.dot_dimension_numbers<[1], [0], [0], [1], [0, 0, 1, 1], [], []>} : vector<1x8xf32>, vector<8x128xf32>, vector<1x128xf32> -> vector<1x128xf32>
    %187 = vector.broadcast %186 : vector<1x128xf32> to vector<32x128xf32>
    %188 = arith.subf %178, %187 : vector<32x128xf32>
    %189 = arith.mulf %188, %188 : vector<32x128xf32>
    %cst_106 = arith.constant dense<0.000000e+00> : vector<128xf32>
    %190 = vector.multi_reduction <add>, %189, %cst_106 [0] : vector<32x128xf32> to vector<128xf32>
    %191 = vector.shape_cast %190 : vector<128xf32> to vector<1x128xf32>
    %c0_107 = arith.constant 0 : index
    %c0_108 = arith.constant 0 : index
    %192 = vector.load %arg16[%c0_107, %c0_108] : memref<128x8xf32, #tpu.memory_space<vmem>>, vector<128x8xf32>
    %cst_109 = arith.constant dense<0.000000e+00> : vector<1x8xf32>
    %193 = tpu.matmul %191, %192, %cst_109 {dimension_numbers = #tpu.dot_dimension_numbers<[1], [0], [0], [1], [0, 0, 1, 1], [], []>} : vector<1x128xf32>, vector<128x8xf32>, vector<1x8xf32> -> vector<1x8xf32>
    %cst_110 = arith.constant 3.125000e-02 : f32
    %194 = vector.broadcast %cst_110 : f32 to vector<1x8xf32>
    %195 = arith.mulf %193, %194 : vector<1x8xf32>
    %c0_111 = arith.constant 0 : index
    %c0_112 = arith.constant 0 : index
    %196 = vector.load %arg17[%c0_111, %c0_112] : memref<8x128xf32, #tpu.memory_space<vmem>>, vector<8x128xf32>
    %cst_113 = arith.constant dense<0.000000e+00> : vector<1x128xf32>
    %197 = tpu.matmul %195, %196, %cst_113 {dimension_numbers = #tpu.dot_dimension_numbers<[1], [0], [0], [1], [0, 0, 1, 1], [], []>} : vector<1x8xf32>, vector<8x128xf32>, vector<1x128xf32> -> vector<1x128xf32>
    %c0_114 = arith.constant 0 : index
    %c0_115 = arith.constant 0 : index
    %198 = vector.load %arg18[%c0_114, %c0_115] : memref<1x128xf32, #tpu.memory_space<vmem>>, vector<1x128xf32>
    %cst_116 = arith.constant 9.99999974E-6 : f32
    %199 = vector.broadcast %cst_116 : f32 to vector<1x128xf32>
    %200 = arith.addf %197, %199 : vector<1x128xf32>
    %201 = math.rsqrt %200 : vector<1x128xf32>
    %202 = arith.mulf %198, %201 : vector<1x128xf32>
    %203 = vector.broadcast %202 : vector<1x128xf32> to vector<32x128xf32>
    %204 = arith.mulf %188, %203 : vector<32x128xf32>
    %c0_117 = arith.constant 0 : index
    %c0_118 = arith.constant 0 : index
    %205 = vector.load %arg19[%c0_117, %c0_118] : memref<1x128xf32, #tpu.memory_space<vmem>>, vector<1x128xf32>
    %206 = vector.broadcast %205 : vector<1x128xf32> to vector<32x128xf32>
    %207 = arith.addf %204, %206 : vector<32x128xf32>
    %cst_119 = arith.constant 0.000000e+00 : f32
    %208 = vector.broadcast %cst_119 : f32 to vector<32x128xf32>
    %209 = arith.maximumf %207, %208 : vector<32x128xf32>
    %c0_120 = arith.constant 0 : index
    %c0_121 = arith.constant 0 : index
    %210 = vector.load %arg20[%c0_120, %c0_121] : memref<32x16xf32, #tpu.memory_space<vmem>>, vector<32x16xf32>
    %211 = vector.extract_strided_slice %209 {offsets = [0, 0], sizes = [16, 128], strides = [1, 1]} : vector<32x128xf32> to vector<16x128xf32>
    %cst_122 = arith.constant dense<0.000000e+00> : vector<32x128xf32>
    %212 = tpu.matmul %210, %211, %cst_122 {dimension_numbers = #tpu.dot_dimension_numbers<[1], [0], [0], [1], [0, 0, 1, 1], [], []>} : vector<32x16xf32>, vector<16x128xf32>, vector<32x128xf32> -> vector<32x128xf32>
    %c0_123 = arith.constant 0 : index
    %c0_124 = arith.constant 0 : index
    %213 = vector.load %arg37[%c0_123, %c0_124] : memref<128x128xf32, #tpu.memory_space<vmem>>, vector<32x128xf32>
    tpu.vector_store %arg37[%c0_123, %c0_124], %212 {strides = array<i32>} : memref<128x128xf32, #tpu.memory_space<vmem>>, vector<32x128xf32>,
    %214 = vector.extract_strided_slice %209 {offsets = [16, 0], sizes = [16, 128], strides = [1, 1]} : vector<32x128xf32> to vector<16x128xf32>
    %cst_125 = arith.constant dense<0.000000e+00> : vector<32x128xf32>
    %215 = tpu.matmul %210, %214, %cst_125 {dimension_numbers = #tpu.dot_dimension_numbers<[1], [0], [0], [1], [0, 0, 1, 1], [], []>} : vector<32x16xf32>, vector<16x128xf32>, vector<32x128xf32> -> vector<32x128xf32>
    %c32 = arith.constant 32 : index
    %c0_126 = arith.constant 0 : index
    %216 = vector.load %arg37[%c32, %c0_126] : memref<128x128xf32, #tpu.memory_space<vmem>>, vector<32x128xf32>
    tpu.vector_store %arg37[%c32, %c0_126], %215 {strides = array<i32>} : memref<128x128xf32, #tpu.memory_space<vmem>>, vector<32x128xf32>,
    %c0_127 = arith.constant 0 : index
    %c0_128 = arith.constant 0 : index
    %217 = vector.load %arg37[%c0_127, %c0_128] : memref<128x128xf32, #tpu.memory_space<vmem>>, vector<64x128xf32>
    %218 = tpu.iota {dimensions = array<i32: 0>} : vector<64x1xi32>
    %c32_i32 = arith.constant 32 : i32
    %c0_i32_129 = arith.constant 0 : i32
    %219 = arith.cmpi eq, %c32_i32, %c0_i32_129 : i32
    %c1_i32_130 = arith.constant 1 : i32
    %220 = arith.select %219, %c1_i32_130, %c32_i32 : i32
    %221 = vector.broadcast %220 : i32 to vector<64x1xi32>
    %222 = arith.remsi %218, %221 : vector<64x1xi32>
    %c0_i32_131 = arith.constant 0 : i32
    %223 = vector.broadcast %c0_i32_131 : i32 to vector<64x1xi32>
    %224 = arith.cmpi ne, %222, %223 : vector<64x1xi32>
    %c0_i32_132 = arith.constant 0 : i32
    %225 = vector.broadcast %c0_i32_132 : i32 to vector<64x1xi32>
    %226 = arith.cmpi slt, %222, %225 : vector<64x1xi32>
    %c0_i32_133 = arith.constant 0 : i32
    %227 = arith.cmpi slt, %220, %c0_i32_133 : i32
    %228 = vector.broadcast %227 : i1 to vector<64x1xi1>
    %229 = vector.broadcast %228 : vector<64x1xi1> to vector<64x1xi1>
    %230 = arith.xori %226, %229 : vector<64x1xi1>
    %231 = arith.andi %230, %224 : vector<64x1xi1>
    %232 = vector.broadcast %220 : i32 to vector<64x1xi32>
    %233 = arith.addi %222, %232 : vector<64x1xi32>
    %234 = arith.select %231, %233, %222 : vector<64x1xi1>, vector<64x1xi32>
    %c1_i32_134 = arith.constant 1 : i32
    %235 = tpu.dynamic_rotate %217 by %c1_i32_134 dim 0 : vector<64x128xf32>, i32 -> vector<64x128xf32>
    %c0_i32_135 = arith.constant 0 : i32
    %236 = vector.broadcast %c0_i32_135 : i32 to vector<64x1xi32>
    %237 = arith.cmpi ne, %234, %236 : vector<64x1xi32>
    %238 = arith.extui %237 : vector<64x1xi1> to vector<64x1xi32>
    %239 = arith.sitofp %238 : vector<64x1xi32> to vector<64x1xf32>
    %240 = vector.broadcast %239 : vector<64x1xf32> to vector<64x128xf32>
    %241 = arith.mulf %235, %240 : vector<64x128xf32>
    %c63_i32 = arith.constant 63 : i32
    %242 = tpu.dynamic_rotate %217 by %c63_i32 dim 0 : vector<64x128xf32>, i32 -> vector<64x128xf32>
    %c31_i32_136 = arith.constant 31 : i32
    %243 = vector.broadcast %c31_i32_136 : i32 to vector<64x1xi32>
    %244 = arith.cmpi ne, %234, %243 : vector<64x1xi32>
    %245 = arith.extui %244 : vector<64x1xi1> to vector<64x1xi32>
    %246 = arith.sitofp %245 : vector<64x1xi32> to vector<64x1xf32>
    %247 = vector.broadcast %246 : vector<64x1xf32> to vector<64x128xf32>
    %248 = arith.mulf %242, %247 : vector<64x128xf32>
    %249 = tpu.concatenate %241, %217, %248 in 1 : vector<64x128xf32>, vector<64x128xf32>, vector<64x128xf32> -> vector<64x384xf32>
    %250 = arith.truncf %249 : vector<64x384xf32> to vector<64x384xbf16>
    %c0_137 = arith.constant 0 : index
    %c0_138 = arith.constant 0 : index
    %251 = vector.load %arg21[%c0_137, %c0_138] : memref<384x128xbf16, #tpu.memory_space<vmem>>, vector<384x128xbf16>
    %cst_139 = arith.constant dense<0.000000e+00> : vector<64x128xf32>
    %252 = tpu.matmul %250, %251, %cst_139 {dimension_numbers = #tpu.dot_dimension_numbers<[1], [0], [0], [1], [0, 0, 1, 1], [], []>} : vector<64x384xbf16>, vector<384x128xbf16>, vector<64x128xf32> -> vector<64x128xf32>
    %cst_140 = arith.constant dense<0.000000e+00> : vector<128xf32>
    %253 = vector.multi_reduction <add>, %252, %cst_140 [0] : vector<64x128xf32> to vector<128xf32>
    %254 = vector.shape_cast %253 : vector<128xf32> to vector<1x128xf32>
    %c0_141 = arith.constant 0 : index
    %c0_142 = arith.constant 0 : index
    %255 = vector.load %arg22[%c0_141, %c0_142] : memref<128x4xf32, #tpu.memory_space<vmem>>, vector<128x4xf32>
    %cst_143 = arith.constant dense<0.000000e+00> : vector<1x4xf32>
    %256 = tpu.matmul %254, %255, %cst_143 {dimension_numbers = #tpu.dot_dimension_numbers<[1], [0], [0], [1], [0, 0, 1, 1], [], []>} : vector<1x128xf32>, vector<128x4xf32>, vector<1x4xf32> -> vector<1x4xf32>
    %cst_144 = arith.constant 1.562500e-02 : f32
    %257 = vector.broadcast %cst_144 : f32 to vector<1x4xf32>
    %258 = arith.mulf %256, %257 : vector<1x4xf32>
    %c0_145 = arith.constant 0 : index
    %c0_146 = arith.constant 0 : index
    %259 = vector.load %arg23[%c0_145, %c0_146] : memref<4x128xf32, #tpu.memory_space<vmem>>, vector<4x128xf32>
    %cst_147 = arith.constant dense<0.000000e+00> : vector<1x128xf32>
    %260 = tpu.matmul %258, %259, %cst_147 {dimension_numbers = #tpu.dot_dimension_numbers<[1], [0], [0], [1], [0, 0, 1, 1], [], []>} : vector<1x4xf32>, vector<4x128xf32>, vector<1x128xf32> -> vector<1x128xf32>
    %261 = vector.broadcast %260 : vector<1x128xf32> to vector<64x128xf32>
    %262 = arith.subf %252, %261 : vector<64x128xf32>
    %263 = arith.mulf %262, %262 : vector<64x128xf32>
    %cst_148 = arith.constant dense<0.000000e+00> : vector<128xf32>
    %264 = vector.multi_reduction <add>, %263, %cst_148 [0] : vector<64x128xf32> to vector<128xf32>
    %265 = vector.shape_cast %264 : vector<128xf32> to vector<1x128xf32>
    %c0_149 = arith.constant 0 : index
    %c0_150 = arith.constant 0 : index
    %266 = vector.load %arg22[%c0_149, %c0_150] : memref<128x4xf32, #tpu.memory_space<vmem>>, vector<128x4xf32>
    %cst_151 = arith.constant dense<0.000000e+00> : vector<1x4xf32>
    %267 = tpu.matmul %265, %266, %cst_151 {dimension_numbers = #tpu.dot_dimension_numbers<[1], [0], [0], [1], [0, 0, 1, 1], [], []>} : vector<1x128xf32>, vector<128x4xf32>, vector<1x4xf32> -> vector<1x4xf32>
    %cst_152 = arith.constant 1.562500e-02 : f32
    %268 = vector.broadcast %cst_152 : f32 to vector<1x4xf32>
    %269 = arith.mulf %267, %268 : vector<1x4xf32>
    %c0_153 = arith.constant 0 : index
    %c0_154 = arith.constant 0 : index
    %270 = vector.load %arg23[%c0_153, %c0_154] : memref<4x128xf32, #tpu.memory_space<vmem>>, vector<4x128xf32>
    %cst_155 = arith.constant dense<0.000000e+00> : vector<1x128xf32>
    %271 = tpu.matmul %269, %270, %cst_155 {dimension_numbers = #tpu.dot_dimension_numbers<[1], [0], [0], [1], [0, 0, 1, 1], [], []>} : vector<1x4xf32>, vector<4x128xf32>, vector<1x128xf32> -> vector<1x128xf32>
    %c0_156 = arith.constant 0 : index
    %c0_157 = arith.constant 0 : index
    %272 = vector.load %arg24[%c0_156, %c0_157] : memref<1x128xf32, #tpu.memory_space<vmem>>, vector<1x128xf32>
    %cst_158 = arith.constant 9.99999974E-6 : f32
    %273 = vector.broadcast %cst_158 : f32 to vector<1x128xf32>
    %274 = arith.addf %271, %273 : vector<1x128xf32>
    %275 = math.rsqrt %274 : vector<1x128xf32>
    %276 = arith.mulf %272, %275 : vector<1x128xf32>
    %277 = vector.broadcast %276 : vector<1x128xf32> to vector<64x128xf32>
    %278 = arith.mulf %262, %277 : vector<64x128xf32>
    %c0_159 = arith.constant 0 : index
    %c0_160 = arith.constant 0 : index
    %279 = vector.load %arg25[%c0_159, %c0_160] : memref<1x128xf32, #tpu.memory_space<vmem>>, vector<1x128xf32>
    %280 = vector.broadcast %279 : vector<1x128xf32> to vector<64x128xf32>
    %281 = arith.addf %278, %280 : vector<64x128xf32>
    %cst_161 = arith.constant 0.000000e+00 : f32
    %282 = vector.broadcast %cst_161 : f32 to vector<64x128xf32>
    %283 = arith.maximumf %281, %282 : vector<64x128xf32>
    %c0_162 = arith.constant 0 : index
    %c0_163 = arith.constant 0 : index
    %284 = vector.load %arg26[%c0_162, %c0_163] : memref<64x32xf32, #tpu.memory_space<vmem>>, vector<64x32xf32>
    %285 = vector.extract_strided_slice %283 {offsets = [0, 0], sizes = [32, 128], strides = [1, 1]} : vector<64x128xf32> to vector<32x128xf32>
    %cst_164 = arith.constant dense<0.000000e+00> : vector<64x128xf32>
    %286 = tpu.matmul %284, %285, %cst_164 {dimension_numbers = #tpu.dot_dimension_numbers<[1], [0], [0], [1], [0, 0, 1, 1], [], []>} : vector<64x32xf32>, vector<32x128xf32>, vector<64x128xf32> -> vector<64x128xf32>
    %c0_165 = arith.constant 0 : index
    %c0_166 = arith.constant 0 : index
    %287 = vector.load %arg37[%c0_165, %c0_166] : memref<128x128xf32, #tpu.memory_space<vmem>>, vector<64x128xf32>
    tpu.vector_store %arg37[%c0_165, %c0_166], %286 {strides = array<i32>} : memref<128x128xf32, #tpu.memory_space<vmem>>, vector<64x128xf32>,
    %288 = vector.extract_strided_slice %283 {offsets = [32, 0], sizes = [32, 128], strides = [1, 1]} : vector<64x128xf32> to vector<32x128xf32>
    %cst_167 = arith.constant dense<0.000000e+00> : vector<64x128xf32>
    %289 = tpu.matmul %284, %288, %cst_167 {dimension_numbers = #tpu.dot_dimension_numbers<[1], [0], [0], [1], [0, 0, 1, 1], [], []>} : vector<64x32xf32>, vector<32x128xf32>, vector<64x128xf32> -> vector<64x128xf32>
    %c64 = arith.constant 64 : index
    %c0_168 = arith.constant 0 : index
    %290 = vector.load %arg37[%c64, %c0_168] : memref<128x128xf32, #tpu.memory_space<vmem>>, vector<64x128xf32>
    tpu.vector_store %arg37[%c64, %c0_168], %289 {strides = array<i32>} : memref<128x128xf32, #tpu.memory_space<vmem>>, vector<64x128xf32>,
    %c0_169 = arith.constant 0 : index
    %c0_170 = arith.constant 0 : index
    %291 = vector.load %arg37[%c0_169, %c0_170] : memref<128x128xf32, #tpu.memory_space<vmem>>, vector<128x128xf32>
    %292 = tpu.iota {dimensions = array<i32: 0>} : vector<128x1xi32>
    %c64_i32 = arith.constant 64 : i32
    %c0_i32_171 = arith.constant 0 : i32
    %293 = arith.cmpi eq, %c64_i32, %c0_i32_171 : i32
    %c1_i32_172 = arith.constant 1 : i32
    %294 = arith.select %293, %c1_i32_172, %c64_i32 : i32
    %295 = vector.broadcast %294 : i32 to vector<128x1xi32>
    %296 = arith.remsi %292, %295 : vector<128x1xi32>
    %c0_i32_173 = arith.constant 0 : i32
    %297 = vector.broadcast %c0_i32_173 : i32 to vector<128x1xi32>
    %298 = arith.cmpi ne, %296, %297 : vector<128x1xi32>
    %c0_i32_174 = arith.constant 0 : i32
    %299 = vector.broadcast %c0_i32_174 : i32 to vector<128x1xi32>
    %300 = arith.cmpi slt, %296, %299 : vector<128x1xi32>
    %c0_i32_175 = arith.constant 0 : i32
    %301 = arith.cmpi slt, %294, %c0_i32_175 : i32
    %302 = vector.broadcast %301 : i1 to vector<128x1xi1>
    %303 = vector.broadcast %302 : vector<128x1xi1> to vector<128x1xi1>
    %304 = arith.xori %300, %303 : vector<128x1xi1>
    %305 = arith.andi %304, %298 : vector<128x1xi1>
    %306 = vector.broadcast %294 : i32 to vector<128x1xi32>
    %307 = arith.addi %296, %306 : vector<128x1xi32>
    %308 = arith.select %305, %307, %296 : vector<128x1xi1>, vector<128x1xi32>
    %c1_i32_176 = arith.constant 1 : i32
    %309 = tpu.dynamic_rotate %291 by %c1_i32_176 dim 0 : vector<128x128xf32>, i32 -> vector<128x128xf32>
    %c0_i32_177 = arith.constant 0 : i32
    %310 = vector.broadcast %c0_i32_177 : i32 to vector<128x1xi32>
    %311 = arith.cmpi ne, %308, %310 : vector<128x1xi32>
    %312 = arith.extui %311 : vector<128x1xi1> to vector<128x1xi32>
    %313 = arith.sitofp %312 : vector<128x1xi32> to vector<128x1xf32>
    %314 = vector.broadcast %313 : vector<128x1xf32> to vector<128x128xf32>
    %315 = arith.mulf %309, %314 : vector<128x128xf32>
    %c127_i32 = arith.constant 127 : i32
    %316 = tpu.dynamic_rotate %291 by %c127_i32 dim 0 : vector<128x128xf32>, i32 -> vector<128x128xf32>
    %c63_i32_178 = arith.constant 63 : i32
    %317 = vector.broadcast %c63_i32_178 : i32 to vector<128x1xi32>
    %318 = arith.cmpi ne, %308, %317 : vector<128x1xi32>
    %319 = arith.extui %318 : vector<128x1xi1> to vector<128x1xi32>
    %320 = arith.sitofp %319 : vector<128x1xi32> to vector<128x1xf32>
    %321 = vector.broadcast %320 : vector<128x1xf32> to vector<128x128xf32>
    %322 = arith.mulf %316, %321 : vector<128x128xf32>
    %323 = tpu.concatenate %315, %291, %322 in 1 : vector<128x128xf32>, vector<128x128xf32>, vector<128x128xf32> -> vector<128x384xf32>
    %324 = arith.truncf %323 : vector<128x384xf32> to vector<128x384xbf16>
    %c0_179 = arith.constant 0 : index
    %c0_180 = arith.constant 0 : index
    %325 = vector.load %arg27[%c0_179, %c0_180] : memref<384x128xbf16, #tpu.memory_space<vmem>>, vector<384x128xbf16>
    %cst_181 = arith.constant dense<0.000000e+00> : vector<128x128xf32>
    %326 = tpu.matmul %324, %325, %cst_181 {dimension_numbers = #tpu.dot_dimension_numbers<[1], [0], [0], [1], [0, 0, 1, 1], [], []>} : vector<128x384xbf16>, vector<384x128xbf16>, vector<128x128xf32> -> vector<128x128xf32>
    %cst_182 = arith.constant dense<0.000000e+00> : vector<128xf32>
    %327 = vector.multi_reduction <add>, %326, %cst_182 [0] : vector<128x128xf32> to vector<128xf32>
    %328 = vector.shape_cast %327 : vector<128xf32> to vector<1x128xf32>
    %c0_183 = arith.constant 0 : index
    %c0_184 = arith.constant 0 : index
    %329 = vector.load %arg28[%c0_183, %c0_184] : memref<128x2xf32, #tpu.memory_space<vmem>>, vector<128x2xf32>
    %cst_185 = arith.constant dense<0.000000e+00> : vector<1x2xf32>
    %330 = tpu.matmul %328, %329, %cst_185 {dimension_numbers = #tpu.dot_dimension_numbers<[1], [0], [0], [1], [0, 0, 1, 1], [], []>} : vector<1x128xf32>, vector<128x2xf32>, vector<1x2xf32> -> vector<1x2xf32>
    %cst_186 = arith.constant 7.812500e-03 : f32
    %331 = vector.broadcast %cst_186 : f32 to vector<1x2xf32>
    %332 = arith.mulf %330, %331 : vector<1x2xf32>
    %c0_187 = arith.constant 0 : index
    %c0_188 = arith.constant 0 : index
    %333 = vector.load %arg29[%c0_187, %c0_188] : memref<2x128xf32, #tpu.memory_space<vmem>>, vector<2x128xf32>
    %cst_189 = arith.constant dense<0.000000e+00> : vector<1x128xf32>
    %334 = tpu.matmul %332, %333, %cst_189 {dimension_numbers = #tpu.dot_dimension_numbers<[1], [0], [0], [1], [0, 0, 1, 1], [], []>} : vector<1x2xf32>, vector<2x128xf32>, vector<1x128xf32> -> vector<1x128xf32>
    %335 = vector.broadcast %334 : vector<1x128xf32> to vector<128x128xf32>
    %336 = arith.subf %326, %335 : vector<128x128xf32>
    %337 = arith.mulf %336, %336 : vector<128x128xf32>
    %cst_190 = arith.constant dense<0.000000e+00> : vector<128xf32>
    %338 = vector.multi_reduction <add>, %337, %cst_190 [0] : vector<128x128xf32> to vector<128xf32>
    %339 = vector.shape_cast %338 : vector<128xf32> to vector<1x128xf32>
    %c0_191 = arith.constant 0 : index
    %c0_192 = arith.constant 0 : index
    %340 = vector.load %arg28[%c0_191, %c0_192] : memref<128x2xf32, #tpu.memory_space<vmem>>, vector<128x2xf32>
    %cst_193 = arith.constant dense<0.000000e+00> : vector<1x2xf32>
    %341 = tpu.matmul %339, %340, %cst_193 {dimension_numbers = #tpu.dot_dimension_numbers<[1], [0], [0], [1], [0, 0, 1, 1], [], []>} : vector<1x128xf32>, vector<128x2xf32>, vector<1x2xf32> -> vector<1x2xf32>
    %cst_194 = arith.constant 7.812500e-03 : f32
    %342 = vector.broadcast %cst_194 : f32 to vector<1x2xf32>
    %343 = arith.mulf %341, %342 : vector<1x2xf32>
    %c0_195 = arith.constant 0 : index
    %c0_196 = arith.constant 0 : index
    %344 = vector.load %arg29[%c0_195, %c0_196] : memref<2x128xf32, #tpu.memory_space<vmem>>, vector<2x128xf32>
    %cst_197 = arith.constant dense<0.000000e+00> : vector<1x128xf32>
    %345 = tpu.matmul %343, %344, %cst_197 {dimension_numbers = #tpu.dot_dimension_numbers<[1], [0], [0], [1], [0, 0, 1, 1], [], []>} : vector<1x2xf32>, vector<2x128xf32>, vector<1x128xf32> -> vector<1x128xf32>
    %c0_198 = arith.constant 0 : index
    %c0_199 = arith.constant 0 : index
    %346 = vector.load %arg30[%c0_198, %c0_199] : memref<1x128xf32, #tpu.memory_space<vmem>>, vector<1x128xf32>
    %cst_200 = arith.constant 9.99999974E-6 : f32
    %347 = vector.broadcast %cst_200 : f32 to vector<1x128xf32>
    %348 = arith.addf %345, %347 : vector<1x128xf32>
    %349 = math.rsqrt %348 : vector<1x128xf32>
    %350 = arith.mulf %346, %349 : vector<1x128xf32>
    %351 = vector.broadcast %350 : vector<1x128xf32> to vector<128x128xf32>
    %352 = arith.mulf %336, %351 : vector<128x128xf32>
    %c0_201 = arith.constant 0 : index
    %c0_202 = arith.constant 0 : index
    %353 = vector.load %arg31[%c0_201, %c0_202] : memref<1x128xf32, #tpu.memory_space<vmem>>, vector<1x128xf32>
    %354 = vector.broadcast %353 : vector<1x128xf32> to vector<128x128xf32>
    %355 = arith.addf %352, %354 : vector<128x128xf32>
    %cst_203 = arith.constant 0.000000e+00 : f32
    %356 = vector.broadcast %cst_203 : f32 to vector<128x128xf32>
    %357 = arith.maximumf %355, %356 : vector<128x128xf32>
    %358 = tpu.iota {dimensions = array<i32: 0>} : vector<128x1xi32>
    %c64_i32_204 = arith.constant 64 : i32
    %c0_i32_205 = arith.constant 0 : i32
    %359 = arith.cmpi eq, %c64_i32_204, %c0_i32_205 : i32
    %c1_i32_206 = arith.constant 1 : i32
    %360 = arith.select %359, %c1_i32_206, %c64_i32_204 : i32
    %361 = vector.broadcast %360 : i32 to vector<128x1xi32>
    %362 = arith.remsi %358, %361 : vector<128x1xi32>
    %c0_i32_207 = arith.constant 0 : i32
    %363 = vector.broadcast %c0_i32_207 : i32 to vector<128x1xi32>
    %364 = arith.cmpi ne, %362, %363 : vector<128x1xi32>
    %c0_i32_208 = arith.constant 0 : i32
    %365 = vector.broadcast %c0_i32_208 : i32 to vector<128x1xi32>
    %366 = arith.cmpi slt, %362, %365 : vector<128x1xi32>
    %c0_i32_209 = arith.constant 0 : i32
    %367 = arith.cmpi slt, %360, %c0_i32_209 : i32
    %368 = vector.broadcast %367 : i1 to vector<128x1xi1>
    %369 = vector.broadcast %368 : vector<128x1xi1> to vector<128x1xi1>
    %370 = arith.xori %366, %369 : vector<128x1xi1>
    %371 = arith.andi %370, %364 : vector<128x1xi1>
    %372 = vector.broadcast %360 : i32 to vector<128x1xi32>
    %373 = arith.addi %362, %372 : vector<128x1xi32>
    %374 = arith.select %371, %373, %362 : vector<128x1xi1>, vector<128x1xi32>
    %c1_i32_210 = arith.constant 1 : i32
    %375 = tpu.dynamic_rotate %357 by %c1_i32_210 dim 0 : vector<128x128xf32>, i32 -> vector<128x128xf32>
    %c0_i32_211 = arith.constant 0 : i32
    %376 = vector.broadcast %c0_i32_211 : i32 to vector<128x1xi32>
    %377 = arith.cmpi ne, %374, %376 : vector<128x1xi32>
    %378 = arith.extui %377 : vector<128x1xi1> to vector<128x1xi32>
    %379 = arith.sitofp %378 : vector<128x1xi32> to vector<128x1xf32>
    %380 = vector.broadcast %379 : vector<128x1xf32> to vector<128x128xf32>
    %381 = arith.mulf %375, %380 : vector<128x128xf32>
    %c127_i32_212 = arith.constant 127 : i32
    %382 = tpu.dynamic_rotate %357 by %c127_i32_212 dim 0 : vector<128x128xf32>, i32 -> vector<128x128xf32>
    %c63_i32_213 = arith.constant 63 : i32
    %383 = vector.broadcast %c63_i32_213 : i32 to vector<128x1xi32>
    %384 = arith.cmpi ne, %374, %383 : vector<128x1xi32>
    %385 = arith.extui %384 : vector<128x1xi1> to vector<128x1xi32>
    %386 = arith.sitofp %385 : vector<128x1xi32> to vector<128x1xf32>
    %387 = vector.broadcast %386 : vector<128x1xf32> to vector<128x128xf32>
    %388 = arith.mulf %382, %387 : vector<128x128xf32>
    %389 = tpu.concatenate %381, %357, %388 in 1 : vector<128x128xf32>, vector<128x128xf32>, vector<128x128xf32> -> vector<128x384xf32>
    %390 = arith.truncf %389 : vector<128x384xf32> to vector<128x384xbf16>
    %c0_214 = arith.constant 0 : index
    %c0_215 = arith.constant 0 : index
    %391 = vector.load %arg32[%c0_214, %c0_215] : memref<384x256xbf16, #tpu.memory_space<vmem>>, vector<384x256xbf16>
    %cst_216 = arith.constant dense<0.000000e+00> : vector<128x256xf32>
    %392 = tpu.matmul %390, %391, %cst_216 {dimension_numbers = #tpu.dot_dimension_numbers<[1], [0], [0], [1], [0, 0, 1, 1], [], []>} : vector<128x384xbf16>, vector<384x256xbf16>, vector<128x256xf32> -> vector<128x256xf32>
    %393 = math.tanh %392 : vector<128x256xf32>
    %c0_217 = arith.constant 0 : index
    %c0_218 = arith.constant 0 : index
    %394 = vector.load %arg33[%c0_217, %c0_218] : memref<128x256xf32, #tpu.memory_space<vmem>>, vector<128x256xf32>
    tpu.vector_store %arg33[%c0_217, %c0_218], %393 {strides = array<i32>} : memref<128x256xf32, #tpu.memory_space<vmem>>, vector<128x256xf32>,
    return
  }
}

</mosaic_0001>

<llo_original>
// kernel: stage1_generator_forward.1
$region0: #{stage1_generator_forward.1}
  #allocation0 [shape = 'u32[]', space=smem, size = 0x4, offset = 0x4, fixed_abs, tag = 'smem constant byte address 0x4 - core index']
  #allocation1 [shape = 'u32[72,128]{1,0:T(1,128)}', space=vmem, size = 0x9000, scoped, tag = 'internal scratch']
  #allocation2 [shape = 'f32[8,128]{1,0:T(8,128)}', space=vmem, size = 0x1000, scoped, tag = 'scratch operand']
  #allocation3 [shape = 'f32[128,128]{1,0:T(8,128)}', space=vmem, size = 0x10000, scoped, tag = 'scratch operand']
  %s0 = inlined_call_operand.smem [shape: u32[36], index: -1, kind: input, shape index: {}]
  %s1 = sld [smem:[%s0]]
  %s2 = scalar_lea.smem %s0, 1
  %s3 = sld [smem:[%s2]]
  %s4 = scalar_lea.smem %s0, 2
  %s5 = sld [smem:[%s4]]
  %s6 = scalar_lea.smem %s0, 3
  %s7 = sld [smem:[%s6]]
  %s8 = scalar_lea.smem %s0, 4
  %s9 = sld [smem:[%s8]]
  %s10 = scalar_lea.smem %s0, 5
  %s11 = sld [smem:[%s10]]
  %s12 = scalar_lea.smem %s0, 6
  %s13 = sld [smem:[%s12]]
  %s14 = scalar_lea.smem %s0, 7
  %s15 = sld [smem:[%s14]]
  %s16 = scalar_lea.smem %s0, 8
  %s17 = sld [smem:[%s16]]
  %s18 = scalar_lea.smem %s0, 9
  %s19 = sld [smem:[%s18]]
  %s20 = scalar_lea.smem %s0, 10
  %s21 = sld [smem:[%s20]]
  %s22 = scalar_lea.smem %s0, 11
  %s23 = sld [smem:[%s22]]
  %s24 = scalar_lea.smem %s0, 12
  %s25 = sld [smem:[%s24]]
  %s26 = scalar_lea.smem %s0, 13
  %s27 = sld [smem:[%s26]]
  %s28 = scalar_lea.smem %s0, 14
  %s29 = sld [smem:[%s28]]
  %s30 = scalar_lea.smem %s0, 15
  %s31 = sld [smem:[%s30]]
  %s32 = scalar_lea.smem %s0, 16
  %s33 = sld [smem:[%s32]]
  %s34 = scalar_lea.smem %s0, 17
  %s35 = sld [smem:[%s34]]
  %s36 = scalar_lea.smem %s0, 18
  %s37 = sld [smem:[%s36]]
  %s38 = scalar_lea.smem %s0, 19
  %s39 = sld [smem:[%s38]]
  %s40 = scalar_lea.smem %s0, 20
  %s41 = sld [smem:[%s40]]
  %s42 = scalar_lea.smem %s0, 21
  %s43 = sld [smem:[%s42]]
  %s44 = scalar_lea.smem %s0, 22
  %s45 = sld [smem:[%s44]]
  %s46 = scalar_lea.smem %s0, 23
  %s47 = sld [smem:[%s46]]
  %s48 = scalar_lea.smem %s0, 24
  %s49 = sld [smem:[%s48]]
  %s50 = scalar_lea.smem %s0, 25
  %s51 = sld [smem:[%s50]]
  %s52 = scalar_lea.smem %s0, 26
  %s53 = sld [smem:[%s52]]
  %s54 = scalar_lea.smem %s0, 27
  %s55 = sld [smem:[%s54]]
  %s56 = scalar_lea.smem %s0, 28
  %s57 = sld [smem:[%s56]]
  %s58 = scalar_lea.smem %s0, 29
  %s59 = sld [smem:[%s58]]
  %s60 = scalar_lea.smem %s0, 30
  %s61 = sld [smem:[%s60]]
  %s62 = scalar_lea.smem %s0, 31
  %s63 = sld [smem:[%s62]]
  %s64 = scalar_lea.smem %s0, 32
  %s65 = sld [smem:[%s64]]
  %s66 = scalar_lea.smem %s0, 33
  %s67 = sld [smem:[%s66]]
  %s68 = scalar_lea.smem %s0, 34
  %s69 = sld [smem:[%s68]]
  %s70 = scalar_lea.smem %s0, 35
  %s71 = sld [smem:[%s70]]
  %72 = xla_tuple %s67, %s69, %s71
  %s73 = sld [smem:[#allocation0]]
  $region198: #{stage1_generator_forward.1} parent=0
    _
  %s75 = ssub.s32 1, %s73
  %s76 = scalar_select 0, %s75, %s73
  $region1: #{stage1_generator_forward.1} parent=0
    #allocation4 [shape = 'u8[512]{0}', space=vmem, size = 0x400, scoped, tag = 'input window, operand 4, single buffered']
    #allocation5 [shape = 's32[1]{0}', space=sflag, size = 0x4, scoped, tag = 'scoped memory for stage1_generator_forward.1']
    #allocation6 [shape = 's32[1]{0}', space=sflag, size = 0x4, scoped, tag = 'scoped memory for stage1_generator_forward.1']
    #allocation7 [shape = 'u8[65536]{0}', space=vmem, size = 0x10000, scoped, tag = 'input window, operand 5, single buffered']
    #allocation8 [shape = 's32[1]{0}', space=sflag, size = 0x4, scoped, tag = 'scoped memory for stage1_generator_forward.1']
    #allocation9 [shape = 'u8[2048]{0}', space=vmem, size = 0x800, scoped, tag = 'input window, operand 7, single buffered']
    #allocation10 [shape = 'u8[512]{0}', space=vmem, size = 0x400, scoped, tag = 'input window, operand 13, single buffered']
    #allocation11 [shape = 's32[1]{0}', space=sflag, size = 0x4, scoped, tag = 'scoped memory for stage1_generator_forward.1']
    #allocation12 [shape = 'u8[512]{0}', space=vmem, size = 0x400, scoped, tag = 'input window, operand 18, single buffered']
    #allocation13 [shape = 'u8[512]{0}', space=vmem, size = 0x400, scoped, tag = 'input window, operand 19, single buffered']
    #allocation14 [shape = 's32[1]{0}', space=sflag, size = 0x4, scoped, tag = 'scoped memory for stage1_generator_forward.1']
    #allocation15 [shape = 'u8[512]{0}', space=vmem, size = 0x400, scoped, tag = 'input window, operand 24, single buffered']
    #allocation16 [shape = 'u8[512]{0}', space=vmem, size = 0x400, scoped, tag = 'input window, operand 25, single buffered']
    #allocation17 [shape = 's32[1]{0}', space=sflag, size = 0x4, scoped, tag = 'scoped memory for stage1_generator_forward.1']
    #allocation18 [shape = 'u8[98304]{0}', space=vmem, size = 0x18000, scoped, tag = 'input window, operand 27, single buffered']
    #allocation19 [shape = 'u8[196608]{0}', space=vmem, size = 0x30000, scoped, tag = 'input window, operand 32, single buffered']
    #allocation20 [shape = 's32[1]{0}', space=sflag, size = 0x4, scoped, tag = 'scoped memory for stage1_generator_forward.1']
    #allocation21 [shape = 'u8[1024]{0}', space=vmem, size = 0x400, scoped, tag = 'output window, operand 1, single buffered']
    #allocation22 [shape = 'u8[1024]{0}', space=vmem, size = 0x400, scoped, tag = 'output window, operand 2, single buffered']
    #allocation23 [shape = 's32[1]{0}', space=sflag, size = 0x4, scoped, tag = 'scoped memory for stage1_generator_forward.1']
    %77 = vsyncpa [#allocation5], 0
    %78 = vsyncpa [#allocation8], 0
    %79 = vsyncpa [#allocation11], 0
    %80 = vsyncpa [#allocation14], 0
    %81 = vsyncpa [#allocation17], 0
    %82 = vsyncpa [#allocation20], 0
    %83 = vsyncpa [#allocation6], 0
    %84 = vsyncpa [#allocation23], 0
    // Predicated region
    $region2: #{stage1_generator_forward.1} parent=1 // pred_check
      _
    $region3: #{stage1_generator_forward.1} parent=1 // pred_check_branch
      %86 = sbr.rel (0) target = $region5
    $region4: #{stage1_generator_forward.1} parent=1 // pred_region
      _
    $region5: #{stage1_generator_forward.1} parent=1 // pred_fallthru
      _
    // Predicated region
    $region6: #{stage1_generator_forward.1} parent=1 // pred_check
      _
    $region7: #{stage1_generator_forward.1} parent=1 // pred_check_branch
      %88 = sbr.rel (0) target = $region9
    $region8: #{stage1_generator_forward.1} parent=1 // pred_region
      _
    $region9: #{stage1_generator_forward.1} parent=1 // pred_fallthru
      _
    // Predicated region
    $region10: #{stage1_generator_forward.1} parent=1 // pred_check
      _
    $region11: #{stage1_generator_forward.1} parent=1 // pred_check_branch
      %90 = sbr.rel (0) target = $region13
    $region12: #{stage1_generator_forward.1} parent=1 // pred_region
      _
    $region13: #{stage1_generator_forward.1} parent=1 // pred_fallthru
      _
    // Predicated region
    $region14: #{stage1_generator_forward.1} parent=1 // pred_check
      _
    $region15: #{stage1_generator_forward.1} parent=1 // pred_check_branch
      %92 = sbr.rel (0) target = $region17
    $region16: #{stage1_generator_forward.1} parent=1 // pred_region
      _
    $region17: #{stage1_generator_forward.1} parent=1 // pred_fallthru
      _
    // Predicated region
    $region18: #{stage1_generator_forward.1} parent=1 // pred_check
      _
    $region19: #{stage1_generator_forward.1} parent=1 // pred_check_branch
      %94 = sbr.rel (0) target = $region21
    $region20: #{stage1_generator_forward.1} parent=1 // pred_region
      %96 = vsyncadd [#allocation5], 0
      %s98 = sshll.u32 %s9, 4
      %s99 = int_to_ptr.hbm [resolvable:$true] %s98
      %s100 = sshll.u32 [#allocation4], 4
      %s101 = int_to_ptr.vmem [resolvable:$true] %s100
      %103 = dma.hbm_to_vmem [thread:$0]  %s99, 16, %s101, [#allocation5]
    $region21: #{stage1_generator_forward.1} parent=1 // pred_fallthru
      _
    // Predicated region
    $region22: #{stage1_generator_forward.1} parent=1 // pred_check
      _
    $region23: #{stage1_generator_forward.1} parent=1 // pred_check_branch
      %105 = sbr.rel (0) target = $region25
    $region24: #{stage1_generator_forward.1} parent=1 // pred_region
      %107 = vsyncadd [#allocation8], 0
      %s108 = sshll.u32 %s11, 4
      %s109 = int_to_ptr.hbm [resolvable:$true] %s108
      %s110 = sshll.u32 [#allocation7], 4
      %s111 = int_to_ptr.vmem [resolvable:$true] %s110
      %116 = dma.hbm_to_vmem [thread:$0]  %s109, 2048, %s111, [#allocation8], 512, 512, 32
    $region25: #{stage1_generator_forward.1} parent=1 // pred_fallthru
      _
    // Predicated region
    $region26: #{stage1_generator_forward.1} parent=1 // pred_check
      _
    $region27: #{stage1_generator_forward.1} parent=1 // pred_check_branch
      %118 = sbr.rel (0) target = $region29
    $region28: #{stage1_generator_forward.1} parent=1 // pred_region
      _
    $region29: #{stage1_generator_forward.1} parent=1 // pred_fallthru
      _
    // Predicated region
    $region30: #{stage1_generator_forward.1} parent=1 // pred_check
      _
    $region31: #{stage1_generator_forward.1} parent=1 // pred_check_branch
      %120 = sbr.rel (0) target = $region33
    $region32: #{stage1_generator_forward.1} parent=1 // pred_region
      %122 = vsyncadd [#allocation8], 0
      %s124 = sshll.u32 %s15, 4
      %s125 = int_to_ptr.hbm [resolvable:$true] %s124
      %s126 = sshll.u32 [#allocation9], 4
      %s127 = int_to_ptr.vmem [resolvable:$true] %s126
      %129 = dma.hbm_to_vmem [thread:$0]  %s125, 64, %s127, [#allocation8]
    $region33: #{stage1_generator_forward.1} parent=1 // pred_fallthru
      _
    // Predicated region
    $region34: #{stage1_generator_forward.1} parent=1 // pred_check
      _
    $region35: #{stage1_generator_forward.1} parent=1 // pred_check_branch
      %131 = sbr.rel (0) target = $region37
    $region36: #{stage1_generator_forward.1} parent=1 // pred_region
      _
    $region37: #{stage1_generator_forward.1} parent=1 // pred_fallthru
      _
    // Predicated region
    $region38: #{stage1_generator_forward.1} parent=1 // pred_check
      _
    $region39: #{stage1_generator_forward.1} parent=1 // pred_check_branch
      %133 = sbr.rel (0) target = $region41
    $region40: #{stage1_generator_forward.1} parent=1 // pred_region
      _
    $region41: #{stage1_generator_forward.1} parent=1 // pred_fallthru
      _
    // Predicated region
    $region42: #{stage1_generator_forward.1} parent=1 // pred_check
      _
    $region43: #{stage1_generator_forward.1} parent=1 // pred_check_branch
      %135 = sbr.rel (0) target = $region45
    $region44: #{stage1_generator_forward.1} parent=1 // pred_region
      _
    $region45: #{stage1_generator_forward.1} parent=1 // pred_fallthru
      _
    // Predicated region
    $region46: #{stage1_generator_forward.1} parent=1 // pred_check
      _
    $region47: #{stage1_generator_forward.1} parent=1 // pred_check_branch
      %137 = sbr.rel (0) target = $region49
    $region48: #{stage1_generator_forward.1} parent=1 // pred_region
      _
    $region49: #{stage1_generator_forward.1} parent=1 // pred_fallthru
      _
    // Predicated region
    $region50: #{stage1_generator_forward.1} parent=1 // pred_check
      _
    $region51: #{stage1_generator_forward.1} parent=1 // pred_check_branch
      %139 = sbr.rel (0) target = $region53
    $region52: #{stage1_generator_forward.1} parent=1 // pred_region
      _
    $region53: #{stage1_generator_forward.1} parent=1 // pred_fallthru
      _
    // Predicated region
    $region54: #{stage1_generator_forward.1} parent=1 // pred_check
      _
    $region55: #{stage1_generator_forward.1} parent=1 // pred_check_branch
      %141 = sbr.rel (0) target = $region57
    $region56: #{stage1_generator_forward.1} parent=1 // pred_region
      %143 = vsyncadd [#allocation11], 0
      %s145 = sshll.u32 %s27, 4
      %s146 = int_to_ptr.hbm [resolvable:$true] %s145
      %s147 = sshll.u32 [#allocation10], 4
      %s148 = int_to_ptr.vmem [resolvable:$true] %s147
      %150 = dma.hbm_to_vmem [thread:$0]  %s146, 16, %s148, [#allocation11]
    $region57: #{stage1_generator_forward.1} parent=1 // pred_fallthru
      _
    // Predicated region
    $region58: #{stage1_generator_forward.1} parent=1 // pred_check
      _
    $region59: #{stage1_generator_forward.1} parent=1 // pred_check_branch
      %152 = sbr.rel (0) target = $region61
    $region60: #{stage1_generator_forward.1} parent=1 // pred_region
      _
    $region61: #{stage1_generator_forward.1} parent=1 // pred_fallthru
      _
    // Predicated region
    $region62: #{stage1_generator_forward.1} parent=1 // pred_check
      _
    $region63: #{stage1_generator_forward.1} parent=1 // pred_check_branch
      %154 = sbr.rel (0) target = $region65
    $region64: #{stage1_generator_forward.1} parent=1 // pred_region
      _
    $region65: #{stage1_generator_forward.1} parent=1 // pred_fallthru
      _
    // Predicated region
    $region66: #{stage1_generator_forward.1} parent=1 // pred_check
      _
    $region67: #{stage1_generator_forward.1} parent=1 // pred_check_branch
      %156 = sbr.rel (0) target = $region69
    $region68: #{stage1_generator_forward.1} parent=1 // pred_region
      _
    $region69: #{stage1_generator_forward.1} parent=1 // pred_fallthru
      _
    // Predicated region
    $region70: #{stage1_generator_forward.1} parent=1 // pred_check
      _
    $region71: #{stage1_generator_forward.1} parent=1 // pred_check_branch
      %158 = sbr.rel (0) target = $region73
    $region72: #{stage1_generator_forward.1} parent=1 // pred_region
      _
    $region73: #{stage1_generator_forward.1} parent=1 // pred_fallthru
      _
    // Predicated region
    $region74: #{stage1_generator_forward.1} parent=1 // pred_check
      _
    $region75: #{stage1_generator_forward.1} parent=1 // pred_check_branch
      %160 = sbr.rel (0) target = $region77
    $region76: #{stage1_generator_forward.1} parent=1 // pred_region
      %162 = vsyncadd [#allocation11], 0
      %s164 = sshll.u32 %s37, 4
      %s165 = int_to_ptr.hbm [resolvable:$true] %s164
      %s166 = sshll.u32 [#allocation12], 4
      %s167 = int_to_ptr.vmem [resolvable:$true] %s166
      %169 = dma.hbm_to_vmem [thread:$0]  %s165, 16, %s167, [#allocation11]
    $region77: #{stage1_generator_forward.1} parent=1 // pred_fallthru
      _
    // Predicated region
    $region78: #{stage1_generator_forward.1} parent=1 // pred_check
      _
    $region79: #{stage1_generator_forward.1} parent=1 // pred_check_branch
      %171 = sbr.rel (0) target = $region81
    $region80: #{stage1_generator_forward.1} parent=1 // pred_region
      %173 = vsyncadd [#allocation14], 0
      %s175 = sshll.u32 %s39, 4
      %s176 = int_to_ptr.hbm [resolvable:$true] %s175
      %s177 = sshll.u32 [#allocation13], 4
      %s178 = int_to_ptr.vmem [resolvable:$true] %s177
      %180 = dma.hbm_to_vmem [thread:$0]  %s176, 16, %s178, [#allocation14]
    $region81: #{stage1_generator_forward.1} parent=1 // pred_fallthru
      _
    // Predicated region
    $region82: #{stage1_generator_forward.1} parent=1 // pred_check
      _
    $region83: #{stage1_generator_forward.1} parent=1 // pred_check_branch
      %182 = sbr.rel (0) target = $region85
    $region84: #{stage1_generator_forward.1} parent=1 // pred_region
      _
    $region85: #{stage1_generator_forward.1} parent=1 // pred_fallthru
      _
    // Predicated region
    $region86: #{stage1_generator_forward.1} parent=1 // pred_check
      _
    $region87: #{stage1_generator_forward.1} parent=1 // pred_check_branch
      %184 = sbr.rel (0) target = $region89
    $region88: #{stage1_generator_forward.1} parent=1 // pred_region
      _
    $region89: #{stage1_generator_forward.1} parent=1 // pred_fallthru
      _
    // Predicated region
    $region90: #{stage1_generator_forward.1} parent=1 // pred_check
      _
    $region91: #{stage1_generator_forward.1} parent=1 // pred_check_branch
      %186 = sbr.rel (0) target = $region93
    $region92: #{stage1_generator_forward.1} parent=1 // pred_region
      _
    $region93: #{stage1_generator_forward.1} parent=1 // pred_fallthru
      _
    // Predicated region
    $region94: #{stage1_generator_forward.1} parent=1 // pred_check
      _
    $region95: #{stage1_generator_forward.1} parent=1 // pred_check_branch
      %188 = sbr.rel (0) target = $region97
    $region96: #{stage1_generator_forward.1} parent=1 // pred_region
      _
    $region97: #{stage1_generator_forward.1} parent=1 // pred_fallthru
      _
    // Predicated region
    $region98: #{stage1_generator_forward.1} parent=1 // pred_check
      _
    $region99: #{stage1_generator_forward.1} parent=1 // pred_check_branch
      %190 = sbr.rel (0) target = $region101
    $region100: #{stage1_generator_forward.1} parent=1 // pred_region
      %192 = vsyncadd [#allocation14], 0
      %s194 = sshll.u32 %s49, 4
      %s195 = int_to_ptr.hbm [resolvable:$true] %s194
      %s196 = sshll.u32 [#allocation15], 4
      %s197 = int_to_ptr.vmem [resolvable:$true] %s196
      %199 = dma.hbm_to_vmem [thread:$0]  %s195, 16, %s197, [#allocation14]
    $region101: #{stage1_generator_forward.1} parent=1 // pred_fallthru
      _
    // Predicated region
    $region102: #{stage1_generator_forward.1} parent=1 // pred_check
      _
    $region103: #{stage1_generator_forward.1} parent=1 // pred_check_branch
      %201 = sbr.rel (0) target = $region105
    $region104: #{stage1_generator_forward.1} parent=1 // pred_region
      %203 = vsyncadd [#allocation17], 0
      %s205 = sshll.u32 %s51, 4
      %s206 = int_to_ptr.hbm [resolvable:$true] %s205
      %s207 = sshll.u32 [#allocation16], 4
      %s208 = int_to_ptr.vmem [resolvable:$true] %s207
      %210 = dma.hbm_to_vmem [thread:$0]  %s206, 16, %s208, [#allocation17]
    $region105: #{stage1_generator_forward.1} parent=1 // pred_fallthru
      _
    // Predicated region
    $region106: #{stage1_generator_forward.1} parent=1 // pred_check
      _
    $region107: #{stage1_generator_forward.1} parent=1 // pred_check_branch
      %212 = sbr.rel (0) target = $region109
    $region108: #{stage1_generator_forward.1} parent=1 // pred_region
      _
    $region109: #{stage1_generator_forward.1} parent=1 // pred_fallthru
      _
    // Predicated region
    $region110: #{stage1_generator_forward.1} parent=1 // pred_check
      _
    $region111: #{stage1_generator_forward.1} parent=1 // pred_check_branch
      %214 = sbr.rel (0) target = $region113
    $region112: #{stage1_generator_forward.1} parent=1 // pred_region
      %216 = vsyncadd [#allocation17], 0
      %s217 = sshll.u32 %s55, 4
      %s218 = int_to_ptr.hbm [resolvable:$true] %s217
      %s219 = sshll.u32 [#allocation18], 4
      %s220 = int_to_ptr.vmem [resolvable:$true] %s219
      %225 = dma.hbm_to_vmem [thread:$0]  %s218, 3072, %s220, [#allocation17], 64, 64, 4
    $region113: #{stage1_generator_forward.1} parent=1 // pred_fallthru
      _
    // Predicated region
    $region114: #{stage1_generator_forward.1} parent=1 // pred_check
      _
    $region115: #{stage1_generator_forward.1} parent=1 // pred_check_branch
      %227 = sbr.rel (0) target = $region117
    $region116: #{stage1_generator_forward.1} parent=1 // pred_region
      _
    $region117: #{stage1_generator_forward.1} parent=1 // pred_fallthru
      _
    // Predicated region
    $region118: #{stage1_generator_forward.1} parent=1 // pred_check
      _
    $region119: #{stage1_generator_forward.1} parent=1 // pred_check_branch
      %229 = sbr.rel (0) target = $region121
    $region120: #{stage1_generator_forward.1} parent=1 // pred_region
      _
    $region121: #{stage1_generator_forward.1} parent=1 // pred_fallthru
      _
    // Predicated region
    $region122: #{stage1_generator_forward.1} parent=1 // pred_check
      _
    $region123: #{stage1_generator_forward.1} parent=1 // pred_check_branch
      %231 = sbr.rel (0) target = $region125
    $region124: #{stage1_generator_forward.1} parent=1 // pred_region
      _
    $region125: #{stage1_generator_forward.1} parent=1 // pred_fallthru
      _
    // Predicated region
    $region126: #{stage1_generator_forward.1} parent=1 // pred_check
      _
    $region127: #{stage1_generator_forward.1} parent=1 // pred_check_branch
      %233 = sbr.rel (0) target = $region129
    $region128: #{stage1_generator_forward.1} parent=1 // pred_region
      _
    $region129: #{stage1_generator_forward.1} parent=1 // pred_fallthru
      _
    // Predicated region
    $region130: #{stage1_generator_forward.1} parent=1 // pred_check
      _
    $region131: #{stage1_generator_forward.1} parent=1 // pred_check_branch
      %235 = sbr.rel (0) target = $region133
    $region132: #{stage1_generator_forward.1} parent=1 // pred_region
      %237 = vsyncadd [#allocation20], 0
      %s238 = sshll.u32 %s65, 4
      %s239 = int_to_ptr.hbm [resolvable:$true] %s238
      %s240 = sshll.u32 [#allocation19], 4
      %s241 = int_to_ptr.vmem [resolvable:$true] %s240
      %246 = dma.hbm_to_vmem [thread:$0]  %s239, 6144, %s241, [#allocation20], 128, 128, 8
    $region133: #{stage1_generator_forward.1} parent=1 // pred_fallthru
      _
    // Predicated region
    $region134: #{stage1_generator_forward.1} parent=1 // pred_check
      _
    $region135: #{stage1_generator_forward.1} parent=1 // pred_check_branch
      %248 = sbr.rel (0) target = $region137
    $region136: #{stage1_generator_forward.1} parent=1 // pred_region
      %250 = dma.done [#allocation5], 16
    $region137: #{stage1_generator_forward.1} parent=1 // pred_fallthru
      _
    // Predicated region
    $region138: #{stage1_generator_forward.1} parent=1 // pred_check
      _
    $region139: #{stage1_generator_forward.1} parent=1 // pred_check_branch
      %252 = sbr.rel (0) target = $region141
    $region140: #{stage1_generator_forward.1} parent=1 // pred_region
      %254 = dma.done [#allocation8], 2048
    $region141: #{stage1_generator_forward.1} parent=1 // pred_fallthru
      _
    // Predicated region
    $region142: #{stage1_generator_forward.1} parent=1 // pred_check
      _
    $region143: #{stage1_generator_forward.1} parent=1 // pred_check_branch
      %256 = sbr.rel (0) target = $region145
    $region144: #{stage1_generator_forward.1} parent=1 // pred_region
      %258 = dma.done [#allocation8], 64
    $region145: #{stage1_generator_forward.1} parent=1 // pred_fallthru
      _
    // Predicated region
    $region146: #{stage1_generator_forward.1} parent=1 // pred_check
      _
    $region147: #{stage1_generator_forward.1} parent=1 // pred_check_branch
      %260 = sbr.rel (0) target = $region149
    $region148: #{stage1_generator_forward.1} parent=1 // pred_region
      %262 = dma.done [#allocation11], 16
    $region149: #{stage1_generator_forward.1} parent=1 // pred_fallthru
      _
    // Predicated region
    $region150: #{stage1_generator_forward.1} parent=1 // pred_check
      _
    $region151: #{stage1_generator_forward.1} parent=1 // pred_check_branch
      %264 = sbr.rel (0) target = $region153
    $region152: #{stage1_generator_forward.1} parent=1 // pred_region
      %266 = dma.done [#allocation11], 16
    $region153: #{stage1_generator_forward.1} parent=1 // pred_fallthru
      _
    // Predicated region
    $region154: #{stage1_generator_forward.1} parent=1 // pred_check
      _
    $region155: #{stage1_generator_forward.1} parent=1 // pred_check_branch
      %268 = sbr.rel (0) target = $region157
    $region156: #{stage1_generator_forward.1} parent=1 // pred_region
      %270 = dma.done [#allocation14], 16
    $region157: #{stage1_generator_forward.1} parent=1 // pred_fallthru
      _
    // Predicated region
    $region158: #{stage1_generator_forward.1} parent=1 // pred_check
      _
    $region159: #{stage1_generator_forward.1} parent=1 // pred_check_branch
      %272 = sbr.rel (0) target = $region161
    $region160: #{stage1_generator_forward.1} parent=1 // pred_region
      %274 = dma.done [#allocation14], 16
    $region161: #{stage1_generator_forward.1} parent=1 // pred_fallthru
      _
    // Predicated region
    $region162: #{stage1_generator_forward.1} parent=1 // pred_check
      _
    $region163: #{stage1_generator_forward.1} parent=1 // pred_check_branch
      %276 = sbr.rel (0) target = $region165
    $region164: #{stage1_generator_forward.1} parent=1 // pred_region
      %278 = dma.done [#allocation17], 16
    $region165: #{stage1_generator_forward.1} parent=1 // pred_fallthru
      _
    // Predicated region
    $region166: #{stage1_generator_forward.1} parent=1 // pred_check
      _
    $region167: #{stage1_generator_forward.1} parent=1 // pred_check_branch
      %280 = sbr.rel (0) target = $region169
    $region168: #{stage1_generator_forward.1} parent=1 // pred_region
      %282 = dma.done [#allocation17], 3072
    $region169: #{stage1_generator_forward.1} parent=1 // pred_fallthru
      _
    // Predicated region
    $region170: #{stage1_generator_forward.1} parent=1 // pred_check
      _
    $region171: #{stage1_generator_forward.1} parent=1 // pred_check_branch
      %284 = sbr.rel (0) target = $region173
    $region172: #{stage1_generator_forward.1} parent=1 // pred_region
      %286 = dma.done [#allocation20], 6144
    $region173: #{stage1_generator_forward.1} parent=1 // pred_fallthru
      _
    %v287 = vld [vmem:[%s1] sm:$0x3]
    %v288 = vld [vmem:[%s7] sm:$0xff]
    %v289 = vld [vmem:[%s7 + $0x8] sm:$0xff]
    %v290 = vld [vmem:[%s7 + $0x10] sm:$0xff]
    %v291 = vld [vmem:[%s7 + $0x18] sm:$0xff]
    %v292 = vld [vmem:[#allocation4] sm:$0x1]
    %v294 = vperm.slane %v292, 0
    %vm296 = vcmask 261120
    %v298 = vsel %vm296, %v287, 0
    %300 = vmatpush.msra.mxu0 0.0
    %301 = vmatpush.msra.mxu0 0.0
    %302 = vmatpush.msra.mxu0 0.0
    %303 = vmatpush.msra.mxu0 0.0
    %304 = vmatpush.msra.mxu0 0.0
    %305 = vmatpush.msra.mxu0 0.0
    %306 = vmatpush.msra.mxu0 0.0
    %307 = vmatpush.msra.mxu0 0.0
    %308 = vmatpush.msra.mxu0 0.0
    %309 = vmatpush.msra.mxu0 0.0
    %310 = vmatpush.msra.mxu0 0.0
    %311 = vmatpush.msra.mxu0 0.0
    %312 = vmatpush.msra.mxu0 %v291
    %313 = vmatpush.msra.mxu0 %v290
    %314 = vmatpush.msra.mxu0 %v289
    %315 = vmatpush.msra.mxu0 %v288
    %316 = vmatmul.f32.gmra.mxu0 %v298
    %v317 = vpop.f32.mrf.mxu0
    %v318 = vadd.f32 %v294, %v317
    %319 = vdwg.mxu0
    %v320 = vmax.f32 %v318, 0.0
    %vm321 = vcmask 123904
    %322 = vst.msk [vmem:[#allocation21] sm:$0x3] %vm321, %v320
    %324 = vrot.lane.b32.xlu0 %v320, 112
    %v325 = vpop.permute.xlu0 %324
    %327 = vst.msk [vmem:[#allocation22] sm:$0x3] %vm321, %v325
    %v328 = vmul.f32 %v320, 0.5
    %v329 = vmul.f32 %v328, 1.442695
    %v330 = vpow.pop %v329
    %v331 = vld [vmem:[%s3] sm:$0x3]
    %333 = vrot.lane.b32.xlu0 %v331, 16
    %v334 = vpop.permute.xlu0 %333
    %v336 = vmul.f32 %v330, %v334
    %338 = vrot.lane.b32.xlu0 %v336, 112
    %v339 = vpop.permute.xlu0 %338
    %v341 = vadd.f32 %v320, %v339
    %v342 = vld [vmem:[%s5] sm:$0x3]
    %344 = vrot.lane.b32.xlu0 %v342, 16
    %v345 = vpop.permute.xlu0 %344
    %vm347 = vcmask 130048
    %v348 = vsel %vm347, %v341, %v345
    %v349 = vld [vmem:[#allocation7] sm:$0xff]
    %v350 = vld [vmem:[#allocation7 + $0x8] sm:$0xff]
    %v351 = vld [vmem:[#allocation7 + $0x10] sm:$0xff]
    %v352 = vld [vmem:[#allocation7 + $0x18] sm:$0xff]
    %v353 = vld [vmem:[#allocation7 + $0x20] sm:$0xff]
    %v354 = vld [vmem:[#allocation7 + $0x28] sm:$0xff]
    %v355 = vld [vmem:[#allocation7 + $0x30] sm:$0xff]
    %v356 = vld [vmem:[#allocation7 + $0x38] sm:$0xff]
    %v357 = vld [vmem:[#allocation7 + $0x40] sm:$0xff]
    %v358 = vld [vmem:[#allocation7 + $0x48] sm:$0xff]
    %v359 = vld [vmem:[#allocation7 + $0x50] sm:$0xff]
    %v360 = vld [vmem:[#allocation7 + $0x58] sm:$0xff]
    %v361 = vld [vmem:[#allocation7 + $0x60] sm:$0xff]
    %v362 = vld [vmem:[#allocation7 + $0x68] sm:$0xff]
    %v363 = vld [vmem:[#allocation7 + $0x70] sm:$0xff]
    %v364 = vld [vmem:[#allocation7 + $0x78] sm:$0xff]
    %v366 = vsel %vm296, %v348, 0
    %368 = vmatpush.msra.mxu0 0.0
    %369 = vmatpush.msra.mxu0 0.0
    %370 = vmatpush.msra.mxu0 0.0
    %371 = vmatpush.msra.mxu0 0.0
    %372 = vmatpush.msra.mxu0 0.0
    %373 = vmatpush.msra.mxu0 0.0
    %374 = vmatpush.msra.mxu0 0.0
    %375 = vmatpush.msra.mxu0 0.0
    %376 = vmatpush.msra.mxu0 0.0
    %377 = vmatpush.msra.mxu0 0.0
    %378 = vmatpush.msra.mxu0 0.0
    %379 = vmatpush.msra.mxu0 0.0
    %380 = vmatpush.msra.mxu0 %v361
    %381 = vmatpush.msra.mxu0 %v357
    %382 = vmatpush.msra.mxu0 %v353
    %383 = vmatpush.msra.mxu0 %v349
    %384 = vmatmul.f32.gmra.mxu0 %v366
    %v385 = vpop.f32.mrf.mxu0
    %v386 = vadd.f32 0.0, %v385
    %387 = vdwg.mxu0
    %388 = vmatpush.msra.mxu0 0.0
    %389 = vmatpush.msra.mxu0 0.0
    %390 = vmatpush.msra.mxu0 0.0
    %391 = vmatpush.msra.mxu0 0.0
    %392 = vmatpush.msra.mxu0 0.0
    %393 = vmatpush.msra.mxu0 0.0
    %394 = vmatpush.msra.mxu0 0.0
    %395 = vmatpush.msra.mxu0 0.0
    %396 = vmatpush.msra.mxu0 0.0
    %397 = vmatpush.msra.mxu0 0.0
    %398 = vmatpush.msra.mxu0 0.0
    %399 = vmatpush.msra.mxu0 0.0
    %400 = vmatpush.msra.mxu0 %v362
    %401 = vmatpush.msra.mxu0 %v358
    %402 = vmatpush.msra.mxu0 %v354
    %403 = vmatpush.msra.mxu0 %v350
    %404 = vmatmul.f32.gmra.mxu0 %v366
    %v405 = vpop.f32.mrf.mxu0
    %v406 = vadd.f32 0.0, %v405
    %407 = vdwg.mxu0
    %408 = vmatpush.msra.mxu0 0.0
    %409 = vmatpush.msra.mxu0 0.0
    %410 = vmatpush.msra.mxu0 0.0
    %411 = vmatpush.msra.mxu0 0.0
    %412 = vmatpush.msra.mxu0 0.0
    %413 = vmatpush.msra.mxu0 0.0
    %414 = vmatpush.msra.mxu0 0.0
    %415 = vmatpush.msra.mxu0 0.0
    %416 = vmatpush.msra.mxu0 0.0
    %417 = vmatpush.msra.mxu0 0.0
    %418 = vmatpush.msra.mxu0 0.0
    %419 = vmatpush.msra.mxu0 0.0
    %420 = vmatpush.msra.mxu0 %v363
    %421 = vmatpush.msra.mxu0 %v359
    %422 = vmatpush.msra.mxu0 %v355
    %423 = vmatpush.msra.mxu0 %v351
    %424 = vmatmul.f32.gmra.mxu0 %v366
    %v425 = vpop.f32.mrf.mxu0
    %v426 = vadd.f32 0.0, %v425
    %427 = vdwg.mxu0
    %428 = vmatpush.msra.mxu0 0.0
    %429 = vmatpush.msra.mxu0 0.0
    %430 = vmatpush.msra.mxu0 0.0
    %431 = vmatpush.msra.mxu0 0.0
    %432 = vmatpush.msra.mxu0 0.0
    %433 = vmatpush.msra.mxu0 0.0
    %434 = vmatpush.msra.mxu0 0.0
    %435 = vmatpush.msra.mxu0 0.0
    %436 = vmatpush.msra.mxu0 0.0
    %437 = vmatpush.msra.mxu0 0.0
    %438 = vmatpush.msra.mxu0 0.0
    %439 = vmatpush.msra.mxu0 0.0
    %440 = vmatpush.msra.mxu0 %v364
    %441 = vmatpush.msra.mxu0 %v360
    %442 = vmatpush.msra.mxu0 %v356
    %443 = vmatpush.msra.mxu0 %v352
    %444 = vmatmul.f32.gmra.mxu0 %v366
    %v445 = vpop.f32.mrf.mxu0
    %v446 = vadd.f32 0.0, %v445
    %447 = vdwg.mxu0
    %vm448 = vcmask 1041408
    %v449 = vsel %vm448, %v386, 0.0
    %v450 = vrot.slane %v449, 4
    %v451 = vadd.f32 %v449, %v450
    %v452 = vrot.slane %v451, 2
    %v453 = vadd.f32 %v451, %v452
    %v454 = vrot.slane %v453, 1
    %v455 = vadd.f32 %v453, %v454
    %v456 = vsel %vm448, %v406, 0.0
    %v457 = vrot.slane %v456, 4
    %v458 = vadd.f32 %v456, %v457
    %v459 = vrot.slane %v458, 2
    %v460 = vadd.f32 %v458, %v459
    %v461 = vrot.slane %v460, 1
    %v462 = vadd.f32 %v460, %v461
    %v463 = vsel %vm448, %v426, 0.0
    %v464 = vrot.slane %v463, 4
    %v465 = vadd.f32 %v463, %v464
    %v466 = vrot.slane %v465, 2
    %v467 = vadd.f32 %v465, %v466
    %v468 = vrot.slane %v467, 1
    %v469 = vadd.f32 %v467, %v468
    %v470 = vsel %vm448, %v446, 0.0
    %v471 = vrot.slane %v470, 4
    %v472 = vadd.f32 %v470, %v471
    %v473 = vrot.slane %v472, 2
    %v474 = vadd.f32 %v472, %v473
    %v475 = vrot.slane %v474, 1
    %v476 = vadd.f32 %v474, %v475
    %v477 = vmul.f32 %v455, 0.5
    %v478 = vmul.f32 %v462, 0.5
    %v479 = vmul.f32 %v469, 0.5
    %v480 = vmul.f32 %v476, 0.5
    %v481 = vsub.f32 %v386, %v477
    %v482 = vsub.f32 %v406, %v478
    %v483 = vsub.f32 %v426, %v479
    %v484 = vsub.f32 %v446, %v480
    %v485 = vmul.f32 %v481, %v481
    %v486 = vmul.f32 %v482, %v482
    %v487 = vmul.f32 %v483, %v483
    %v488 = vmul.f32 %v484, %v484
    %v489 = vsel %vm448, %v485, 0.0
    %v490 = vrot.slane %v489, 4
    %v491 = vadd.f32 %v489, %v490
    %v492 = vrot.slane %v491, 2
    %v493 = vadd.f32 %v491, %v492
    %v494 = vrot.slane %v493, 1
    %v495 = vadd.f32 %v493, %v494
    %v496 = vsel %vm448, %v486, 0.0
    %v497 = vrot.slane %v496, 4
    %v498 = vadd.f32 %v496, %v497
    %v499 = vrot.slane %v498, 2
    %v500 = vadd.f32 %v498, %v499
    %v501 = vrot.slane %v500, 1
    %v502 = vadd.f32 %v500, %v501
    %v503 = vsel %vm448, %v487, 0.0
    %v504 = vrot.slane %v503, 4
    %v505 = vadd.f32 %v503, %v504
    %v506 = vrot.slane %v505, 2
    %v507 = vadd.f32 %v505, %v506
    %v508 = vrot.slane %v507, 1
    %v509 = vadd.f32 %v507, %v508
    %v510 = vsel %vm448, %v488, 0.0
    %v511 = vrot.slane %v510, 4
    %v512 = vadd.f32 %v510, %v511
    %v513 = vrot.slane %v512, 2
    %v514 = vadd.f32 %v512, %v513
    %v515 = vrot.slane %v514, 1
    %v516 = vadd.f32 %v514, %v515
    %v517 = vmul.f32 %v495, 0.5
    %v518 = vmul.f32 %v502, 0.5
    %v519 = vmul.f32 %v509, 0.5
    %v520 = vmul.f32 %v516, 0.5
    %v521 = vld [vmem:[%s13] sm:$0xf]
    %v522 = vadd.f32 %v517, 1e-05
    %v523 = vadd.f32 %v518, 1e-05
    %v524 = vadd.f32 %v519, 1e-05
    %v525 = vadd.f32 %v520, 1e-05
    %v526 = vrsqrt.pop %v522
    %v527 = vmul.f32 %v526, %v522
    %v528 = vmul.f32 %v527, %v526
    %v529 = vmul.f32 0.5, %v528
    %v530 = vsub.f32 1.5, %v529
    %v531 = vmul.f32 %v526, %v530
    %vm532 = vweird.f32 %v522
    %vm533 = vweird.f32 %v526
    %vm534 = vmor %vm532, %vm533
    %v535 = vsel %vm534, %v526, %v531
    %v536 = vrsqrt.pop %v523
    %v537 = vmul.f32 %v536, %v523
    %v538 = vmul.f32 %v537, %v536
    %v539 = vmul.f32 0.5, %v538
    %v540 = vsub.f32 1.5, %v539
    %v541 = vmul.f32 %v536, %v540
    %vm542 = vweird.f32 %v523
    %vm543 = vweird.f32 %v536
    %vm544 = vmor %vm542, %vm543
    %v545 = vsel %vm544, %v536, %v541
    %v546 = vrsqrt.pop %v524
    %v547 = vmul.f32 %v546, %v524
    %v548 = vmul.f32 %v547, %v546
    %v549 = vmul.f32 0.5, %v548
    %v550 = vsub.f32 1.5, %v549
    %v551 = vmul.f32 %v546, %v550
    %vm552 = vweird.f32 %v524
    %vm553 = vweird.f32 %v546
    %vm554 = vmor %vm552, %vm553
    %v555 = vsel %vm554, %v546, %v551
    %v556 = vrsqrt.pop %v525
    %v557 = vmul.f32 %v556, %v525
    %v558 = vmul.f32 %v557, %v556
    %v559 = vmul.f32 0.5, %v558
    %v560 = vsub.f32 1.5, %v559
    %v561 = vmul.f32 %v556, %v560
    %vm562 = vweird.f32 %v525
    %vm563 = vweird.f32 %v556
    %vm564 = vmor %vm562, %vm563
    %v565 = vsel %vm564, %v556, %v561
    %v570 = vrot.slane %v545, 7
    %v571 = vrot.slane %v555, 6
    %v572 = vrot.slane %v565, 5
    %vm573 = vcmask 1040384
    %v574 = vsel %vm573, %v535, %v570
    %vm575 = vcmask 1042434
    %v576 = vsel %vm575, %v571, %v572
    %v577 = vsel %vm448, %v574, %v576
    %v579 = vmul.f32 %v521, %v577
    %v581 = vperm.slane %v579, 0
    %v582 = vperm.slane %v579, 1
    %v583 = vperm.slane %v579, 2
    %v584 = vperm.slane %v579, 3
    %v589 = vmul.f32 %v481, %v581
    %v590 = vmul.f32 %v482, %v582
    %v591 = vmul.f32 %v483, %v583
    %v592 = vmul.f32 %v484, %v584
    %v593 = vld [vmem:[#allocation9] sm:$0xf]
    %v595 = vperm.slane %v593, 0
    %v596 = vperm.slane %v593, 1
    %v597 = vperm.slane %v593, 2
    %v598 = vperm.slane %v593, 3
    %v603 = vadd.f32 %v589, %v595
    %v604 = vadd.f32 %v590, %v596
    %v605 = vadd.f32 %v591, %v597
    %v606 = vadd.f32 %v592, %v598
    %v607 = vmax.f32 %v603, 0.0
    %v608 = vmax.f32 %v604, 0.0
    %v609 = vmax.f32 %v605, 0.0
    %v610 = vmax.f32 %v606, 0.0
    %611 = vst [vmem:[#allocation2] sm:$0x1] %v607
    %612 = vst [vmem:[#allocation2 + $0x1] sm:$0x1] %v608
    %613 = vst [vmem:[#allocation2 + $0x2] sm:$0x1] %v609
    %614 = vst [vmem:[#allocation2 + $0x3] sm:$0x1] %v610
    %615 = vst [vmem:[#allocation2 + $0x3] sm:$0x2] %v607
    %616 = vst [vmem:[#allocation2 + $0x4] sm:$0x2] %v608
    %617 = vst [vmem:[#allocation2 + $0x5] sm:$0x2] %v609
    %618 = vst [vmem:[#allocation2 + $0x6] sm:$0x2] %v610
    %v619 = vld [vmem:[#allocation2] sm:$0xff]
    %v620 = vld [vmem:[%s17] sm:$0xff]
    %vm621 = vcmask 31744
    %v623 = vsel %vm621, %v620, 0
    %vm625 = vcmask 1043456
    %v627 = vsel %vm625, %v619, 0
    %629 = vmatpush.msra.mxu0 0.0
    %630 = vmatpush.msra.mxu0 0.0
    %631 = vmatpush.msra.mxu0 0.0
    %632 = vmatpush.msra.mxu0 0.0
    %633 = vmatpush.msra.mxu0 0.0
    %634 = vmatpush.msra.mxu0 0.0
    %635 = vmatpush.msra.mxu0 0.0
    %636 = vmatpush.msra.mxu0 0.0
    %637 = vmatpush.msra.mxu0 0.0
    %638 = vmatpush.msra.mxu0 0.0
    %639 = vmatpush.msra.mxu0 0.0
    %640 = vmatpush.msra.mxu0 0.0
    %641 = vmatpush.msra.mxu0 0.0
    %642 = vmatpush.msra.mxu0 0.0
    %643 = vmatpush.msra.mxu0 0.0
    %644 = vmatpush.msra.mxu0 %v627
    %645 = vmatmul.f32.gmra.mxu0 %v623
    %v646 = vpop.f32.mrf.mxu0
    %v647 = vadd.f32 0.0, %v646
    %648 = vdwg.mxu0
    %649 = vst [vmem:[#allocation3] sm:$0xff] %v647
    %v650 = vrot.slane %v619, 4
    %v651 = vsel %vm625, %v650, 0
    %653 = vmatpush.msra.mxu0 0.0
    %654 = vmatpush.msra.mxu0 0.0
    %655 = vmatpush.msra.mxu0 0.0
    %656 = vmatpush.msra.mxu0 0.0
    %657 = vmatpush.msra.mxu0 0.0
    %658 = vmatpush.msra.mxu0 0.0
    %659 = vmatpush.msra.mxu0 0.0
    %660 = vmatpush.msra.mxu0 0.0
    %661 = vmatpush.msra.mxu0 0.0
    %662 = vmatpush.msra.mxu0 0.0
    %663 = vmatpush.msra.mxu0 0.0
    %664 = vmatpush.msra.mxu0 0.0
    %665 = vmatpush.msra.mxu0 0.0
    %666 = vmatpush.msra.mxu0 0.0
    %667 = vmatpush.msra.mxu0 0.0
    %668 = vmatpush.msra.mxu0 %v651
    %669 = vmatmul.f32.gmra.mxu0 %v623
    %v670 = vpop.f32.mrf.mxu0
    %v671 = vadd.f32 0.0, %v670
    %672 = vdwg.mxu0
    %673 = vst [vmem:[#allocation3 + $0x8] sm:$0xff] %v671
    %v674 = vld [vmem:[#allocation3] sm:$0xff]
    %v675 = vld [vmem:[#allocation3 + $0x8] sm:$0xff]
    %v676 = vlaneseq
    %v677 = vshrl.u32 %v676, 7
    %v678 = vadd.s32 %v677, 8
    %vm679 = vcmp.lt.s32.totalorder %v677, 0
    %v680 = vsub.s32 0, %v677
    %v681 = vsel %vm679, %v680, %v677
    %v682 = vshrl.u32 %v681, 3
    %v683 = vand.u32 %v681, 7
    %v684 = vsub.s32 0, %v683
    %v685 = vsel %vm679, %v684, %v683
    %vm686 = vcmp.lt.s32.totalorder %v678, 0
    %v687 = vsub.s32 0, %v678
    %v688 = vsel %vm686, %v687, %v678
    %v689 = vshrl.u32 %v688, 3
    %v690 = vand.u32 %v688, 7
    %v691 = vsub.s32 0, %v690
    %v692 = vsel %vm686, %v691, %v690
    %vm693 = vcmp.ne.s32.totalorder %v685, 0
    %vm694 = vcmp.ne.s32.totalorder %v692, 0
    %vm695 = vcmp.lt.s32.totalorder %v685, 0
    %vm696 = vcmp.lt.s32.totalorder %v692, 0
    %vm697 = vmand %vm695, %vm693
    %vm698 = vmand %vm696, %vm694
    %v699 = vadd.s32 %v685, 8
    %v700 = vadd.s32 %v692, 8
    %v701 = vsel %vm697, %v699, %v685
    %v702 = vsel %vm698, %v700, %v692
    %v703 = vrot.slane %v674, 7
    %v704 = vrot.slane %v675, 7
    %vm705 = vcmp.lt.s32.totalorder %v677, 1
    %v706 = vsel %vm705, %v703, %v704
    %v707 = vsel %vm705, %v704, %v703
    %vm708 = vcmp.ne.s32.totalorder %v701, 0
    %vm709 = vcmp.ne.s32.totalorder %v702, 0
    %v710 = vsel %vm708, 1, 0
    %v711 = vsel %vm709, 1, 0
    %v712 = vcvt.s32.f32 %v710
    %v713 = vcvt.s32.f32 %v711
    %v714 = vmul.f32 %v707, %v712
    %v715 = vmul.f32 %v706, %v713
    %v716 = vrot.slane %v674, 1
    %v717 = vrot.slane %v675, 1
    %vm718 = vcmp.lt.s32.totalorder %v677, 7
    %v719 = vsel %vm718, %v716, %v717
    %v720 = vsel %vm718, %v717, %v716
    %vm721 = vcmp.ne.s32.totalorder %v701, 7
    %vm722 = vcmp.ne.s32.totalorder %v702, 7
    %v723 = vsel %vm721, 1, 0
    %v724 = vsel %vm722, 1, 0
    %v725 = vcvt.s32.f32 %v723
    %v726 = vcvt.s32.f32 %v724
    %v727 = vmul.f32 %v719, %v725
    %v728 = vmul.f32 %v720, %v726
    %v729 = vpack.c.bf16 %v715, %v714
    %v730 = vpack.c.bf16 %v675, %v674
    %v731 = vpack.c.bf16 %v728, %v727
    %v732 = vld [vmem:[%s19] sm:$0xf]
    %v733 = vld [vmem:[%s19 + $0x4] sm:$0xf]
    %v734 = vld [vmem:[%s19 + $0x8] sm:$0xf]
    %v735 = vld [vmem:[%s19 + $0xc] sm:$0xf]
    %v736 = vld [vmem:[%s19 + $0x10] sm:$0xf]
    %v737 = vld [vmem:[%s19 + $0x14] sm:$0xf]
    %v738 = vld [vmem:[%s19 + $0x18] sm:$0xf]
    %v739 = vld [vmem:[%s19 + $0x1c] sm:$0xf]
    %v740 = vld [vmem:[%s19 + $0x20] sm:$0xf]
    %v741 = vld [vmem:[%s19 + $0x24] sm:$0xf]
    %v742 = vld [vmem:[%s19 + $0x28] sm:$0xf]
    %v743 = vld [vmem:[%s19 + $0x2c] sm:$0xf]
    %v744 = vld [vmem:[%s19 + $0x30] sm:$0xf]
    %v745 = vld [vmem:[%s19 + $0x34] sm:$0xf]
    %v746 = vld [vmem:[%s19 + $0x38] sm:$0xf]
    %v747 = vld [vmem:[%s19 + $0x3c] sm:$0xf]
    %v748 = vld [vmem:[%s19 + $0x40] sm:$0xf]
    %v749 = vld [vmem:[%s19 + $0x44] sm:$0xf]
    %v750 = vld [vmem:[%s19 + $0x48] sm:$0xf]
    %v751 = vld [vmem:[%s19 + $0x4c] sm:$0xf]
    %v752 = vld [vmem:[%s19 + $0x50] sm:$0xf]
    %v753 = vld [vmem:[%s19 + $0x54] sm:$0xf]
    %v754 = vld [vmem:[%s19 + $0x58] sm:$0xf]
    %v755 = vld [vmem:[%s19 + $0x5c] sm:$0xf]
    %v756 = vld [vmem:[%s19 + $0x60] sm:$0xf]
    %v757 = vld [vmem:[%s19 + $0x64] sm:$0xf]
    %v758 = vld [vmem:[%s19 + $0x68] sm:$0xf]
    %v759 = vld [vmem:[%s19 + $0x6c] sm:$0xf]
    %v760 = vld [vmem:[%s19 + $0x70] sm:$0xf]
    %v761 = vld [vmem:[%s19 + $0x74] sm:$0xf]
    %v762 = vld [vmem:[%s19 + $0x78] sm:$0xf]
    %v763 = vld [vmem:[%s19 + $0x7c] sm:$0xf]
    %v764 = vld [vmem:[%s19 + $0x80] sm:$0xf]
    %v765 = vld [vmem:[%s19 + $0x84] sm:$0xf]
    %v766 = vld [vmem:[%s19 + $0x88] sm:$0xf]
    %v767 = vld [vmem:[%s19 + $0x8c] sm:$0xf]
    %v768 = vld [vmem:[%s19 + $0x90] sm:$0xf]
    %v769 = vld [vmem:[%s19 + $0x94] sm:$0xf]
    %v770 = vld [vmem:[%s19 + $0x98] sm:$0xf]
    %v771 = vld [vmem:[%s19 + $0x9c] sm:$0xf]
    %v772 = vld [vmem:[%s19 + $0xa0] sm:$0xf]
    %v773 = vld [vmem:[%s19 + $0xa4] sm:$0xf]
    %v774 = vld [vmem:[%s19 + $0xa8] sm:$0xf]
    %v775 = vld [vmem:[%s19 + $0xac] sm:$0xf]
    %v776 = vld [vmem:[%s19 + $0xb0] sm:$0xf]
    %v777 = vld [vmem:[%s19 + $0xb4] sm:$0xf]
    %v778 = vld [vmem:[%s19 + $0xb8] sm:$0xf]
    %v779 = vld [vmem:[%s19 + $0xbc] sm:$0xf]
    %v828 = vunpack.c.l.b16 %v732
    %v829 = vunpack.c.l.b16 %v733
    %v830 = vunpack.c.l.b16 %v734
    %v831 = vunpack.c.l.b16 %v735
    %v832 = vunpack.c.l.b16 %v736
    %v833 = vunpack.c.l.b16 %v737
    %v834 = vunpack.c.l.b16 %v738
    %v835 = vunpack.c.l.b16 %v739
    %v836 = vunpack.c.l.b16 %v740
    %v837 = vunpack.c.l.b16 %v741
    %v838 = vunpack.c.l.b16 %v742
    %v839 = vunpack.c.l.b16 %v743
    %v840 = vunpack.c.l.b16 %v744
    %v841 = vunpack.c.l.b16 %v745
    %v842 = vunpack.c.l.b16 %v746
    %v843 = vunpack.c.l.b16 %v747
    %v844 = vunpack.c.l.b16 %v748
    %v845 = vunpack.c.l.b16 %v749
    %v846 = vunpack.c.l.b16 %v750
    %v847 = vunpack.c.l.b16 %v751
    %v848 = vunpack.c.l.b16 %v752
    %v849 = vunpack.c.l.b16 %v753
    %v850 = vunpack.c.l.b16 %v754
    %v851 = vunpack.c.l.b16 %v755
    %v852 = vunpack.c.l.b16 %v756
    %v853 = vunpack.c.l.b16 %v757
    %v854 = vunpack.c.l.b16 %v758
    %v855 = vunpack.c.l.b16 %v759
    %v856 = vunpack.c.l.b16 %v760
    %v857 = vunpack.c.l.b16 %v761
    %v858 = vunpack.c.l.b16 %v762
    %v859 = vunpack.c.l.b16 %v763
    %v860 = vunpack.c.l.b16 %v764
    %v861 = vunpack.c.l.b16 %v765
    %v862 = vunpack.c.l.b16 %v766
    %v863 = vunpack.c.l.b16 %v767
    %v864 = vunpack.c.l.b16 %v768
    %v865 = vunpack.c.l.b16 %v769
    %v866 = vunpack.c.l.b16 %v770
    %v867 = vunpack.c.l.b16 %v771
    %v868 = vunpack.c.l.b16 %v772
    %v869 = vunpack.c.l.b16 %v773
    %v870 = vunpack.c.l.b16 %v774
    %v871 = vunpack.c.l.b16 %v775
    %v872 = vunpack.c.l.b16 %v776
    %v873 = vunpack.c.l.b16 %v777
    %v874 = vunpack.c.l.b16 %v778
    %v875 = vunpack.c.l.b16 %v779
    %v876 = vpack.c.b16 %v829, %v828
    %v877 = vpack.c.b16 %v831, %v830
    %v878 = vpack.c.b16 %v833, %v832
    %v879 = vpack.c.b16 %v835, %v834
    %v880 = vpack.c.b16 %v837, %v836
    %v881 = vpack.c.b16 %v839, %v838
    %v882 = vpack.c.b16 %v841, %v840
    %v883 = vpack.c.b16 %v843, %v842
    %v884 = vpack.c.b16 %v845, %v844
    %v885 = vpack.c.b16 %v847, %v846
    %v886 = vpack.c.b16 %v849, %v848
    %v887 = vpack.c.b16 %v851, %v850
    %v888 = vpack.c.b16 %v853, %v852
    %v889 = vpack.c.b16 %v855, %v854
    %v890 = vpack.c.b16 %v857, %v856
    %v891 = vpack.c.b16 %v859, %v858
    %v892 = vpack.c.b16 %v861, %v860
    %v893 = vpack.c.b16 %v863, %v862
    %v894 = vpack.c.b16 %v865, %v864
    %v895 = vpack.c.b16 %v867, %v866
    %v896 = vpack.c.b16 %v869, %v868
    %v897 = vpack.c.b16 %v871, %v870
    %v898 = vpack.c.b16 %v873, %v872
    %v899 = vpack.c.b16 %v875, %v874
    %924 = vmatpush.bf16.msra.mxu0 %v883
    %925 = vmatpush.bf16.msra.mxu0 %v882
    %926 = vmatpush.bf16.msra.mxu0 %v881
    %927 = vmatpush.bf16.msra.mxu0 %v880
    %928 = vmatpush.bf16.msra.mxu0 %v879
    %929 = vmatpush.bf16.msra.mxu0 %v878
    %930 = vmatpush.bf16.msra.mxu0 %v877
    %931 = vmatpush.bf16.msra.mxu0 %v876
    %932 = vmatmul.bf16.gmra.mxu0 %v729
    %v933 = vpop.f32.mrf.mxu0
    %v934 = vadd.f32 0.0, %v933
    %v935 = vpop.f32.mrf.mxu0
    %v936 = vadd.f32 0.0, %v935
    %937 = vdwg.mxu0
    %938 = vmatpush.bf16.msra.mxu0 %v891
    %939 = vmatpush.bf16.msra.mxu0 %v890
    %940 = vmatpush.bf16.msra.mxu0 %v889
    %941 = vmatpush.bf16.msra.mxu0 %v888
    %942 = vmatpush.bf16.msra.mxu0 %v887
    %943 = vmatpush.bf16.msra.mxu0 %v886
    %944 = vmatpush.bf16.msra.mxu0 %v885
    %945 = vmatpush.bf16.msra.mxu0 %v884
    %946 = vmatmul.bf16.gmra.mxu0 %v730
    %v947 = vpop.f32.mrf.mxu0
    %v948 = vadd.f32 %v934, %v947
    %v949 = vpop.f32.mrf.mxu0
    %v950 = vadd.f32 %v936, %v949
    %951 = vdwg.mxu0
    %952 = vmatpush.bf16.msra.mxu0 %v899
    %953 = vmatpush.bf16.msra.mxu0 %v898
    %954 = vmatpush.bf16.msra.mxu0 %v897
    %955 = vmatpush.bf16.msra.mxu0 %v896
    %956 = vmatpush.bf16.msra.mxu0 %v895
    %957 = vmatpush.bf16.msra.mxu0 %v894
    %958 = vmatpush.bf16.msra.mxu0 %v893
    %959 = vmatpush.bf16.msra.mxu0 %v892
    %960 = vmatmul.bf16.gmra.mxu0 %v731
    %v961 = vpop.f32.mrf.mxu0
    %v962 = vadd.f32 %v948, %v961
    %v963 = vpop.f32.mrf.mxu0
    %v964 = vadd.f32 %v950, %v963
    %965 = vdwg.mxu0
    %v966 = vadd.f32 %v962, %v964
    %v967 = vrot.slane %v966, 4
    %v968 = vadd.f32 %v966, %v967
    %v969 = vrot.slane %v968, 2
    %v970 = vadd.f32 %v968, %v969
    %v971 = vrot.slane %v970, 1
    %v972 = vadd.f32 %v970, %v971
    %v973 = vld [vmem:[%s21] sm:$0xff]
    %v974 = vld [vmem:[%s21 + $0x8] sm:$0xff]
    %v975 = vld [vmem:[%s21 + $0x10] sm:$0xff]
    %v976 = vld [vmem:[%s21 + $0x18] sm:$0xff]
    %v977 = vld [vmem:[%s21 + $0x20] sm:$0xff]
    %v978 = vld [vmem:[%s21 + $0x28] sm:$0xff]
    %v979 = vld [vmem:[%s21 + $0x30] sm:$0xff]
    %v980 = vld [vmem:[%s21 + $0x38] sm:$0xff]
    %v981 = vld [vmem:[%s21 + $0x40] sm:$0xff]
    %v982 = vld [vmem:[%s21 + $0x48] sm:$0xff]
    %v983 = vld [vmem:[%s21 + $0x50] sm:$0xff]
    %v984 = vld [vmem:[%s21 + $0x58] sm:$0xff]
    %v985 = vld [vmem:[%s21 + $0x60] sm:$0xff]
    %v986 = vld [vmem:[%s21 + $0x68] sm:$0xff]
    %v987 = vld [vmem:[%s21 + $0x70] sm:$0xff]
    %v988 = vld [vmem:[%s21 + $0x78] sm:$0xff]
    %989 = vmatpush.msra.mxu0 %v988
    %990 = vmatpush.msra.mxu0 %v987
    %991 = vmatpush.msra.mxu0 %v986
    %992 = vmatpush.msra.mxu0 %v985
    %993 = vmatpush.msra.mxu0 %v984
    %994 = vmatpush.msra.mxu0 %v983
    %995 = vmatpush.msra.mxu0 %v982
    %996 = vmatpush.msra.mxu0 %v981
    %997 = vmatpush.msra.mxu0 %v980
    %998 = vmatpush.msra.mxu0 %v979
    %999 = vmatpush.msra.mxu0 %v978
    %1000 = vmatpush.msra.mxu0 %v977
    %1001 = vmatpush.msra.mxu0 %v976
    %1002 = vmatpush.msra.mxu0 %v975
    %1003 = vmatpush.msra.mxu0 %v974
    %1004 = vmatpush.msra.mxu0 %v973
    %1005 = vmatmul.f32.gmra.mxu0 %v972
    %v1006 = vpop.f32.mrf.mxu0
    %v1007 = vadd.f32 0.0, %v1006
    %1008 = vdwg.mxu0
    %v1009 = vmul.f32 %v1007, 0.0625
    %v1010 = vld [vmem:[%s23] sm:$0xff]
    %v1011 = vld [vmem:[%s23 + $0x8] sm:$0xff]
    %v1013 = vsel %vm347, %v1009, 0
    %1015 = vmatpush.msra.mxu0 0.0
    %1016 = vmatpush.msra.mxu0 0.0
    %1017 = vmatpush.msra.mxu0 0.0
    %1018 = vmatpush.msra.mxu0 0.0
    %1019 = vmatpush.msra.mxu0 0.0
    %1020 = vmatpush.msra.mxu0 0.0
    %1021 = vmatpush.msra.mxu0 0.0
    %1022 = vmatpush.msra.mxu0 0.0
    %1023 = vmatpush.msra.mxu0 0.0
    %1024 = vmatpush.msra.mxu0 0.0
    %1025 = vmatpush.msra.mxu0 0.0
    %1026 = vmatpush.msra.mxu0 0.0
    %1027 = vmatpush.msra.mxu0 0.0
    %1028 = vmatpush.msra.mxu0 0.0
    %1029 = vmatpush.msra.mxu0 %v1011
    %1030 = vmatpush.msra.mxu0 %v1010
    %1031 = vmatmul.f32.gmra.mxu0 %v1013
    %v1032 = vpop.f32.mrf.mxu0
    %v1033 = vadd.f32 0.0, %v1032
    %1034 = vdwg.mxu0
    %v1035 = vperm.slane %v1033, 0
    %v1036 = vsub.f32 %v962, %v1035
    %v1037 = vsub.f32 %v964, %v1035
    %v1038 = vmul.f32 %v1036, %v1036
    %v1039 = vmul.f32 %v1037, %v1037
    %v1040 = vadd.f32 %v1038, %v1039
    %v1041 = vrot.slane %v1040, 4
    %v1042 = vadd.f32 %v1040, %v1041
    %v1043 = vrot.slane %v1042, 2
    %v1044 = vadd.f32 %v1042, %v1043
    %v1045 = vrot.slane %v1044, 1
    %v1046 = vadd.f32 %v1044, %v1045
    %1047 = vmatpush.msra.mxu0 %v988
    %1048 = vmatpush.msra.mxu0 %v987
    %1049 = vmatpush.msra.mxu0 %v986
    %1050 = vmatpush.msra.mxu0 %v985
    %1051 = vmatpush.msra.mxu0 %v984
    %1052 = vmatpush.msra.mxu0 %v983
    %1053 = vmatpush.msra.mxu0 %v982
    %1054 = vmatpush.msra.mxu0 %v981
    %1055 = vmatpush.msra.mxu0 %v980
    %1056 = vmatpush.msra.mxu0 %v979
    %1057 = vmatpush.msra.mxu0 %v978
    %1058 = vmatpush.msra.mxu0 %v977
    %1059 = vmatpush.msra.mxu0 %v976
    %1060 = vmatpush.msra.mxu0 %v975
    %1061 = vmatpush.msra.mxu0 %v974
    %1062 = vmatpush.msra.mxu0 %v973
    %1063 = vmatmul.f32.gmra.mxu0 %v1046
    %v1064 = vpop.f32.mrf.mxu0
    %v1065 = vadd.f32 0.0, %v1064
    %1066 = vdwg.mxu0
    %v1067 = vmul.f32 %v1065, 0.0625
    %v1068 = vld [vmem:[%s25] sm:$0x1]
    %v1070 = vsel %vm347, %v1067, 0
    %1072 = vmatpush.msra.mxu0 0.0
    %1073 = vmatpush.msra.mxu0 0.0
    %1074 = vmatpush.msra.mxu0 0.0
    %1075 = vmatpush.msra.mxu0 0.0
    %1076 = vmatpush.msra.mxu0 0.0
    %1077 = vmatpush.msra.mxu0 0.0
    %1078 = vmatpush.msra.mxu0 0.0
    %1079 = vmatpush.msra.mxu0 0.0
    %1080 = vmatpush.msra.mxu0 0.0
    %1081 = vmatpush.msra.mxu0 0.0
    %1082 = vmatpush.msra.mxu0 0.0
    %1083 = vmatpush.msra.mxu0 0.0
    %1084 = vmatpush.msra.mxu0 0.0
    %1085 = vmatpush.msra.mxu0 0.0
    %1086 = vmatpush.msra.mxu0 %v1011
    %1087 = vmatpush.msra.mxu0 %v1010
    %1088 = vmatmul.f32.gmra.mxu0 %v1070
    %v1089 = vpop.f32.mrf.mxu0
    %v1090 = vadd.f32 1e-05, %v1089
    %1091 = vdwg.mxu0
    %v1092 = vrsqrt.pop %v1090
    %v1093 = vmul.f32 %v1092, %v1090
    %v1094 = vmul.f32 %v1093, %v1092
    %v1095 = vmul.f32 0.5, %v1094
    %v1096 = vsub.f32 1.5, %v1095
    %v1097 = vmul.f32 %v1092, %v1096
    %vm1098 = vweird.f32 %v1090
    %vm1099 = vweird.f32 %v1092
    %vm1100 = vmor %vm1098, %vm1099
    %v1101 = vsel %vm1100, %v1092, %v1097
    %v1102 = vmul.f32 %v1068, %v1101
    %v1104 = vperm.slane %v1102, 0
    %v1106 = vmul.f32 %v1036, %v1104
    %v1107 = vmul.f32 %v1037, %v1104
    %v1108 = vld [vmem:[#allocation10] sm:$0x1]
    %v1110 = vperm.slane %v1108, 0
    %v1112 = vadd.f32 %v1106, %v1110
    %v1113 = vadd.f32 %v1107, %v1110
    %v1114 = vmax.f32 %v1112, 0.0
    %v1115 = vmax.f32 %v1113, 0.0
    %v1116 = vld [vmem:[%s29] sm:$0xff]
    %v1117 = vld [vmem:[%s29 + $0x8] sm:$0xff]
    %vm1118 = vcmask 64512
    %v1120 = vsel %vm1118, %v1116, 0
    %v1123 = vsel %vm1118, %v1117, 0
    %1125 = vmatpush.msra.mxu0 0.0
    %1126 = vmatpush.msra.mxu0 0.0
    %1127 = vmatpush.msra.mxu0 0.0
    %1128 = vmatpush.msra.mxu0 0.0
    %1129 = vmatpush.msra.mxu0 0.0
    %1130 = vmatpush.msra.mxu0 0.0
    %1131 = vmatpush.msra.mxu0 0.0
    %1132 = vmatpush.msra.mxu0 0.0
    %1133 = vmatpush.msra.mxu0 0.0
    %1134 = vmatpush.msra.mxu0 0.0
    %1135 = vmatpush.msra.mxu0 0.0
    %1136 = vmatpush.msra.mxu0 0.0
    %1137 = vmatpush.msra.mxu0 0.0
    %1138 = vmatpush.msra.mxu0 0.0
    %1139 = vmatpush.msra.mxu0 0.0
    %1140 = vmatpush.msra.mxu0 %v1114
    %1141 = vmatmul.f32.gmra.mxu0 %v1120
    %v1142 = vpop.f32.mrf.mxu0
    %v1143 = vadd.f32 0.0, %v1142
    %1144 = vmatmul.f32.gmra.mxu0 %v1123
    %v1145 = vpop.f32.mrf.mxu0
    %v1146 = vadd.f32 0.0, %v1145
    %1147 = vdwg.mxu0
    %1148 = vst [vmem:[#allocation3] sm:$0xff] %v1143
    %1149 = vst [vmem:[#allocation3 + $0x8] sm:$0xff] %v1146
    %1150 = vmatpush.msra.mxu0 0.0
    %1151 = vmatpush.msra.mxu0 0.0
    %1152 = vmatpush.msra.mxu0 0.0
    %1153 = vmatpush.msra.mxu0 0.0
    %1154 = vmatpush.msra.mxu0 0.0
    %1155 = vmatpush.msra.mxu0 0.0
    %1156 = vmatpush.msra.mxu0 0.0
    %1157 = vmatpush.msra.mxu0 0.0
    %1158 = vmatpush.msra.mxu0 0.0
    %1159 = vmatpush.msra.mxu0 0.0
    %1160 = vmatpush.msra.mxu0 0.0
    %1161 = vmatpush.msra.mxu0 0.0
    %1162 = vmatpush.msra.mxu0 0.0
    %1163 = vmatpush.msra.mxu0 0.0
    %1164 = vmatpush.msra.mxu0 0.0
    %1165 = vmatpush.msra.mxu0 %v1115
    %1166 = vmatmul.f32.gmra.mxu0 %v1120
    %v1167 = vpop.f32.mrf.mxu0
    %v1168 = vadd.f32 0.0, %v1167
    %1169 = vmatmul.f32.gmra.mxu0 %v1123
    %v1170 = vpop.f32.mrf.mxu0
    %v1171 = vadd.f32 0.0, %v1170
    %1172 = vdwg.mxu0
    %1173 = vst [vmem:[#allocation3 + $0x10] sm:$0xff] %v1168
    %1174 = vst [vmem:[#allocation3 + $0x18] sm:$0xff] %v1171
    %v1175 = vld [vmem:[#allocation3] sm:$0xff]
    %v1176 = vld [vmem:[#allocation3 + $0x8] sm:$0xff]
    %v1177 = vld [vmem:[#allocation3 + $0x10] sm:$0xff]
    %v1178 = vld [vmem:[#allocation3 + $0x18] sm:$0xff]
    %v1179 = vadd.s32 %v677, 16
    %v1180 = vadd.s32 %v677, 24
    %vm1181 = vcmp.lt.s32.totalorder %v677, 0
    %v1182 = vsub.s32 0, %v677
    %v1183 = vsel %vm1181, %v1182, %v677
    %v1184 = vshrl.u32 %v1183, 4
    %v1185 = vand.u32 %v1183, 15
    %v1186 = vsub.s32 0, %v1185
    %v1187 = vsel %vm1181, %v1186, %v1185
    %vm1188 = vcmp.lt.s32.totalorder %v678, 0
    %v1189 = vsub.s32 0, %v678
    %v1190 = vsel %vm1188, %v1189, %v678
    %v1191 = vshrl.u32 %v1190, 4
    %v1192 = vand.u32 %v1190, 15
    %v1193 = vsub.s32 0, %v1192
    %v1194 = vsel %vm1188, %v1193, %v1192
    %vm1195 = vcmp.lt.s32.totalorder %v1179, 0
    %v1196 = vsub.s32 0, %v1179
    %v1197 = vsel %vm1195, %v1196, %v1179
    %v1198 = vshrl.u32 %v1197, 4
    %v1199 = vand.u32 %v1197, 15
    %v1200 = vsub.s32 0, %v1199
    %v1201 = vsel %vm1195, %v1200, %v1199
    %vm1202 = vcmp.lt.s32.totalorder %v1180, 0
    %v1203 = vsub.s32 0, %v1180
    %v1204 = vsel %vm1202, %v1203, %v1180
    %v1205 = vshrl.u32 %v1204, 4
    %v1206 = vand.u32 %v1204, 15
    %v1207 = vsub.s32 0, %v1206
    %v1208 = vsel %vm1202, %v1207, %v1206
    %vm1209 = vcmp.ne.s32.totalorder %v1187, 0
    %vm1210 = vcmp.ne.s32.totalorder %v1194, 0
    %vm1211 = vcmp.ne.s32.totalorder %v1201, 0
    %vm1212 = vcmp.ne.s32.totalorder %v1208, 0
    %vm1213 = vcmp.lt.s32.totalorder %v1187, 0
    %vm1214 = vcmp.lt.s32.totalorder %v1194, 0
    %vm1215 = vcmp.lt.s32.totalorder %v1201, 0
    %vm1216 = vcmp.lt.s32.totalorder %v1208, 0
    %vm1217 = vmand %vm1213, %vm1209
    %vm1218 = vmand %vm1214, %vm1210
    %vm1219 = vmand %vm1215, %vm1211
    %vm1220 = vmand %vm1216, %vm1212
    %v1221 = vadd.s32 %v1187, 16
    %v1222 = vadd.s32 %v1194, 16
    %v1223 = vadd.s32 %v1201, 16
    %v1224 = vadd.s32 %v1208, 16
    %v1225 = vsel %vm1217, %v1221, %v1187
    %v1226 = vsel %vm1218, %v1222, %v1194
    %v1227 = vsel %vm1219, %v1223, %v1201
    %v1228 = vsel %vm1220, %v1224, %v1208
    %v1229 = vrot.slane %v1175, 7
    %v1230 = vrot.slane %v1176, 7
    %v1231 = vrot.slane %v1177, 7
    %v1232 = vrot.slane %v1178, 7
    %v1233 = vsel %vm705, %v1231, %v1232
    %v1234 = vsel %vm705, %v1230, %v1231
    %v1235 = vsel %vm705, %v1229, %v1230
    %v1236 = vsel %vm705, %v1232, %v1229
    %vm1237 = vcmp.ne.s32.totalorder %v1225, 0
    %vm1238 = vcmp.ne.s32.totalorder %v1226, 0
    %vm1239 = vcmp.ne.s32.totalorder %v1227, 0
    %vm1240 = vcmp.ne.s32.totalorder %v1228, 0
    %v1241 = vsel %vm1237, 1, 0
    %v1242 = vsel %vm1238, 1, 0
    %v1243 = vsel %vm1239, 1, 0
    %v1244 = vsel %vm1240, 1, 0
    %v1245 = vcvt.s32.f32 %v1241
    %v1246 = vcvt.s32.f32 %v1242
    %v1247 = vcvt.s32.f32 %v1243
    %v1248 = vcvt.s32.f32 %v1244
    %v1249 = vmul.f32 %v1236, %v1245
    %v1250 = vmul.f32 %v1235, %v1246
    %v1251 = vmul.f32 %v1234, %v1247
    %v1252 = vmul.f32 %v1233, %v1248
    %v1253 = vrot.slane %v1175, 1
    %v1254 = vrot.slane %v1176, 1
    %v1255 = vrot.slane %v1177, 1
    %v1256 = vrot.slane %v1178, 1
    %v1257 = vsel %vm718, %v1255, %v1256
    %v1258 = vsel %vm718, %v1254, %v1255
    %v1259 = vsel %vm718, %v1253, %v1254
    %v1260 = vsel %vm718, %v1256, %v1253
    %vm1261 = vcmp.ne.s32.totalorder %v1225, 15
    %vm1262 = vcmp.ne.s32.totalorder %v1226, 15
    %vm1263 = vcmp.ne.s32.totalorder %v1227, 15
    %vm1264 = vcmp.ne.s32.totalorder %v1228, 15
    %v1265 = vsel %vm1261, 1, 0
    %v1266 = vsel %vm1262, 1, 0
    %v1267 = vsel %vm1263, 1, 0
    %v1268 = vsel %vm1264, 1, 0
    %v1269 = vcvt.s32.f32 %v1265
    %v1270 = vcvt.s32.f32 %v1266
    %v1271 = vcvt.s32.f32 %v1267
    %v1272 = vcvt.s32.f32 %v1268
    %v1273 = vmul.f32 %v1259, %v1269
    %v1274 = vmul.f32 %v1258, %v1270
    %v1275 = vmul.f32 %v1257, %v1271
    %v1276 = vmul.f32 %v1260, %v1272
    %v1277 = vpack.c.bf16 %v1250, %v1249
    %v1278 = vpack.c.bf16 %v1176, %v1175
    %v1279 = vpack.c.bf16 %v1274, %v1273
    %v1280 = vpack.c.bf16 %v1252, %v1251
    %v1281 = vpack.c.bf16 %v1178, %v1177
    %v1282 = vpack.c.bf16 %v1276, %v1275
    %v1283 = vld [vmem:[%s31] sm:$0xf]
    %v1284 = vld [vmem:[%s31 + $0x4] sm:$0xf]
    %v1285 = vld [vmem:[%s31 + $0x8] sm:$0xf]
    %v1286 = vld [vmem:[%s31 + $0xc] sm:$0xf]
    %v1287 = vld [vmem:[%s31 + $0x10] sm:$0xf]
    %v1288 = vld [vmem:[%s31 + $0x14] sm:$0xf]
    %v1289 = vld [vmem:[%s31 + $0x18] sm:$0xf]
    %v1290 = vld [vmem:[%s31 + $0x1c] sm:$0xf]
    %v1291 = vld [vmem:[%s31 + $0x20] sm:$0xf]
    %v1292 = vld [vmem:[%s31 + $0x24] sm:$0xf]
    %v1293 = vld [vmem:[%s31 + $0x28] sm:$0xf]
    %v1294 = vld [vmem:[%s31 + $0x2c] sm:$0xf]
    %v1295 = vld [vmem:[%s31 + $0x30] sm:$0xf]
    %v1296 = vld [vmem:[%s31 + $0x34] sm:$0xf]
    %v1297 = vld [vmem:[%s31 + $0x38] sm:$0xf]
    %v1298 = vld [vmem:[%s31 + $0x3c] sm:$0xf]
    %v1299 = vld [vmem:[%s31 + $0x40] sm:$0xf]
    %v1300 = vld [vmem:[%s31 + $0x44] sm:$0xf]
    %v1301 = vld [vmem:[%s31 + $0x48] sm:$0xf]
    %v1302 = vld [vmem:[%s31 + $0x4c] sm:$0xf]
    %v1303 = vld [vmem:[%s31 + $0x50] sm:$0xf]
    %v1304 = vld [vmem:[%s31 + $0x54] sm:$0xf]
    %v1305 = vld [vmem:[%s31 + $0x58] sm:$0xf]
    %v1306 = vld [vmem:[%s31 + $0x5c] sm:$0xf]
    %v1307 = vld [vmem:[%s31 + $0x60] sm:$0xf]
    %v1308 = vld [vmem:[%s31 + $0x64] sm:$0xf]
    %v1309 = vld [vmem:[%s31 + $0x68] sm:$0xf]
    %v1310 = vld [vmem:[%s31 + $0x6c] sm:$0xf]
    %v1311 = vld [vmem:[%s31 + $0x70] sm:$0xf]
    %v1312 = vld [vmem:[%s31 + $0x74] sm:$0xf]
    %v1313 = vld [vmem:[%s31 + $0x78] sm:$0xf]
    %v1314 = vld [vmem:[%s31 + $0x7c] sm:$0xf]
    %v1315 = vld [vmem:[%s31 + $0x80] sm:$0xf]
    %v1316 = vld [vmem:[%s31 + $0x84] sm:$0xf]
    %v1317 = vld [vmem:[%s31 + $0x88] sm:$0xf]
    %v1318 = vld [vmem:[%s31 + $0x8c] sm:$0xf]
    %v1319 = vld [vmem:[%s31 + $0x90] sm:$0xf]
    %v1320 = vld [vmem:[%s31 + $0x94] sm:$0xf]
    %v1321 = vld [vmem:[%s31 + $0x98] sm:$0xf]
    %v1322 = vld [vmem:[%s31 + $0x9c] sm:$0xf]
    %v1323 = vld [vmem:[%s31 + $0xa0] sm:$0xf]
    %v1324 = vld [vmem:[%s31 + $0xa4] sm:$0xf]
    %v1325 = vld [vmem:[%s31 + $0xa8] sm:$0xf]
    %v1326 = vld [vmem:[%s31 + $0xac] sm:$0xf]
    %v1327 = vld [vmem:[%s31 + $0xb0] sm:$0xf]
    %v1328 = vld [vmem:[%s31 + $0xb4] sm:$0xf]
    %v1329 = vld [vmem:[%s31 + $0xb8] sm:$0xf]
    %v1330 = vld [vmem:[%s31 + $0xbc] sm:$0xf]
    %v1379 = vunpack.c.l.b16 %v1283
    %v1380 = vunpack.c.l.b16 %v1284
    %v1381 = vunpack.c.l.b16 %v1285
    %v1382 = vunpack.c.l.b16 %v1286
    %v1383 = vunpack.c.l.b16 %v1287
    %v1384 = vunpack.c.l.b16 %v1288
    %v1385 = vunpack.c.l.b16 %v1289
    %v1386 = vunpack.c.l.b16 %v1290
    %v1387 = vunpack.c.l.b16 %v1291
    %v1388 = vunpack.c.l.b16 %v1292
    %v1389 = vunpack.c.l.b16 %v1293
    %v1390 = vunpack.c.l.b16 %v1294
    %v1391 = vunpack.c.l.b16 %v1295
    %v1392 = vunpack.c.l.b16 %v1296
    %v1393 = vunpack.c.l.b16 %v1297
    %v1394 = vunpack.c.l.b16 %v1298
    %v1395 = vunpack.c.l.b16 %v1299
    %v1396 = vunpack.c.l.b16 %v1300
    %v1397 = vunpack.c.l.b16 %v1301
    %v1398 = vunpack.c.l.b16 %v1302
    %v1399 = vunpack.c.l.b16 %v1303
    %v1400 = vunpack.c.l.b16 %v1304
    %v1401 = vunpack.c.l.b16 %v1305
    %v1402 = vunpack.c.l.b16 %v1306
    %v1403 = vunpack.c.l.b16 %v1307
    %v1404 = vunpack.c.l.b16 %v1308
    %v1405 = vunpack.c.l.b16 %v1309
    %v1406 = vunpack.c.l.b16 %v1310
    %v1407 = vunpack.c.l.b16 %v1311
    %v1408 = vunpack.c.l.b16 %v1312
    %v1409 = vunpack.c.l.b16 %v1313
    %v1410 = vunpack.c.l.b16 %v1314
    %v1411 = vunpack.c.l.b16 %v1315
    %v1412 = vunpack.c.l.b16 %v1316
    %v1413 = vunpack.c.l.b16 %v1317
    %v1414 = vunpack.c.l.b16 %v1318
    %v1415 = vunpack.c.l.b16 %v1319
    %v1416 = vunpack.c.l.b16 %v1320
    %v1417 = vunpack.c.l.b16 %v1321
    %v1418 = vunpack.c.l.b16 %v1322
    %v1419 = vunpack.c.l.b16 %v1323
    %v1420 = vunpack.c.l.b16 %v1324
    %v1421 = vunpack.c.l.b16 %v1325
    %v1422 = vunpack.c.l.b16 %v1326
    %v1423 = vunpack.c.l.b16 %v1327
    %v1424 = vunpack.c.l.b16 %v1328
    %v1425 = vunpack.c.l.b16 %v1329
    %v1426 = vunpack.c.l.b16 %v1330
    %v1427 = vpack.c.b16 %v1380, %v1379
    %v1428 = vpack.c.b16 %v1382, %v1381
    %v1429 = vpack.c.b16 %v1384, %v1383
    %v1430 = vpack.c.b16 %v1386, %v1385
    %v1431 = vpack.c.b16 %v1388, %v1387
    %v1432 = vpack.c.b16 %v1390, %v1389
    %v1433 = vpack.c.b16 %v1392, %v1391
    %v1434 = vpack.c.b16 %v1394, %v1393
    %v1435 = vpack.c.b16 %v1396, %v1395
    %v1436 = vpack.c.b16 %v1398, %v1397
    %v1437 = vpack.c.b16 %v1400, %v1399
    %v1438 = vpack.c.b16 %v1402, %v1401
    %v1439 = vpack.c.b16 %v1404, %v1403
    %v1440 = vpack.c.b16 %v1406, %v1405
    %v1441 = vpack.c.b16 %v1408, %v1407
    %v1442 = vpack.c.b16 %v1410, %v1409
    %v1443 = vpack.c.b16 %v1412, %v1411
    %v1444 = vpack.c.b16 %v1414, %v1413
    %v1445 = vpack.c.b16 %v1416, %v1415
    %v1446 = vpack.c.b16 %v1418, %v1417
    %v1447 = vpack.c.b16 %v1420, %v1419
    %v1448 = vpack.c.b16 %v1422, %v1421
    %v1449 = vpack.c.b16 %v1424, %v1423
    %v1450 = vpack.c.b16 %v1426, %v1425
    %1475 = vmatpush.bf16.msra.mxu0 %v1434
    %1476 = vmatpush.bf16.msra.mxu0 %v1433
    %1477 = vmatpush.bf16.msra.mxu0 %v1432
    %1478 = vmatpush.bf16.msra.mxu0 %v1431
    %1479 = vmatpush.bf16.msra.mxu0 %v1430
    %1480 = vmatpush.bf16.msra.mxu0 %v1429
    %1481 = vmatpush.bf16.msra.mxu0 %v1428
    %1482 = vmatpush.bf16.msra.mxu0 %v1427
    %1483 = vmatmul.bf16.gmra.mxu0 %v1277
    %v1484 = vpop.f32.mrf.mxu0
    %v1485 = vadd.f32 0.0, %v1484
    %v1486 = vpop.f32.mrf.mxu0
    %v1487 = vadd.f32 0.0, %v1486
    %1488 = vmatmul.bf16.gmra.mxu0 %v1280
    %v1489 = vpop.f32.mrf.mxu0
    %v1490 = vadd.f32 0.0, %v1489
    %v1491 = vpop.f32.mrf.mxu0
    %v1492 = vadd.f32 0.0, %v1491
    %1493 = vdwg.mxu0
    %1494 = vmatpush.bf16.msra.mxu0 %v1442
    %1495 = vmatpush.bf16.msra.mxu0 %v1441
    %1496 = vmatpush.bf16.msra.mxu0 %v1440
    %1497 = vmatpush.bf16.msra.mxu0 %v1439
    %1498 = vmatpush.bf16.msra.mxu0 %v1438
    %1499 = vmatpush.bf16.msra.mxu0 %v1437
    %1500 = vmatpush.bf16.msra.mxu0 %v1436
    %1501 = vmatpush.bf16.msra.mxu0 %v1435
    %1502 = vmatmul.bf16.gmra.mxu0 %v1278
    %v1503 = vpop.f32.mrf.mxu0
    %v1504 = vadd.f32 %v1485, %v1503
    %v1505 = vpop.f32.mrf.mxu0
    %v1506 = vadd.f32 %v1487, %v1505
    %1507 = vmatmul.bf16.gmra.mxu0 %v1281
    %v1508 = vpop.f32.mrf.mxu0
    %v1509 = vadd.f32 %v1490, %v1508
    %v1510 = vpop.f32.mrf.mxu0
    %v1511 = vadd.f32 %v1492, %v1510
    %1512 = vdwg.mxu0
    %1513 = vmatpush.bf16.msra.mxu0 %v1450
    %1514 = vmatpush.bf16.msra.mxu0 %v1449
    %1515 = vmatpush.bf16.msra.mxu0 %v1448
    %1516 = vmatpush.bf16.msra.mxu0 %v1447
    %1517 = vmatpush.bf16.msra.mxu0 %v1446
    %1518 = vmatpush.bf16.msra.mxu0 %v1445
    %1519 = vmatpush.bf16.msra.mxu0 %v1444
    %1520 = vmatpush.bf16.msra.mxu0 %v1443
    %1521 = vmatmul.bf16.gmra.mxu0 %v1279
    %v1522 = vpop.f32.mrf.mxu0
    %v1523 = vadd.f32 %v1504, %v1522
    %v1524 = vpop.f32.mrf.mxu0
    %v1525 = vadd.f32 %v1506, %v1524
    %1526 = vmatmul.bf16.gmra.mxu0 %v1282
    %v1527 = vpop.f32.mrf.mxu0
    %v1528 = vadd.f32 %v1509, %v1527
    %v1529 = vpop.f32.mrf.mxu0
    %v1530 = vadd.f32 %v1511, %v1529
    %1531 = vdwg.mxu0
    %v1532 = vadd.f32 %v1523, %v1525
    %v1533 = vadd.f32 %v1532, %v1528
    %v1534 = vadd.f32 %v1533, %v1530
    %v1535 = vrot.slane %v1534, 4
    %v1536 = vadd.f32 %v1534, %v1535
    %v1537 = vrot.slane %v1536, 2
    %v1538 = vadd.f32 %v1536, %v1537
    %v1539 = vrot.slane %v1538, 1
    %v1540 = vadd.f32 %v1538, %v1539
    %v1541 = vld [vmem:[%s33] sm:$0xff]
    %v1542 = vld [vmem:[%s33 + $0x8] sm:$0xff]
    %v1543 = vld [vmem:[%s33 + $0x10] sm:$0xff]
    %v1544 = vld [vmem:[%s33 + $0x18] sm:$0xff]
    %v1545 = vld [vmem:[%s33 + $0x20] sm:$0xff]
    %v1546 = vld [vmem:[%s33 + $0x28] sm:$0xff]
    %v1547 = vld [vmem:[%s33 + $0x30] sm:$0xff]
    %v1548 = vld [vmem:[%s33 + $0x38] sm:$0xff]
    %v1549 = vld [vmem:[%s33 + $0x40] sm:$0xff]
    %v1550 = vld [vmem:[%s33 + $0x48] sm:$0xff]
    %v1551 = vld [vmem:[%s33 + $0x50] sm:$0xff]
    %v1552 = vld [vmem:[%s33 + $0x58] sm:$0xff]
    %v1553 = vld [vmem:[%s33 + $0x60] sm:$0xff]
    %v1554 = vld [vmem:[%s33 + $0x68] sm:$0xff]
    %v1555 = vld [vmem:[%s33 + $0x70] sm:$0xff]
    %v1556 = vld [vmem:[%s33 + $0x78] sm:$0xff]
    %1557 = vmatpush.msra.mxu0 %v1556
    %1558 = vmatpush.msra.mxu0 %v1555
    %1559 = vmatpush.msra.mxu0 %v1554
    %1560 = vmatpush.msra.mxu0 %v1553
    %1561 = vmatpush.msra.mxu0 %v1552
    %1562 = vmatpush.msra.mxu0 %v1551
    %1563 = vmatpush.msra.mxu0 %v1550
    %1564 = vmatpush.msra.mxu0 %v1549
    %1565 = vmatpush.msra.mxu0 %v1548
    %1566 = vmatpush.msra.mxu0 %v1547
    %1567 = vmatpush.msra.mxu0 %v1546
    %1568 = vmatpush.msra.mxu0 %v1545
    %1569 = vmatpush.msra.mxu0 %v1544
    %1570 = vmatpush.msra.mxu0 %v1543
    %1571 = vmatpush.msra.mxu0 %v1542
    %1572 = vmatpush.msra.mxu0 %v1541
    %1573 = vmatmul.f32.gmra.mxu0 %v1540
    %v1574 = vpop.f32.mrf.mxu0
    %v1575 = vadd.f32 0.0, %v1574
    %1576 = vdwg.mxu0
    %v1577 = vmul.f32 %v1575, 0.03125
    %v1578 = vld [vmem:[%s35] sm:$0xff]
    %v1580 = vsel %vm1118, %v1577, 0
    %1582 = vmatpush.msra.mxu0 0.0
    %1583 = vmatpush.msra.mxu0 0.0
    %1584 = vmatpush.msra.mxu0 0.0
    %1585 = vmatpush.msra.mxu0 0.0
    %1586 = vmatpush.msra.mxu0 0.0
    %1587 = vmatpush.msra.mxu0 0.0
    %1588 = vmatpush.msra.mxu0 0.0
    %1589 = vmatpush.msra.mxu0 0.0
    %1590 = vmatpush.msra.mxu0 0.0
    %1591 = vmatpush.msra.mxu0 0.0
    %1592 = vmatpush.msra.mxu0 0.0
    %1593 = vmatpush.msra.mxu0 0.0
    %1594 = vmatpush.msra.mxu0 0.0
    %1595 = vmatpush.msra.mxu0 0.0
    %1596 = vmatpush.msra.mxu0 0.0
    %1597 = vmatpush.msra.mxu0 %v1578
    %1598 = vmatmul.f32.gmra.mxu0 %v1580
    %v1599 = vpop.f32.mrf.mxu0
    %v1600 = vadd.f32 0.0, %v1599
    %1601 = vdwg.mxu0
    %v1602 = vperm.slane %v1600, 0
    %v1603 = vsub.f32 %v1523, %v1602
    %v1604 = vsub.f32 %v1525, %v1602
    %v1605 = vsub.f32 %v1528, %v1602
    %v1606 = vsub.f32 %v1530, %v1602
    %v1607 = vmul.f32 %v1603, %v1603
    %v1608 = vmul.f32 %v1604, %v1604
    %v1609 = vmul.f32 %v1605, %v1605
    %v1610 = vmul.f32 %v1606, %v1606
    %v1611 = vadd.f32 %v1607, %v1608
    %v1612 = vadd.f32 %v1611, %v1609
    %v1613 = vadd.f32 %v1612, %v1610
    %v1614 = vrot.slane %v1613, 4
    %v1615 = vadd.f32 %v1613, %v1614
    %v1616 = vrot.slane %v1615, 2
    %v1617 = vadd.f32 %v1615, %v1616
    %v1618 = vrot.slane %v1617, 1
    %v1619 = vadd.f32 %v1617, %v1618
    %1620 = vmatpush.msra.mxu0 %v1556
    %1621 = vmatpush.msra.mxu0 %v1555
    %1622 = vmatpush.msra.mxu0 %v1554
    %1623 = vmatpush.msra.mxu0 %v1553
    %1624 = vmatpush.msra.mxu0 %v1552
    %1625 = vmatpush.msra.mxu0 %v1551
    %1626 = vmatpush.msra.mxu0 %v1550
    %1627 = vmatpush.msra.mxu0 %v1549
    %1628 = vmatpush.msra.mxu0 %v1548
    %1629 = vmatpush.msra.mxu0 %v1547
    %1630 = vmatpush.msra.mxu0 %v1546
    %1631 = vmatpush.msra.mxu0 %v1545
    %1632 = vmatpush.msra.mxu0 %v1544
    %1633 = vmatpush.msra.mxu0 %v1543
    %1634 = vmatpush.msra.mxu0 %v1542
    %1635 = vmatpush.msra.mxu0 %v1541
    %1636 = vmatmul.f32.gmra.mxu0 %v1619
    %v1637 = vpop.f32.mrf.mxu0
    %v1638 = vadd.f32 0.0, %v1637
    %1639 = vdwg.mxu0
    %v1640 = vmul.f32 %v1638, 0.03125
    %v1641 = vld [vmem:[#allocation12] sm:$0x1]
    %v1643 = vsel %vm1118, %v1640, 0
    %1645 = vmatpush.msra.mxu0 0.0
    %1646 = vmatpush.msra.mxu0 0.0
    %1647 = vmatpush.msra.mxu0 0.0
    %1648 = vmatpush.msra.mxu0 0.0
    %1649 = vmatpush.msra.mxu0 0.0
    %1650 = vmatpush.msra.mxu0 0.0
    %1651 = vmatpush.msra.mxu0 0.0
    %1652 = vmatpush.msra.mxu0 0.0
    %1653 = vmatpush.msra.mxu0 0.0
    %1654 = vmatpush.msra.mxu0 0.0
    %1655 = vmatpush.msra.mxu0 0.0
    %1656 = vmatpush.msra.mxu0 0.0
    %1657 = vmatpush.msra.mxu0 0.0
    %1658 = vmatpush.msra.mxu0 0.0
    %1659 = vmatpush.msra.mxu0 0.0
    %1660 = vmatpush.msra.mxu0 %v1578
    %1661 = vmatmul.f32.gmra.mxu0 %v1643
    %v1662 = vpop.f32.mrf.mxu0
    %v1663 = vadd.f32 1e-05, %v1662
    %1664 = vdwg.mxu0
    %v1665 = vrsqrt.pop %v1663
    %v1666 = vmul.f32 %v1665, %v1663
    %v1667 = vmul.f32 %v1666, %v1665
    %v1668 = vmul.f32 0.5, %v1667
    %v1669 = vsub.f32 1.5, %v1668
    %v1670 = vmul.f32 %v1665, %v1669
    %vm1671 = vweird.f32 %v1663
    %vm1672 = vweird.f32 %v1665
    %vm1673 = vmor %vm1671, %vm1672
    %v1674 = vsel %vm1673, %v1665, %v1670
    %v1675 = vmul.f32 %v1641, %v1674
    %v1677 = vperm.slane %v1675, 0
    %v1679 = vmul.f32 %v1603, %v1677
    %v1680 = vmul.f32 %v1604, %v1677
    %v1681 = vmul.f32 %v1605, %v1677
    %v1682 = vmul.f32 %v1606, %v1677
    %v1683 = vld [vmem:[#allocation13] sm:$0x1]
    %v1685 = vperm.slane %v1683, 0
    %v1687 = vadd.f32 %v1679, %v1685
    %v1688 = vadd.f32 %v1680, %v1685
    %v1689 = vadd.f32 %v1681, %v1685
    %v1690 = vadd.f32 %v1682, %v1685
    %v1691 = vmax.f32 %v1687, 0.0
    %v1692 = vmax.f32 %v1688, 0.0
    %v1693 = vmax.f32 %v1689, 0.0
    %v1694 = vmax.f32 %v1690, 0.0
    %v1695 = vld [vmem:[%s41] sm:$0xff]
    %v1696 = vld [vmem:[%s41 + $0x8] sm:$0xff]
    %v1697 = vld [vmem:[%s41 + $0x10] sm:$0xff]
    %v1698 = vld [vmem:[%s41 + $0x18] sm:$0xff]
    %v1700 = vsel %vm347, %v1695, 0
    %v1703 = vsel %vm347, %v1696, 0
    %v1706 = vsel %vm347, %v1697, 0
    %v1709 = vsel %vm347, %v1698, 0
    %1711 = vmatpush.msra.mxu0 0.0
    %1712 = vmatpush.msra.mxu0 0.0
    %1713 = vmatpush.msra.mxu0 0.0
    %1714 = vmatpush.msra.mxu0 0.0
    %1715 = vmatpush.msra.mxu0 0.0
    %1716 = vmatpush.msra.mxu0 0.0
    %1717 = vmatpush.msra.mxu0 0.0
    %1718 = vmatpush.msra.mxu0 0.0
    %1719 = vmatpush.msra.mxu0 0.0
    %1720 = vmatpush.msra.mxu0 0.0
    %1721 = vmatpush.msra.mxu0 0.0
    %1722 = vmatpush.msra.mxu0 0.0
    %1723 = vmatpush.msra.mxu0 0.0
    %1724 = vmatpush.msra.mxu0 0.0
    %1725 = vmatpush.msra.mxu0 %v1692
    %1726 = vmatpush.msra.mxu0 %v1691
    %1727 = vmatmul.f32.gmra.mxu0 %v1700
    %v1728 = vpop.f32.mrf.mxu0
    %v1729 = vadd.f32 0.0, %v1728
    %1730 = vmatmul.f32.gmra.mxu0 %v1703
    %v1731 = vpop.f32.mrf.mxu0
    %v1732 = vadd.f32 0.0, %v1731
    %1733 = vmatmul.f32.gmra.mxu0 %v1706
    %v1734 = vpop.f32.mrf.mxu0
    %v1735 = vadd.f32 0.0, %v1734
    %1736 = vmatmul.f32.gmra.mxu0 %v1709
    %v1737 = vpop.f32.mrf.mxu0
    %v1738 = vadd.f32 0.0, %v1737
    %1739 = vdwg.mxu0
    %1740 = vst [vmem:[#allocation3] sm:$0xff] %v1729
    %1741 = vst [vmem:[#allocation3 + $0x8] sm:$0xff] %v1732
    %1742 = vst [vmem:[#allocation3 + $0x10] sm:$0xff] %v1735
    %1743 = vst [vmem:[#allocation3 + $0x18] sm:$0xff] %v1738
    %1744 = vmatpush.msra.mxu0 0.0
    %1745 = vmatpush.msra.mxu0 0.0
    %1746 = vmatpush.msra.mxu0 0.0
    %1747 = vmatpush.msra.mxu0 0.0
    %1748 = vmatpush.msra.mxu0 0.0
    %1749 = vmatpush.msra.mxu0 0.0
    %1750 = vmatpush.msra.mxu0 0.0
    %1751 = vmatpush.msra.mxu0 0.0
    %1752 = vmatpush.msra.mxu0 0.0
    %1753 = vmatpush.msra.mxu0 0.0
    %1754 = vmatpush.msra.mxu0 0.0
    %1755 = vmatpush.msra.mxu0 0.0
    %1756 = vmatpush.msra.mxu0 0.0
    %1757 = vmatpush.msra.mxu0 0.0
    %1758 = vmatpush.msra.mxu0 %v1694
    %1759 = vmatpush.msra.mxu0 %v1693
    %1760 = vmatmul.f32.gmra.mxu0 %v1700
    %v1761 = vpop.f32.mrf.mxu0
    %v1762 = vadd.f32 0.0, %v1761
    %1763 = vmatmul.f32.gmra.mxu0 %v1703
    %v1764 = vpop.f32.mrf.mxu0
    %v1765 = vadd.f32 0.0, %v1764
    %1766 = vmatmul.f32.gmra.mxu0 %v1706
    %v1767 = vpop.f32.mrf.mxu0
    %v1768 = vadd.f32 0.0, %v1767
    %1769 = vmatmul.f32.gmra.mxu0 %v1709
    %v1770 = vpop.f32.mrf.mxu0
    %v1771 = vadd.f32 0.0, %v1770
    %1772 = vdwg.mxu0
    %1773 = vst [vmem:[#allocation3 + $0x20] sm:$0xff] %v1762
    %1774 = vst [vmem:[#allocation3 + $0x28] sm:$0xff] %v1765
    %1775 = vst [vmem:[#allocation3 + $0x30] sm:$0xff] %v1768
    %1776 = vst [vmem:[#allocation3 + $0x38] sm:$0xff] %v1771
    %v1777 = vld [vmem:[#allocation3] sm:$0xff]
    %v1778 = vld [vmem:[#allocation3 + $0x8] sm:$0xff]
    %v1779 = vld [vmem:[#allocation3 + $0x10] sm:$0xff]
    %v1780 = vld [vmem:[#allocation3 + $0x18] sm:$0xff]
    %v1781 = vld [vmem:[#allocation3 + $0x20] sm:$0xff]
    %v1782 = vld [vmem:[#allocation3 + $0x28] sm:$0xff]
    %v1783 = vld [vmem:[#allocation3 + $0x30] sm:$0xff]
    %v1784 = vld [vmem:[#allocation3 + $0x38] sm:$0xff]
    %v1785 = vadd.s32 %v677, 32
    %v1786 = vadd.s32 %v677, 40
    %v1787 = vadd.s32 %v677, 48
    %v1788 = vadd.s32 %v677, 56
    %vm1789 = vcmp.lt.s32.totalorder %v677, 0
    %v1790 = vsub.s32 0, %v677
    %v1791 = vsel %vm1789, %v1790, %v677
    %v1792 = vshrl.u32 %v1791, 5
    %v1793 = vand.u32 %v1791, 31
    %v1794 = vsub.s32 0, %v1793
    %v1795 = vsel %vm1789, %v1794, %v1793
    %vm1796 = vcmp.lt.s32.totalorder %v678, 0
    %v1797 = vsub.s32 0, %v678
    %v1798 = vsel %vm1796, %v1797, %v678
    %v1799 = vshrl.u32 %v1798, 5
    %v1800 = vand.u32 %v1798, 31
    %v1801 = vsub.s32 0, %v1800
    %v1802 = vsel %vm1796, %v1801, %v1800
    %vm1803 = vcmp.lt.s32.totalorder %v1179, 0
    %v1804 = vsub.s32 0, %v1179
    %v1805 = vsel %vm1803, %v1804, %v1179
    %v1806 = vshrl.u32 %v1805, 5
    %v1807 = vand.u32 %v1805, 31
    %v1808 = vsub.s32 0, %v1807
    %v1809 = vsel %vm1803, %v1808, %v1807
    %vm1810 = vcmp.lt.s32.totalorder %v1180, 0
    %v1811 = vsub.s32 0, %v1180
    %v1812 = vsel %vm1810, %v1811, %v1180
    %v1813 = vshrl.u32 %v1812, 5
    %v1814 = vand.u32 %v1812, 31
    %v1815 = vsub.s32 0, %v1814
    %v1816 = vsel %vm1810, %v1815, %v1814
    %vm1817 = vcmp.lt.s32.totalorder %v1785, 0
    %v1818 = vsub.s32 0, %v1785
    %v1819 = vsel %vm1817, %v1818, %v1785
    %v1820 = vshrl.u32 %v1819, 5
    %v1821 = vand.u32 %v1819, 31
    %v1822 = vsub.s32 0, %v1821
    %v1823 = vsel %vm1817, %v1822, %v1821
    %vm1824 = vcmp.lt.s32.totalorder %v1786, 0
    %v1825 = vsub.s32 0, %v1786
    %v1826 = vsel %vm1824, %v1825, %v1786
    %v1827 = vshrl.u32 %v1826, 5
    %v1828 = vand.u32 %v1826, 31
    %v1829 = vsub.s32 0, %v1828
    %v1830 = vsel %vm1824, %v1829, %v1828
    %vm1831 = vcmp.lt.s32.totalorder %v1787, 0
    %v1832 = vsub.s32 0, %v1787
    %v1833 = vsel %vm1831, %v1832, %v1787
    %v1834 = vshrl.u32 %v1833, 5
    %v1835 = vand.u32 %v1833, 31
    %v1836 = vsub.s32 0, %v1835
    %v1837 = vsel %vm1831, %v1836, %v1835
    %vm1838 = vcmp.lt.s32.totalorder %v1788, 0
    %v1839 = vsub.s32 0, %v1788
    %v1840 = vsel %vm1838, %v1839, %v1788
    %v1841 = vshrl.u32 %v1840, 5
    %v1842 = vand.u32 %v1840, 31
    %v1843 = vsub.s32 0, %v1842
    %v1844 = vsel %vm1838, %v1843, %v1842
    %vm1845 = vcmp.ne.s32.totalorder %v1795, 0
    %vm1846 = vcmp.ne.s32.totalorder %v1802, 0
    %vm1847 = vcmp.ne.s32.totalorder %v1809, 0
    %vm1848 = vcmp.ne.s32.totalorder %v1816, 0
    %vm1849 = vcmp.ne.s32.totalorder %v1823, 0
    %vm1850 = vcmp.ne.s32.totalorder %v1830, 0
    %vm1851 = vcmp.ne.s32.totalorder %v1837, 0
    %vm1852 = vcmp.ne.s32.totalorder %v1844, 0
    %vm1853 = vcmp.lt.s32.totalorder %v1795, 0
    %vm1854 = vcmp.lt.s32.totalorder %v1802, 0
    %vm1855 = vcmp.lt.s32.totalorder %v1809, 0
    %vm1856 = vcmp.lt.s32.totalorder %v1816, 0
    %vm1857 = vcmp.lt.s32.totalorder %v1823, 0
    %vm1858 = vcmp.lt.s32.totalorder %v1830, 0
    %vm1859 = vcmp.lt.s32.totalorder %v1837, 0
    %vm1860 = vcmp.lt.s32.totalorder %v1844, 0
    %vm1861 = vmand %vm1853, %vm1845
    %vm1862 = vmand %vm1854, %vm1846
    %vm1863 = vmand %vm1855, %vm1847
    %vm1864 = vmand %vm1856, %vm1848
    %vm1865 = vmand %vm1857, %vm1849
    %vm1866 = vmand %vm1858, %vm1850
    %vm1867 = vmand %vm1859, %vm1851
    %vm1868 = vmand %vm1860, %vm1852
    %v1869 = vadd.s32 %v1795, 32
    %v1870 = vadd.s32 %v1802, 32
    %v1871 = vadd.s32 %v1809, 32
    %v1872 = vadd.s32 %v1816, 32
    %v1873 = vadd.s32 %v1823, 32
    %v1874 = vadd.s32 %v1830, 32
    %v1875 = vadd.s32 %v1837, 32
    %v1876 = vadd.s32 %v1844, 32
    %v1877 = vsel %vm1861, %v1869, %v1795
    %v1878 = vsel %vm1862, %v1870, %v1802
    %v1879 = vsel %vm1863, %v1871, %v1809
    %v1880 = vsel %vm1864, %v1872, %v1816
    %v1881 = vsel %vm1865, %v1873, %v1823
    %v1882 = vsel %vm1866, %v1874, %v1830
    %v1883 = vsel %vm1867, %v1875, %v1837
    %v1884 = vsel %vm1868, %v1876, %v1844
    %v1885 = vrot.slane %v1777, 7
    %v1886 = vrot.slane %v1778, 7
    %v1887 = vrot.slane %v1779, 7
    %v1888 = vrot.slane %v1780, 7
    %v1889 = vrot.slane %v1781, 7
    %v1890 = vrot.slane %v1782, 7
    %v1891 = vrot.slane %v1783, 7
    %v1892 = vrot.slane %v1784, 7
    %v1893 = vsel %vm705, %v1891, %v1892
    %v1894 = vsel %vm705, %v1890, %v1891
    %v1895 = vsel %vm705, %v1889, %v1890
    %v1896 = vsel %vm705, %v1888, %v1889
    %v1897 = vsel %vm705, %v1887, %v1888
    %v1898 = vsel %vm705, %v1886, %v1887
    %v1899 = vsel %vm705, %v1885, %v1886
    %v1900 = vsel %vm705, %v1892, %v1885
    %vm1901 = vcmp.ne.s32.totalorder %v1877, 0
    %vm1902 = vcmp.ne.s32.totalorder %v1878, 0
    %vm1903 = vcmp.ne.s32.totalorder %v1879, 0
    %vm1904 = vcmp.ne.s32.totalorder %v1880, 0
    %vm1905 = vcmp.ne.s32.totalorder %v1881, 0
    %vm1906 = vcmp.ne.s32.totalorder %v1882, 0
    %vm1907 = vcmp.ne.s32.totalorder %v1883, 0
    %vm1908 = vcmp.ne.s32.totalorder %v1884, 0
    %v1909 = vsel %vm1901, 1, 0
    %v1910 = vsel %vm1902, 1, 0
    %v1911 = vsel %vm1903, 1, 0
    %v1912 = vsel %vm1904, 1, 0
    %v1913 = vsel %vm1905, 1, 0
    %v1914 = vsel %vm1906, 1, 0
    %v1915 = vsel %vm1907, 1, 0
    %v1916 = vsel %vm1908, 1, 0
    %v1917 = vcvt.s32.f32 %v1909
    %v1918 = vcvt.s32.f32 %v1910
    %v1919 = vcvt.s32.f32 %v1911
    %v1920 = vcvt.s32.f32 %v1912
    %v1921 = vcvt.s32.f32 %v1913
    %v1922 = vcvt.s32.f32 %v1914
    %v1923 = vcvt.s32.f32 %v1915
    %v1924 = vcvt.s32.f32 %v1916
    %v1925 = vmul.f32 %v1900, %v1917
    %v1926 = vmul.f32 %v1899, %v1918
    %v1927 = vmul.f32 %v1898, %v1919
    %v1928 = vmul.f32 %v1897, %v1920
    %v1929 = vmul.f32 %v1896, %v1921
    %v1930 = vmul.f32 %v1895, %v1922
    %v1931 = vmul.f32 %v1894, %v1923
    %v1932 = vmul.f32 %v1893, %v1924
    %v1933 = vrot.slane %v1777, 1
    %v1934 = vrot.slane %v1778, 1
    %v1935 = vrot.slane %v1779, 1
    %v1936 = vrot.slane %v1780, 1
    %v1937 = vrot.slane %v1781, 1
    %v1938 = vrot.slane %v1782, 1
    %v1939 = vrot.slane %v1783, 1
    %v1940 = vrot.slane %v1784, 1
    %v1941 = vsel %vm718, %v1939, %v1940
    %v1942 = vsel %vm718, %v1938, %v1939
    %v1943 = vsel %vm718, %v1937, %v1938
    %v1944 = vsel %vm718, %v1936, %v1937
    %v1945 = vsel %vm718, %v1935, %v1936
    %v1946 = vsel %vm718, %v1934, %v1935
    %v1947 = vsel %vm718, %v1933, %v1934
    %v1948 = vsel %vm718, %v1940, %v1933
    %vm1949 = vcmp.ne.s32.totalorder %v1877, 31
    %vm1950 = vcmp.ne.s32.totalorder %v1878, 31
    %vm1951 = vcmp.ne.s32.totalorder %v1879, 31
    %vm1952 = vcmp.ne.s32.totalorder %v1880, 31
    %vm1953 = vcmp.ne.s32.totalorder %v1881, 31
    %vm1954 = vcmp.ne.s32.totalorder %v1882, 31
    %vm1955 = vcmp.ne.s32.totalorder %v1883, 31
    %vm1956 = vcmp.ne.s32.totalorder %v1884, 31
    %v1957 = vsel %vm1949, 1, 0
    %v1958 = vsel %vm1950, 1, 0
    %v1959 = vsel %vm1951, 1, 0
    %v1960 = vsel %vm1952, 1, 0
    %v1961 = vsel %vm1953, 1, 0
    %v1962 = vsel %vm1954, 1, 0
    %v1963 = vsel %vm1955, 1, 0
    %v1964 = vsel %vm1956, 1, 0
    %v1965 = vcvt.s32.f32 %v1957
    %v1966 = vcvt.s32.f32 %v1958
    %v1967 = vcvt.s32.f32 %v1959
    %v1968 = vcvt.s32.f32 %v1960
    %v1969 = vcvt.s32.f32 %v1961
    %v1970 = vcvt.s32.f32 %v1962
    %v1971 = vcvt.s32.f32 %v1963
    %v1972 = vcvt.s32.f32 %v1964
    %v1973 = vmul.f32 %v1947, %v1965
    %v1974 = vmul.f32 %v1946, %v1966
    %v1975 = vmul.f32 %v1945, %v1967
    %v1976 = vmul.f32 %v1944, %v1968
    %v1977 = vmul.f32 %v1943, %v1969
    %v1978 = vmul.f32 %v1942, %v1970
    %v1979 = vmul.f32 %v1941, %v1971
    %v1980 = vmul.f32 %v1948, %v1972
    %v1981 = vpack.c.bf16 %v1926, %v1925
    %v1982 = vpack.c.bf16 %v1778, %v1777
    %v1983 = vpack.c.bf16 %v1974, %v1973
    %v1984 = vpack.c.bf16 %v1928, %v1927
    %v1985 = vpack.c.bf16 %v1780, %v1779
    %v1986 = vpack.c.bf16 %v1976, %v1975
    %v1987 = vpack.c.bf16 %v1930, %v1929
    %v1988 = vpack.c.bf16 %v1782, %v1781
    %v1989 = vpack.c.bf16 %v1978, %v1977
    %v1990 = vpack.c.bf16 %v1932, %v1931
    %v1991 = vpack.c.bf16 %v1784, %v1783
    %v1992 = vpack.c.bf16 %v1980, %v1979
    %v1993 = vld [vmem:[%s43] sm:$0xf]
    %v1994 = vld [vmem:[%s43 + $0x4] sm:$0xf]
    %v1995 = vld [vmem:[%s43 + $0x8] sm:$0xf]
    %v1996 = vld [vmem:[%s43 + $0xc] sm:$0xf]
    %v1997 = vld [vmem:[%s43 + $0x10] sm:$0xf]
    %v1998 = vld [vmem:[%s43 + $0x14] sm:$0xf]
    %v1999 = vld [vmem:[%s43 + $0x18] sm:$0xf]
    %v2000 = vld [vmem:[%s43 + $0x1c] sm:$0xf]
    %v2001 = vld [vmem:[%s43 + $0x20] sm:$0xf]
    %v2002 = vld [vmem:[%s43 + $0x24] sm:$0xf]
    %v2003 = vld [vmem:[%s43 + $0x28] sm:$0xf]
    %v2004 = vld [vmem:[%s43 + $0x2c] sm:$0xf]
    %v2005 = vld [vmem:[%s43 + $0x30] sm:$0xf]
    %v2006 = vld [vmem:[%s43 + $0x34] sm:$0xf]
    %v2007 = vld [vmem:[%s43 + $0x38] sm:$0xf]
    %v2008 = vld [vmem:[%s43 + $0x3c] sm:$0xf]
    %v2009 = vld [vmem:[%s43 + $0x40] sm:$0xf]
    %v2010 = vld [vmem:[%s43 + $0x44] sm:$0xf]
    %v2011 = vld [vmem:[%s43 + $0x48] sm:$0xf]
    %v2012 = vld [vmem:[%s43 + $0x4c] sm:$0xf]
    %v2013 = vld [vmem:[%s43 + $0x50] sm:$0xf]
    %v2014 = vld [vmem:[%s43 + $0x54] sm:$0xf]
    %v2015 = vld [vmem:[%s43 + $0x58] sm:$0xf]
    %v2016 = vld [vmem:[%s43 + $0x5c] sm:$0xf]
    %v2017 = vld [vmem:[%s43 + $0x60] sm:$0xf]
    %v2018 = vld [vmem:[%s43 + $0x64] sm:$0xf]
    %v2019 = vld [vmem:[%s43 + $0x68] sm:$0xf]
    %v2020 = vld [vmem:[%s43 + $0x6c] sm:$0xf]
    %v2021 = vld [vmem:[%s43 + $0x70] sm:$0xf]
    %v2022 = vld [vmem:[%s43 + $0x74] sm:$0xf]
    %v2023 = vld [vmem:[%s43 + $0x78] sm:$0xf]
    %v2024 = vld [vmem:[%s43 + $0x7c] sm:$0xf]
    %v2025 = vld [vmem:[%s43 + $0x80] sm:$0xf]
    %v2026 = vld [vmem:[%s43 + $0x84] sm:$0xf]
    %v2027 = vld [vmem:[%s43 + $0x88] sm:$0xf]
    %v2028 = vld [vmem:[%s43 + $0x8c] sm:$0xf]
    %v2029 = vld [vmem:[%s43 + $0x90] sm:$0xf]
    %v2030 = vld [vmem:[%s43 + $0x94] sm:$0xf]
    %v2031 = vld [vmem:[%s43 + $0x98] sm:$0xf]
    %v2032 = vld [vmem:[%s43 + $0x9c] sm:$0xf]
    %v2033 = vld [vmem:[%s43 + $0xa0] sm:$0xf]
    %v2034 = vld [vmem:[%s43 + $0xa4] sm:$0xf]
    %v2035 = vld [vmem:[%s43 + $0xa8] sm:$0xf]
    %v2036 = vld [vmem:[%s43 + $0xac] sm:$0xf]
    %v2037 = vld [vmem:[%s43 + $0xb0] sm:$0xf]
    %v2038 = vld [vmem:[%s43 + $0xb4] sm:$0xf]
    %v2039 = vld [vmem:[%s43 + $0xb8] sm:$0xf]
    %v2040 = vld [vmem:[%s43 + $0xbc] sm:$0xf]
    %v2089 = vunpack.c.l.b16 %v1993
    %v2090 = vunpack.c.l.b16 %v1994
    %v2091 = vunpack.c.l.b16 %v1995
    %v2092 = vunpack.c.l.b16 %v1996
    %v2093 = vunpack.c.l.b16 %v1997
    %v2094 = vunpack.c.l.b16 %v1998
    %v2095 = vunpack.c.l.b16 %v1999
    %v2096 = vunpack.c.l.b16 %v2000
    %v2097 = vunpack.c.l.b16 %v2001
    %v2098 = vunpack.c.l.b16 %v2002
    %v2099 = vunpack.c.l.b16 %v2003
    %v2100 = vunpack.c.l.b16 %v2004
    %v2101 = vunpack.c.l.b16 %v2005
    %v2102 = vunpack.c.l.b16 %v2006
    %v2103 = vunpack.c.l.b16 %v2007
    %v2104 = vunpack.c.l.b16 %v2008
    %v2105 = vunpack.c.l.b16 %v2009
    %v2106 = vunpack.c.l.b16 %v2010
    %v2107 = vunpack.c.l.b16 %v2011
    %v2108 = vunpack.c.l.b16 %v2012
    %v2109 = vunpack.c.l.b16 %v2013
    %v2110 = vunpack.c.l.b16 %v2014
    %v2111 = vunpack.c.l.b16 %v2015
    %v2112 = vunpack.c.l.b16 %v2016
    %v2113 = vunpack.c.l.b16 %v2017
    %v2114 = vunpack.c.l.b16 %v2018
    %v2115 = vunpack.c.l.b16 %v2019
    %v2116 = vunpack.c.l.b16 %v2020
    %v2117 = vunpack.c.l.b16 %v2021
    %v2118 = vunpack.c.l.b16 %v2022
    %v2119 = vunpack.c.l.b16 %v2023
    %v2120 = vunpack.c.l.b16 %v2024
    %v2121 = vunpack.c.l.b16 %v2025
    %v2122 = vunpack.c.l.b16 %v2026
    %v2123 = vunpack.c.l.b16 %v2027
    %v2124 = vunpack.c.l.b16 %v2028
    %v2125 = vunpack.c.l.b16 %v2029
    %v2126 = vunpack.c.l.b16 %v2030
    %v2127 = vunpack.c.l.b16 %v2031
    %v2128 = vunpack.c.l.b16 %v2032
    %v2129 = vunpack.c.l.b16 %v2033
    %v2130 = vunpack.c.l.b16 %v2034
    %v2131 = vunpack.c.l.b16 %v2035
    %v2132 = vunpack.c.l.b16 %v2036
    %v2133 = vunpack.c.l.b16 %v2037
    %v2134 = vunpack.c.l.b16 %v2038
    %v2135 = vunpack.c.l.b16 %v2039
    %v2136 = vunpack.c.l.b16 %v2040
    %v2137 = vpack.c.b16 %v2090, %v2089
    %v2138 = vpack.c.b16 %v2092, %v2091
    %v2139 = vpack.c.b16 %v2094, %v2093
    %v2140 = vpack.c.b16 %v2096, %v2095
    %v2141 = vpack.c.b16 %v2098, %v2097
    %v2142 = vpack.c.b16 %v2100, %v2099
    %v2143 = vpack.c.b16 %v2102, %v2101
    %v2144 = vpack.c.b16 %v2104, %v2103
    %v2145 = vpack.c.b16 %v2106, %v2105
    %v2146 = vpack.c.b16 %v2108, %v2107
    %v2147 = vpack.c.b16 %v2110, %v2109
    %v2148 = vpack.c.b16 %v2112, %v2111
    %v2149 = vpack.c.b16 %v2114, %v2113
    %v2150 = vpack.c.b16 %v2116, %v2115
    %v2151 = vpack.c.b16 %v2118, %v2117
    %v2152 = vpack.c.b16 %v2120, %v2119
    %v2153 = vpack.c.b16 %v2122, %v2121
    %v2154 = vpack.c.b16 %v2124, %v2123
    %v2155 = vpack.c.b16 %v2126, %v2125
    %v2156 = vpack.c.b16 %v2128, %v2127
    %v2157 = vpack.c.b16 %v2130, %v2129
    %v2158 = vpack.c.b16 %v2132, %v2131
    %v2159 = vpack.c.b16 %v2134, %v2133
    %v2160 = vpack.c.b16 %v2136, %v2135
    %2185 = vmatpush.bf16.msra.mxu0 %v2144
    %2186 = vmatpush.bf16.msra.mxu0 %v2143
    %2187 = vmatpush.bf16.msra.mxu0 %v2142
    %2188 = vmatpush.bf16.msra.mxu0 %v2141
    %2189 = vmatpush.bf16.msra.mxu0 %v2140
    %2190 = vmatpush.bf16.msra.mxu0 %v2139
    %2191 = vmatpush.bf16.msra.mxu0 %v2138
    %2192 = vmatpush.bf16.msra.mxu0 %v2137
    %2193 = vmatmul.bf16.gmra.mxu0 %v1981
    %v2194 = vpop.f32.mrf.mxu0
    %v2195 = vadd.f32 0.0, %v2194
    %v2196 = vpop.f32.mrf.mxu0
    %v2197 = vadd.f32 0.0, %v2196
    %2198 = vmatmul.bf16.gmra.mxu0 %v1984
    %v2199 = vpop.f32.mrf.mxu0
    %v2200 = vadd.f32 0.0, %v2199
    %v2201 = vpop.f32.mrf.mxu0
    %v2202 = vadd.f32 0.0, %v2201
    %2203 = vmatmul.bf16.gmra.mxu0 %v1987
    %v2204 = vpop.f32.mrf.mxu0
    %v2205 = vadd.f32 0.0, %v2204
    %v2206 = vpop.f32.mrf.mxu0
    %v2207 = vadd.f32 0.0, %v2206
    %2208 = vmatmul.bf16.gmra.mxu0 %v1990
    %v2209 = vpop.f32.mrf.mxu0
    %v2210 = vadd.f32 0.0, %v2209
    %v2211 = vpop.f32.mrf.mxu0
    %v2212 = vadd.f32 0.0, %v2211
    %2213 = vdwg.mxu0
    %2214 = vmatpush.bf16.msra.mxu0 %v2152
    %2215 = vmatpush.bf16.msra.mxu0 %v2151
    %2216 = vmatpush.bf16.msra.mxu0 %v2150
    %2217 = vmatpush.bf16.msra.mxu0 %v2149
    %2218 = vmatpush.bf16.msra.mxu0 %v2148
    %2219 = vmatpush.bf16.msra.mxu0 %v2147
    %2220 = vmatpush.bf16.msra.mxu0 %v2146
    %2221 = vmatpush.bf16.msra.mxu0 %v2145
    %2222 = vmatmul.bf16.gmra.mxu0 %v1982
    %v2223 = vpop.f32.mrf.mxu0
    %v2224 = vadd.f32 %v2195, %v2223
    %v2225 = vpop.f32.mrf.mxu0
    %v2226 = vadd.f32 %v2197, %v2225
    %2227 = vmatmul.bf16.gmra.mxu0 %v1985
    %v2228 = vpop.f32.mrf.mxu0
    %v2229 = vadd.f32 %v2200, %v2228
    %v2230 = vpop.f32.mrf.mxu0
    %v2231 = vadd.f32 %v2202, %v2230
    %2232 = vmatmul.bf16.gmra.mxu0 %v1988
    %v2233 = vpop.f32.mrf.mxu0
    %v2234 = vadd.f32 %v2205, %v2233
    %v2235 = vpop.f32.mrf.mxu0
    %v2236 = vadd.f32 %v2207, %v2235
    %2237 = vmatmul.bf16.gmra.mxu0 %v1991
    %v2238 = vpop.f32.mrf.mxu0
    %v2239 = vadd.f32 %v2210, %v2238
    %v2240 = vpop.f32.mrf.mxu0
    %v2241 = vadd.f32 %v2212, %v2240
    %2242 = vdwg.mxu0
    %2243 = vmatpush.bf16.msra.mxu0 %v2160
    %2244 = vmatpush.bf16.msra.mxu0 %v2159
    %2245 = vmatpush.bf16.msra.mxu0 %v2158
    %2246 = vmatpush.bf16.msra.mxu0 %v2157
    %2247 = vmatpush.bf16.msra.mxu0 %v2156
    %2248 = vmatpush.bf16.msra.mxu0 %v2155
    %2249 = vmatpush.bf16.msra.mxu0 %v2154
    %2250 = vmatpush.bf16.msra.mxu0 %v2153
    %2251 = vmatmul.bf16.gmra.mxu0 %v1983
    %v2252 = vpop.f32.mrf.mxu0
    %v2253 = vadd.f32 %v2224, %v2252
    %v2254 = vpop.f32.mrf.mxu0
    %v2255 = vadd.f32 %v2226, %v2254
    %2256 = vmatmul.bf16.gmra.mxu0 %v1986
    %v2257 = vpop.f32.mrf.mxu0
    %v2258 = vadd.f32 %v2229, %v2257
    %v2259 = vpop.f32.mrf.mxu0
    %v2260 = vadd.f32 %v2231, %v2259
    %2261 = vmatmul.bf16.gmra.mxu0 %v1989
    %v2262 = vpop.f32.mrf.mxu0
    %v2263 = vadd.f32 %v2234, %v2262
    %v2264 = vpop.f32.mrf.mxu0
    %v2265 = vadd.f32 %v2236, %v2264
    %2266 = vmatmul.bf16.gmra.mxu0 %v1992
    %v2267 = vpop.f32.mrf.mxu0
    %v2268 = vadd.f32 %v2239, %v2267
    %v2269 = vpop.f32.mrf.mxu0
    %v2270 = vadd.f32 %v2241, %v2269
    %2271 = vdwg.mxu0
    %v2272 = vadd.f32 %v2253, %v2255
    %v2273 = vadd.f32 %v2272, %v2258
    %v2274 = vadd.f32 %v2273, %v2260
    %v2275 = vadd.f32 %v2274, %v2263
    %v2276 = vadd.f32 %v2275, %v2265
    %v2277 = vadd.f32 %v2276, %v2268
    %v2278 = vadd.f32 %v2277, %v2270
    %v2279 = vrot.slane %v2278, 4
    %v2280 = vadd.f32 %v2278, %v2279
    %v2281 = vrot.slane %v2280, 2
    %v2282 = vadd.f32 %v2280, %v2281
    %v2283 = vrot.slane %v2282, 1
    %v2284 = vadd.f32 %v2282, %v2283
    %v2285 = vld [vmem:[%s45] sm:$0xff]
    %v2286 = vld [vmem:[%s45 + $0x8] sm:$0xff]
    %v2287 = vld [vmem:[%s45 + $0x10] sm:$0xff]
    %v2288 = vld [vmem:[%s45 + $0x18] sm:$0xff]
    %v2289 = vld [vmem:[%s45 + $0x20] sm:$0xff]
    %v2290 = vld [vmem:[%s45 + $0x28] sm:$0xff]
    %v2291 = vld [vmem:[%s45 + $0x30] sm:$0xff]
    %v2292 = vld [vmem:[%s45 + $0x38] sm:$0xff]
    %v2293 = vld [vmem:[%s45 + $0x40] sm:$0xff]
    %v2294 = vld [vmem:[%s45 + $0x48] sm:$0xff]
    %v2295 = vld [vmem:[%s45 + $0x50] sm:$0xff]
    %v2296 = vld [vmem:[%s45 + $0x58] sm:$0xff]
    %v2297 = vld [vmem:[%s45 + $0x60] sm:$0xff]
    %v2298 = vld [vmem:[%s45 + $0x68] sm:$0xff]
    %v2299 = vld [vmem:[%s45 + $0x70] sm:$0xff]
    %v2300 = vld [vmem:[%s45 + $0x78] sm:$0xff]
    %2301 = vmatpush.msra.mxu0 %v2300
    %2302 = vmatpush.msra.mxu0 %v2299
    %2303 = vmatpush.msra.mxu0 %v2298
    %2304 = vmatpush.msra.mxu0 %v2297
    %2305 = vmatpush.msra.mxu0 %v2296
    %2306 = vmatpush.msra.mxu0 %v2295
    %2307 = vmatpush.msra.mxu0 %v2294
    %2308 = vmatpush.msra.mxu0 %v2293
    %2309 = vmatpush.msra.mxu0 %v2292
    %2310 = vmatpush.msra.mxu0 %v2291
    %2311 = vmatpush.msra.mxu0 %v2290
    %2312 = vmatpush.msra.mxu0 %v2289
    %2313 = vmatpush.msra.mxu0 %v2288
    %2314 = vmatpush.msra.mxu0 %v2287
    %2315 = vmatpush.msra.mxu0 %v2286
    %2316 = vmatpush.msra.mxu0 %v2285
    %2317 = vmatmul.f32.gmra.mxu0 %v2284
    %v2318 = vpop.f32.mrf.mxu0
    %v2319 = vadd.f32 0.0, %v2318
    %2320 = vdwg.mxu0
    %v2321 = vmul.f32 %v2319, 0.015625
    %v2322 = vld [vmem:[%s47] sm:$0xf]
    %v2324 = vsel %vm621, %v2321, 0
    %v2327 = vsel %vm625, %v2322, 0
    %2329 = vmatpush.msra.mxu0 0.0
    %2330 = vmatpush.msra.mxu0 0.0
    %2331 = vmatpush.msra.mxu0 0.0
    %2332 = vmatpush.msra.mxu0 0.0
    %2333 = vmatpush.msra.mxu0 0.0
    %2334 = vmatpush.msra.mxu0 0.0
    %2335 = vmatpush.msra.mxu0 0.0
    %2336 = vmatpush.msra.mxu0 0.0
    %2337 = vmatpush.msra.mxu0 0.0
    %2338 = vmatpush.msra.mxu0 0.0
    %2339 = vmatpush.msra.mxu0 0.0
    %2340 = vmatpush.msra.mxu0 0.0
    %2341 = vmatpush.msra.mxu0 0.0
    %2342 = vmatpush.msra.mxu0 0.0
    %2343 = vmatpush.msra.mxu0 0.0
    %2344 = vmatpush.msra.mxu0 %v2327
    %2345 = vmatmul.f32.gmra.mxu0 %v2324
    %v2346 = vpop.f32.mrf.mxu0
    %v2347 = vadd.f32 0.0, %v2346
    %2348 = vdwg.mxu0
    %v2349 = vperm.slane %v2347, 0
    %v2350 = vsub.f32 %v2253, %v2349
    %v2351 = vsub.f32 %v2255, %v2349
    %v2352 = vsub.f32 %v2258, %v2349
    %v2353 = vsub.f32 %v2260, %v2349
    %v2354 = vsub.f32 %v2263, %v2349
    %v2355 = vsub.f32 %v2265, %v2349
    %v2356 = vsub.f32 %v2268, %v2349
    %v2357 = vsub.f32 %v2270, %v2349
    %v2358 = vmul.f32 %v2350, %v2350
    %v2359 = vmul.f32 %v2351, %v2351
    %v2360 = vmul.f32 %v2352, %v2352
    %v2361 = vmul.f32 %v2353, %v2353
    %v2362 = vmul.f32 %v2354, %v2354
    %v2363 = vmul.f32 %v2355, %v2355
    %v2364 = vmul.f32 %v2356, %v2356
    %v2365 = vmul.f32 %v2357, %v2357
    %v2366 = vadd.f32 %v2358, %v2359
    %v2367 = vadd.f32 %v2366, %v2360
    %v2368 = vadd.f32 %v2367, %v2361
    %v2369 = vadd.f32 %v2368, %v2362
    %v2370 = vadd.f32 %v2369, %v2363
    %v2371 = vadd.f32 %v2370, %v2364
    %v2372 = vadd.f32 %v2371, %v2365
    %v2373 = vrot.slane %v2372, 4
    %v2374 = vadd.f32 %v2372, %v2373
    %v2375 = vrot.slane %v2374, 2
    %v2376 = vadd.f32 %v2374, %v2375
    %v2377 = vrot.slane %v2376, 1
    %v2378 = vadd.f32 %v2376, %v2377
    %2379 = vmatpush.msra.mxu0 %v2300
    %2380 = vmatpush.msra.mxu0 %v2299
    %2381 = vmatpush.msra.mxu0 %v2298
    %2382 = vmatpush.msra.mxu0 %v2297
    %2383 = vmatpush.msra.mxu0 %v2296
    %2384 = vmatpush.msra.mxu0 %v2295
    %2385 = vmatpush.msra.mxu0 %v2294
    %2386 = vmatpush.msra.mxu0 %v2293
    %2387 = vmatpush.msra.mxu0 %v2292
    %2388 = vmatpush.msra.mxu0 %v2291
    %2389 = vmatpush.msra.mxu0 %v2290
    %2390 = vmatpush.msra.mxu0 %v2289
    %2391 = vmatpush.msra.mxu0 %v2288
    %2392 = vmatpush.msra.mxu0 %v2287
    %2393 = vmatpush.msra.mxu0 %v2286
    %2394 = vmatpush.msra.mxu0 %v2285
    %2395 = vmatmul.f32.gmra.mxu0 %v2378
    %v2396 = vpop.f32.mrf.mxu0
    %v2397 = vadd.f32 0.0, %v2396
    %2398 = vdwg.mxu0
    %v2399 = vmul.f32 %v2397, 0.015625
    %v2400 = vld [vmem:[#allocation15] sm:$0x1]
    %v2402 = vsel %vm621, %v2399, 0
    %2404 = vmatpush.msra.mxu0 0.0
    %2405 = vmatpush.msra.mxu0 0.0
    %2406 = vmatpush.msra.mxu0 0.0
    %2407 = vmatpush.msra.mxu0 0.0
    %2408 = vmatpush.msra.mxu0 0.0
    %2409 = vmatpush.msra.mxu0 0.0
    %2410 = vmatpush.msra.mxu0 0.0
    %2411 = vmatpush.msra.mxu0 0.0
    %2412 = vmatpush.msra.mxu0 0.0
    %2413 = vmatpush.msra.mxu0 0.0
    %2414 = vmatpush.msra.mxu0 0.0
    %2415 = vmatpush.msra.mxu0 0.0
    %2416 = vmatpush.msra.mxu0 0.0
    %2417 = vmatpush.msra.mxu0 0.0
    %2418 = vmatpush.msra.mxu0 0.0
    %2419 = vmatpush.msra.mxu0 %v2327
    %2420 = vmatmul.f32.gmra.mxu0 %v2402
    %v2421 = vpop.f32.mrf.mxu0
    %v2422 = vadd.f32 1e-05, %v2421
    %2423 = vdwg.mxu0
    %v2424 = vrsqrt.pop %v2422
    %v2425 = vmul.f32 %v2424, %v2422
    %v2426 = vmul.f32 %v2425, %v2424
    %v2427 = vmul.f32 0.5, %v2426
    %v2428 = vsub.f32 1.5, %v2427
    %v2429 = vmul.f32 %v2424, %v2428
    %vm2430 = vweird.f32 %v2422
    %vm2431 = vweird.f32 %v2424
    %vm2432 = vmor %vm2430, %vm2431
    %v2433 = vsel %vm2432, %v2424, %v2429
    %v2434 = vmul.f32 %v2400, %v2433
    %v2436 = vperm.slane %v2434, 0
    %v2438 = vmul.f32 %v2350, %v2436
    %v2439 = vmul.f32 %v2351, %v2436
    %v2440 = vmul.f32 %v2352, %v2436
    %v2441 = vmul.f32 %v2353, %v2436
    %v2442 = vmul.f32 %v2354, %v2436
    %v2443 = vmul.f32 %v2355, %v2436
    %v2444 = vmul.f32 %v2356, %v2436
    %v2445 = vmul.f32 %v2357, %v2436
    %v2446 = vld [vmem:[#allocation16] sm:$0x1]
    %v2448 = vperm.slane %v2446, 0
    %v2450 = vadd.f32 %v2438, %v2448
    %v2451 = vadd.f32 %v2439, %v2448
    %v2452 = vadd.f32 %v2440, %v2448
    %v2453 = vadd.f32 %v2441, %v2448
    %v2454 = vadd.f32 %v2442, %v2448
    %v2455 = vadd.f32 %v2443, %v2448
    %v2456 = vadd.f32 %v2444, %v2448
    %v2457 = vadd.f32 %v2445, %v2448
    %v2458 = vmax.f32 %v2450, 0.0
    %v2459 = vmax.f32 %v2451, 0.0
    %v2460 = vmax.f32 %v2452, 0.0
    %v2461 = vmax.f32 %v2453, 0.0
    %v2462 = vmax.f32 %v2454, 0.0
    %v2463 = vmax.f32 %v2455, 0.0
    %v2464 = vmax.f32 %v2456, 0.0
    %v2465 = vmax.f32 %v2457, 0.0
    %v2466 = vld [vmem:[%s53] sm:$0xff]
    %v2467 = vld [vmem:[%s53 + $0x8] sm:$0xff]
    %v2468 = vld [vmem:[%s53 + $0x10] sm:$0xff]
    %v2469 = vld [vmem:[%s53 + $0x18] sm:$0xff]
    %v2470 = vld [vmem:[%s53 + $0x20] sm:$0xff]
    %v2471 = vld [vmem:[%s53 + $0x28] sm:$0xff]
    %v2472 = vld [vmem:[%s53 + $0x30] sm:$0xff]
    %v2473 = vld [vmem:[%s53 + $0x38] sm:$0xff]
    %v2475 = vsel %vm296, %v2466, 0
    %v2478 = vsel %vm296, %v2467, 0
    %v2481 = vsel %vm296, %v2468, 0
    %v2484 = vsel %vm296, %v2469, 0
    %v2487 = vsel %vm296, %v2470, 0
    %v2490 = vsel %vm296, %v2471, 0
    %v2493 = vsel %vm296, %v2472, 0
    %v2496 = vsel %vm296, %v2473, 0
    %2498 = vmatpush.msra.mxu0 0.0
    %2499 = vmatpush.msra.mxu0 0.0
    %2500 = vmatpush.msra.mxu0 0.0
    %2501 = vmatpush.msra.mxu0 0.0
    %2502 = vmatpush.msra.mxu0 0.0
    %2503 = vmatpush.msra.mxu0 0.0
    %2504 = vmatpush.msra.mxu0 0.0
    %2505 = vmatpush.msra.mxu0 0.0
    %2506 = vmatpush.msra.mxu0 0.0
    %2507 = vmatpush.msra.mxu0 0.0
    %2508 = vmatpush.msra.mxu0 0.0
    %2509 = vmatpush.msra.mxu0 0.0
    %2510 = vmatpush.msra.mxu0 %v2461
    %2511 = vmatpush.msra.mxu0 %v2460
    %2512 = vmatpush.msra.mxu0 %v2459
    %2513 = vmatpush.msra.mxu0 %v2458
    %2514 = vmatmul.f32.gmra.mxu0 %v2475
    %v2515 = vpop.f32.mrf.mxu0
    %v2516 = vadd.f32 0.0, %v2515
    %2517 = vmatmul.f32.gmra.mxu0 %v2478
    %v2518 = vpop.f32.mrf.mxu0
    %v2519 = vadd.f32 0.0, %v2518
    %2520 = vmatmul.f32.gmra.mxu0 %v2481
    %v2521 = vpop.f32.mrf.mxu0
    %v2522 = vadd.f32 0.0, %v2521
    %2523 = vmatmul.f32.gmra.mxu0 %v2484
    %v2524 = vpop.f32.mrf.mxu0
    %v2525 = vadd.f32 0.0, %v2524
    %2526 = vmatmul.f32.gmra.mxu0 %v2487
    %v2527 = vpop.f32.mrf.mxu0
    %v2528 = vadd.f32 0.0, %v2527
    %2529 = vmatmul.f32.gmra.mxu0 %v2490
    %v2530 = vpop.f32.mrf.mxu0
    %v2531 = vadd.f32 0.0, %v2530
    %2532 = vmatmul.f32.gmra.mxu0 %v2493
    %v2533 = vpop.f32.mrf.mxu0
    %v2534 = vadd.f32 0.0, %v2533
    %2535 = vmatmul.f32.gmra.mxu0 %v2496
    %v2536 = vpop.f32.mrf.mxu0
    %v2537 = vadd.f32 0.0, %v2536
    %2538 = vdwg.mxu0
    %2539 = vst [vmem:[#allocation3] sm:$0xff] %v2516
    %2540 = vst [vmem:[#allocation3 + $0x8] sm:$0xff] %v2519
    %2541 = vst [vmem:[#allocation3 + $0x10] sm:$0xff] %v2522
    %2542 = vst [vmem:[#allocation3 + $0x18] sm:$0xff] %v2525
    %2543 = vst [vmem:[#allocation3 + $0x20] sm:$0xff] %v2528
    %2544 = vst [vmem:[#allocation3 + $0x28] sm:$0xff] %v2531
    %2545 = vst [vmem:[#allocation3 + $0x30] sm:$0xff] %v2534
    %2546 = vst [vmem:[#allocation3 + $0x38] sm:$0xff] %v2537
    %2547 = vmatpush.msra.mxu0 0.0
    %2548 = vmatpush.msra.mxu0 0.0
    %2549 = vmatpush.msra.mxu0 0.0
    %2550 = vmatpush.msra.mxu0 0.0
    %2551 = vmatpush.msra.mxu0 0.0
    %2552 = vmatpush.msra.mxu0 0.0
    %2553 = vmatpush.msra.mxu0 0.0
    %2554 = vmatpush.msra.mxu0 0.0
    %2555 = vmatpush.msra.mxu0 0.0
    %2556 = vmatpush.msra.mxu0 0.0
    %2557 = vmatpush.msra.mxu0 0.0
    %2558 = vmatpush.msra.mxu0 0.0
    %2559 = vmatpush.msra.mxu0 %v2465
    %2560 = vmatpush.msra.mxu0 %v2464
    %2561 = vmatpush.msra.mxu0 %v2463
    %2562 = vmatpush.msra.mxu0 %v2462
    %2563 = vmatmul.f32.gmra.mxu0 %v2475
    %v2564 = vpop.f32.mrf.mxu0
    %v2565 = vadd.f32 0.0, %v2564
    %2566 = vmatmul.f32.gmra.mxu0 %v2478
    %v2567 = vpop.f32.mrf.mxu0
    %v2568 = vadd.f32 0.0, %v2567
    %2569 = vmatmul.f32.gmra.mxu0 %v2481
    %v2570 = vpop.f32.mrf.mxu0
    %v2571 = vadd.f32 0.0, %v2570
    %2572 = vmatmul.f32.gmra.mxu0 %v2484
    %v2573 = vpop.f32.mrf.mxu0
    %v2574 = vadd.f32 0.0, %v2573
    %2575 = vmatmul.f32.gmra.mxu0 %v2487
    %v2576 = vpop.f32.mrf.mxu0
    %v2577 = vadd.f32 0.0, %v2576
    %2578 = vmatmul.f32.gmra.mxu0 %v2490
    %v2579 = vpop.f32.mrf.mxu0
    %v2580 = vadd.f32 0.0, %v2579
    %2581 = vmatmul.f32.gmra.mxu0 %v2493
    %v2582 = vpop.f32.mrf.mxu0
    %v2583 = vadd.f32 0.0, %v2582
    %2584 = vmatmul.f32.gmra.mxu0 %v2496
    %v2585 = vpop.f32.mrf.mxu0
    %v2586 = vadd.f32 0.0, %v2585
    %2587 = vdwg.mxu0
    %2588 = vst [vmem:[#allocation3 + $0x40] sm:$0xff] %v2565
    %2589 = vst [vmem:[#allocation3 + $0x48] sm:$0xff] %v2568
    %2590 = vst [vmem:[#allocation3 + $0x50] sm:$0xff] %v2571
    %2591 = vst [vmem:[#allocation3 + $0x58] sm:$0xff] %v2574
    %2592 = vst [vmem:[#allocation3 + $0x60] sm:$0xff] %v2577
    %2593 = vst [vmem:[#allocation3 + $0x68] sm:$0xff] %v2580
    %2594 = vst [vmem:[#allocation3 + $0x70] sm:$0xff] %v2583
    %2595 = vst [vmem:[#allocation3 + $0x78] sm:$0xff] %v2586
    %v2596 = vld [vmem:[#allocation3] sm:$0xff]
    %v2597 = vld [vmem:[#allocation3 + $0x8] sm:$0xff]
    %v2598 = vld [vmem:[#allocation3 + $0x10] sm:$0xff]
    %v2599 = vld [vmem:[#allocation3 + $0x18] sm:$0xff]
    %v2600 = vld [vmem:[#allocation3 + $0x20] sm:$0xff]
    %v2601 = vld [vmem:[#allocation3 + $0x28] sm:$0xff]
    %v2602 = vld [vmem:[#allocation3 + $0x30] sm:$0xff]
    %v2603 = vld [vmem:[#allocation3 + $0x38] sm:$0xff]
    %v2604 = vld [vmem:[#allocation3 + $0x40] sm:$0xff]
    %v2605 = vld [vmem:[#allocation3 + $0x48] sm:$0xff]
    %v2606 = vld [vmem:[#allocation3 + $0x50] sm:$0xff]
    %v2607 = vld [vmem:[#allocation3 + $0x58] sm:$0xff]
    %v2608 = vld [vmem:[#allocation3 + $0x60] sm:$0xff]
    %v2609 = vld [vmem:[#allocation3 + $0x68] sm:$0xff]
    %v2610 = vld [vmem:[#allocation3 + $0x70] sm:$0xff]
    %v2611 = vld [vmem:[#allocation3 + $0x78] sm:$0xff]
    %v2612 = vadd.s32 %v677, 64
    %v2613 = vadd.s32 %v677, 72
    %v2614 = vadd.s32 %v677, 80
    %v2615 = vadd.s32 %v677, 88
    %v2616 = vadd.s32 %v677, 96
    %v2617 = vadd.s32 %v677, 104
    %v2618 = vadd.s32 %v677, 112
    %v2619 = vadd.s32 %v677, 120
    %vm2620 = vcmp.lt.s32.totalorder %v677, 0
    %v2621 = vsub.s32 0, %v677
    %v2622 = vsel %vm2620, %v2621, %v677
    %v2623 = vshrl.u32 %v2622, 6
    %v2624 = vand.u32 %v2622, 63
    %v2625 = vsub.s32 0, %v2624
    %v2626 = vsel %vm2620, %v2625, %v2624
    %vm2627 = vcmp.lt.s32.totalorder %v678, 0
    %v2628 = vsub.s32 0, %v678
    %v2629 = vsel %vm2627, %v2628, %v678
    %v2630 = vshrl.u32 %v2629, 6
    %v2631 = vand.u32 %v2629, 63
    %v2632 = vsub.s32 0, %v2631
    %v2633 = vsel %vm2627, %v2632, %v2631
    %vm2634 = vcmp.lt.s32.totalorder %v1179, 0
    %v2635 = vsub.s32 0, %v1179
    %v2636 = vsel %vm2634, %v2635, %v1179
    %v2637 = vshrl.u32 %v2636, 6
    %v2638 = vand.u32 %v2636, 63
    %v2639 = vsub.s32 0, %v2638
    %v2640 = vsel %vm2634, %v2639, %v2638
    %vm2641 = vcmp.lt.s32.totalorder %v1180, 0
    %v2642 = vsub.s32 0, %v1180
    %v2643 = vsel %vm2641, %v2642, %v1180
    %v2644 = vshrl.u32 %v2643, 6
    %v2645 = vand.u32 %v2643, 63
    %v2646 = vsub.s32 0, %v2645
    %v2647 = vsel %vm2641, %v2646, %v2645
    %vm2648 = vcmp.lt.s32.totalorder %v1785, 0
    %v2649 = vsub.s32 0, %v1785
    %v2650 = vsel %vm2648, %v2649, %v1785
    %v2651 = vshrl.u32 %v2650, 6
    %v2652 = vand.u32 %v2650, 63
    %v2653 = vsub.s32 0, %v2652
    %v2654 = vsel %vm2648, %v2653, %v2652
    %vm2655 = vcmp.lt.s32.totalorder %v1786, 0
    %v2656 = vsub.s32 0, %v1786
    %v2657 = vsel %vm2655, %v2656, %v1786
    %v2658 = vshrl.u32 %v2657, 6
    %v2659 = vand.u32 %v2657, 63
    %v2660 = vsub.s32 0, %v2659
    %v2661 = vsel %vm2655, %v2660, %v2659
    %vm2662 = vcmp.lt.s32.totalorder %v1787, 0
    %v2663 = vsub.s32 0, %v1787
    %v2664 = vsel %vm2662, %v2663, %v1787
    %v2665 = vshrl.u32 %v2664, 6
    %v2666 = vand.u32 %v2664, 63
    %v2667 = vsub.s32 0, %v2666
    %v2668 = vsel %vm2662, %v2667, %v2666
    %vm2669 = vcmp.lt.s32.totalorder %v1788, 0
    %v2670 = vsub.s32 0, %v1788
    %v2671 = vsel %vm2669, %v2670, %v1788
    %v2672 = vshrl.u32 %v2671, 6
    %v2673 = vand.u32 %v2671, 63
    %v2674 = vsub.s32 0, %v2673
    %v2675 = vsel %vm2669, %v2674, %v2673
    %vm2676 = vcmp.lt.s32.totalorder %v2612, 0
    %v2677 = vsub.s32 0, %v2612
    %v2678 = vsel %vm2676, %v2677, %v2612
    %v2679 = vshrl.u32 %v2678, 6
    %v2680 = vand.u32 %v2678, 63
    %v2681 = vsub.s32 0, %v2680
    %v2682 = vsel %vm2676, %v2681, %v2680
    %vm2683 = vcmp.lt.s32.totalorder %v2613, 0
    %v2684 = vsub.s32 0, %v2613
    %v2685 = vsel %vm2683, %v2684, %v2613
    %v2686 = vshrl.u32 %v2685, 6
    %v2687 = vand.u32 %v2685, 63
    %v2688 = vsub.s32 0, %v2687
    %v2689 = vsel %vm2683, %v2688, %v2687
    %vm2690 = vcmp.lt.s32.totalorder %v2614, 0
    %v2691 = vsub.s32 0, %v2614
    %v2692 = vsel %vm2690, %v2691, %v2614
    %v2693 = vshrl.u32 %v2692, 6
    %v2694 = vand.u32 %v2692, 63
    %v2695 = vsub.s32 0, %v2694
    %v2696 = vsel %vm2690, %v2695, %v2694
    %vm2697 = vcmp.lt.s32.totalorder %v2615, 0
    %v2698 = vsub.s32 0, %v2615
    %v2699 = vsel %vm2697, %v2698, %v2615
    %v2700 = vshrl.u32 %v2699, 6
    %v2701 = vand.u32 %v2699, 63
    %v2702 = vsub.s32 0, %v2701
    %v2703 = vsel %vm2697, %v2702, %v2701
    %vm2704 = vcmp.lt.s32.totalorder %v2616, 0
    %v2705 = vsub.s32 0, %v2616
    %v2706 = vsel %vm2704, %v2705, %v2616
    %v2707 = vshrl.u32 %v2706, 6
    %v2708 = vand.u32 %v2706, 63
    %v2709 = vsub.s32 0, %v2708
    %v2710 = vsel %vm2704, %v2709, %v2708
    %vm2711 = vcmp.lt.s32.totalorder %v2617, 0
    %v2712 = vsub.s32 0, %v2617
    %v2713 = vsel %vm2711, %v2712, %v2617
    %v2714 = vshrl.u32 %v2713, 6
    %v2715 = vand.u32 %v2713, 63
    %v2716 = vsub.s32 0, %v2715
    %v2717 = vsel %vm2711, %v2716, %v2715
    %vm2718 = vcmp.lt.s32.totalorder %v2618, 0
    %v2719 = vsub.s32 0, %v2618
    %v2720 = vsel %vm2718, %v2719, %v2618
    %v2721 = vshrl.u32 %v2720, 6
    %v2722 = vand.u32 %v2720, 63
    %v2723 = vsub.s32 0, %v2722
    %v2724 = vsel %vm2718, %v2723, %v2722
    %vm2725 = vcmp.lt.s32.totalorder %v2619, 0
    %v2726 = vsub.s32 0, %v2619
    %v2727 = vsel %vm2725, %v2726, %v2619
    %v2728 = vshrl.u32 %v2727, 6
    %v2729 = vand.u32 %v2727, 63
    %v2730 = vsub.s32 0, %v2729
    %v2731 = vsel %vm2725, %v2730, %v2729
    %vm2732 = vcmp.ne.s32.totalorder %v2626, 0
    %vm2733 = vcmp.ne.s32.totalorder %v2633, 0
    %vm2734 = vcmp.ne.s32.totalorder %v2640, 0
    %vm2735 = vcmp.ne.s32.totalorder %v2647, 0
    %vm2736 = vcmp.ne.s32.totalorder %v2654, 0
    %vm2737 = vcmp.ne.s32.totalorder %v2661, 0
    %vm2738 = vcmp.ne.s32.totalorder %v2668, 0
    %vm2739 = vcmp.ne.s32.totalorder %v2675, 0
    %vm2740 = vcmp.ne.s32.totalorder %v2682, 0
    %vm2741 = vcmp.ne.s32.totalorder %v2689, 0
    %vm2742 = vcmp.ne.s32.totalorder %v2696, 0
    %vm2743 = vcmp.ne.s32.totalorder %v2703, 0
    %vm2744 = vcmp.ne.s32.totalorder %v2710, 0
    %vm2745 = vcmp.ne.s32.totalorder %v2717, 0
    %vm2746 = vcmp.ne.s32.totalorder %v2724, 0
    %vm2747 = vcmp.ne.s32.totalorder %v2731, 0
    %vm2748 = vcmp.lt.s32.totalorder %v2626, 0
    %vm2749 = vcmp.lt.s32.totalorder %v2633, 0
    %vm2750 = vcmp.lt.s32.totalorder %v2640, 0
    %vm2751 = vcmp.lt.s32.totalorder %v2647, 0
    %vm2752 = vcmp.lt.s32.totalorder %v2654, 0
    %vm2753 = vcmp.lt.s32.totalorder %v2661, 0
    %vm2754 = vcmp.lt.s32.totalorder %v2668, 0
    %vm2755 = vcmp.lt.s32.totalorder %v2675, 0
    %vm2756 = vcmp.lt.s32.totalorder %v2682, 0
    %vm2757 = vcmp.lt.s32.totalorder %v2689, 0
    %vm2758 = vcmp.lt.s32.totalorder %v2696, 0
    %vm2759 = vcmp.lt.s32.totalorder %v2703, 0
    %vm2760 = vcmp.lt.s32.totalorder %v2710, 0
    %vm2761 = vcmp.lt.s32.totalorder %v2717, 0
    %vm2762 = vcmp.lt.s32.totalorder %v2724, 0
    %vm2763 = vcmp.lt.s32.totalorder %v2731, 0
    %vm2764 = vmand %vm2748, %vm2732
    %vm2765 = vmand %vm2749, %vm2733
    %vm2766 = vmand %vm2750, %vm2734
    %vm2767 = vmand %vm2751, %vm2735
    %vm2768 = vmand %vm2752, %vm2736
    %vm2769 = vmand %vm2753, %vm2737
    %vm2770 = vmand %vm2754, %vm2738
    %vm2771 = vmand %vm2755, %vm2739
    %vm2772 = vmand %vm2756, %vm2740
    %vm2773 = vmand %vm2757, %vm2741
    %vm2774 = vmand %vm2758, %vm2742
    %vm2775 = vmand %vm2759, %vm2743
    %vm2776 = vmand %vm2760, %vm2744
    %vm2777 = vmand %vm2761, %vm2745
    %vm2778 = vmand %vm2762, %vm2746
    %vm2779 = vmand %vm2763, %vm2747
    %v2780 = vadd.s32 %v2626, 64
    %v2781 = vadd.s32 %v2633, 64
    %v2782 = vadd.s32 %v2640, 64
    %v2783 = vadd.s32 %v2647, 64
    %v2784 = vadd.s32 %v2654, 64
    %v2785 = vadd.s32 %v2661, 64
    %v2786 = vadd.s32 %v2668, 64
    %v2787 = vadd.s32 %v2675, 64
    %v2788 = vadd.s32 %v2682, 64
    %v2789 = vadd.s32 %v2689, 64
    %v2790 = vadd.s32 %v2696, 64
    %v2791 = vadd.s32 %v2703, 64
    %v2792 = vadd.s32 %v2710, 64
    %v2793 = vadd.s32 %v2717, 64
    %v2794 = vadd.s32 %v2724, 64
    %v2795 = vadd.s32 %v2731, 64
    %v2796 = vsel %vm2764, %v2780, %v2626
    %v2797 = vsel %vm2765, %v2781, %v2633
    %v2798 = vsel %vm2766, %v2782, %v2640
    %v2799 = vsel %vm2767, %v2783, %v2647
    %v2800 = vsel %vm2768, %v2784, %v2654
    %v2801 = vsel %vm2769, %v2785, %v2661
    %v2802 = vsel %vm2770, %v2786, %v2668
    %v2803 = vsel %vm2771, %v2787, %v2675
    %v2804 = vsel %vm2772, %v2788, %v2682
    %v2805 = vsel %vm2773, %v2789, %v2689
    %v2806 = vsel %vm2774, %v2790, %v2696
    %v2807 = vsel %vm2775, %v2791, %v2703
    %v2808 = vsel %vm2776, %v2792, %v2710
    %v2809 = vsel %vm2777, %v2793, %v2717
    %v2810 = vsel %vm2778, %v2794, %v2724
    %v2811 = vsel %vm2779, %v2795, %v2731
    %v2812 = vrot.slane %v2596, 7
    %v2813 = vrot.slane %v2597, 7
    %v2814 = vrot.slane %v2598, 7
    %v2815 = vrot.slane %v2599, 7
    %v2816 = vrot.slane %v2600, 7
    %v2817 = vrot.slane %v2601, 7
    %v2818 = vrot.slane %v2602, 7
    %v2819 = vrot.slane %v2603, 7
    %v2820 = vrot.slane %v2604, 7
    %v2821 = vrot.slane %v2605, 7
    %v2822 = vrot.slane %v2606, 7
    %v2823 = vrot.slane %v2607, 7
    %v2824 = vrot.slane %v2608, 7
    %v2825 = vrot.slane %v2609, 7
    %v2826 = vrot.slane %v2610, 7
    %v2827 = vrot.slane %v2611, 7
    %v2828 = vsel %vm705, %v2826, %v2827
    %v2829 = vsel %vm705, %v2825, %v2826
    %v2830 = vsel %vm705, %v2824, %v2825
    %v2831 = vsel %vm705, %v2823, %v2824
    %v2832 = vsel %vm705, %v2822, %v2823
    %v2833 = vsel %vm705, %v2821, %v2822
    %v2834 = vsel %vm705, %v2820, %v2821
    %v2835 = vsel %vm705, %v2819, %v2820
    %v2836 = vsel %vm705, %v2818, %v2819
    %v2837 = vsel %vm705, %v2817, %v2818
    %v2838 = vsel %vm705, %v2816, %v2817
    %v2839 = vsel %vm705, %v2815, %v2816
    %v2840 = vsel %vm705, %v2814, %v2815
    %v2841 = vsel %vm705, %v2813, %v2814
    %v2842 = vsel %vm705, %v2812, %v2813
    %v2843 = vsel %vm705, %v2827, %v2812
    %vm2844 = vcmp.ne.s32.totalorder %v2796, 0
    %vm2845 = vcmp.ne.s32.totalorder %v2797, 0
    %vm2846 = vcmp.ne.s32.totalorder %v2798, 0
    %vm2847 = vcmp.ne.s32.totalorder %v2799, 0
    %vm2848 = vcmp.ne.s32.totalorder %v2800, 0
    %vm2849 = vcmp.ne.s32.totalorder %v2801, 0
    %vm2850 = vcmp.ne.s32.totalorder %v2802, 0
    %vm2851 = vcmp.ne.s32.totalorder %v2803, 0
    %vm2852 = vcmp.ne.s32.totalorder %v2804, 0
    %vm2853 = vcmp.ne.s32.totalorder %v2805, 0
    %vm2854 = vcmp.ne.s32.totalorder %v2806, 0
    %vm2855 = vcmp.ne.s32.totalorder %v2807, 0
    %vm2856 = vcmp.ne.s32.totalorder %v2808, 0
    %vm2857 = vcmp.ne.s32.totalorder %v2809, 0
    %vm2858 = vcmp.ne.s32.totalorder %v2810, 0
    %vm2859 = vcmp.ne.s32.totalorder %v2811, 0
    %v2860 = vsel %vm2844, 1, 0
    %v2861 = vsel %vm2845, 1, 0
    %v2862 = vsel %vm2846, 1, 0
    %v2863 = vsel %vm2847, 1, 0
    %v2864 = vsel %vm2848, 1, 0
    %v2865 = vsel %vm2849, 1, 0
    %v2866 = vsel %vm2850, 1, 0
    %v2867 = vsel %vm2851, 1, 0
    %v2868 = vsel %vm2852, 1, 0
    %v2869 = vsel %vm2853, 1, 0
    %v2870 = vsel %vm2854, 1, 0
    %v2871 = vsel %vm2855, 1, 0
    %v2872 = vsel %vm2856, 1, 0
    %v2873 = vsel %vm2857, 1, 0
    %v2874 = vsel %vm2858, 1, 0
    %v2875 = vsel %vm2859, 1, 0
    %v2876 = vcvt.s32.f32 %v2860
    %v2877 = vcvt.s32.f32 %v2861
    %v2878 = vcvt.s32.f32 %v2862
    %v2879 = vcvt.s32.f32 %v2863
    %v2880 = vcvt.s32.f32 %v2864
    %v2881 = vcvt.s32.f32 %v2865
    %v2882 = vcvt.s32.f32 %v2866
    %v2883 = vcvt.s32.f32 %v2867
    %v2884 = vcvt.s32.f32 %v2868
    %v2885 = vcvt.s32.f32 %v2869
    %v2886 = vcvt.s32.f32 %v2870
    %v2887 = vcvt.s32.f32 %v2871
    %v2888 = vcvt.s32.f32 %v2872
    %v2889 = vcvt.s32.f32 %v2873
    %v2890 = vcvt.s32.f32 %v2874
    %v2891 = vcvt.s32.f32 %v2875
    %v2892 = vmul.f32 %v2843, %v2876
    %v2893 = vmul.f32 %v2842, %v2877
    %v2894 = vmul.f32 %v2841, %v2878
    %v2895 = vmul.f32 %v2840, %v2879
    %v2896 = vmul.f32 %v2839, %v2880
    %v2897 = vmul.f32 %v2838, %v2881
    %v2898 = vmul.f32 %v2837, %v2882
    %v2899 = vmul.f32 %v2836, %v2883
    %v2900 = vmul.f32 %v2835, %v2884
    %v2901 = vmul.f32 %v2834, %v2885
    %v2902 = vmul.f32 %v2833, %v2886
    %v2903 = vmul.f32 %v2832, %v2887
    %v2904 = vmul.f32 %v2831, %v2888
    %v2905 = vmul.f32 %v2830, %v2889
    %v2906 = vmul.f32 %v2829, %v2890
    %v2907 = vmul.f32 %v2828, %v2891
    %v2908 = vrot.slane %v2596, 1
    %v2909 = vrot.slane %v2597, 1
    %v2910 = vrot.slane %v2598, 1
    %v2911 = vrot.slane %v2599, 1
    %v2912 = vrot.slane %v2600, 1
    %v2913 = vrot.slane %v2601, 1
    %v2914 = vrot.slane %v2602, 1
    %v2915 = vrot.slane %v2603, 1
    %v2916 = vrot.slane %v2604, 1
    %v2917 = vrot.slane %v2605, 1
    %v2918 = vrot.slane %v2606, 1
    %v2919 = vrot.slane %v2607, 1
    %v2920 = vrot.slane %v2608, 1
    %v2921 = vrot.slane %v2609, 1
    %v2922 = vrot.slane %v2610, 1
    %v2923 = vrot.slane %v2611, 1
    %v2924 = vsel %vm718, %v2922, %v2923
    %v2925 = vsel %vm718, %v2921, %v2922
    %v2926 = vsel %vm718, %v2920, %v2921
    %v2927 = vsel %vm718, %v2919, %v2920
    %v2928 = vsel %vm718, %v2918, %v2919
    %v2929 = vsel %vm718, %v2917, %v2918
    %v2930 = vsel %vm718, %v2916, %v2917
    %v2931 = vsel %vm718, %v2915, %v2916
    %v2932 = vsel %vm718, %v2914, %v2915
    %v2933 = vsel %vm718, %v2913, %v2914
    %v2934 = vsel %vm718, %v2912, %v2913
    %v2935 = vsel %vm718, %v2911, %v2912
    %v2936 = vsel %vm718, %v2910, %v2911
    %v2937 = vsel %vm718, %v2909, %v2910
    %v2938 = vsel %vm718, %v2908, %v2909
    %v2939 = vsel %vm718, %v2923, %v2908
    %vm2940 = vcmp.ne.s32.totalorder %v2796, 63
    %vm2941 = vcmp.ne.s32.totalorder %v2797, 63
    %vm2942 = vcmp.ne.s32.totalorder %v2798, 63
    %vm2943 = vcmp.ne.s32.totalorder %v2799, 63
    %vm2944 = vcmp.ne.s32.totalorder %v2800, 63
    %vm2945 = vcmp.ne.s32.totalorder %v2801, 63
    %vm2946 = vcmp.ne.s32.totalorder %v2802, 63
    %vm2947 = vcmp.ne.s32.totalorder %v2803, 63
    %vm2948 = vcmp.ne.s32.totalorder %v2804, 63
    %vm2949 = vcmp.ne.s32.totalorder %v2805, 63
    %vm2950 = vcmp.ne.s32.totalorder %v2806, 63
    %vm2951 = vcmp.ne.s32.totalorder %v2807, 63
    %vm2952 = vcmp.ne.s32.totalorder %v2808, 63
    %vm2953 = vcmp.ne.s32.totalorder %v2809, 63
    %vm2954 = vcmp.ne.s32.totalorder %v2810, 63
    %vm2955 = vcmp.ne.s32.totalorder %v2811, 63
    %v2956 = vsel %vm2940, 1, 0
    %v2957 = vsel %vm2941, 1, 0
    %v2958 = vsel %vm2942, 1, 0
    %v2959 = vsel %vm2943, 1, 0
    %v2960 = vsel %vm2944, 1, 0
    %v2961 = vsel %vm2945, 1, 0
    %v2962 = vsel %vm2946, 1, 0
    %v2963 = vsel %vm2947, 1, 0
    %v2964 = vsel %vm2948, 1, 0
    %v2965 = vsel %vm2949, 1, 0
    %v2966 = vsel %vm2950, 1, 0
    %v2967 = vsel %vm2951, 1, 0
    %v2968 = vsel %vm2952, 1, 0
    %v2969 = vsel %vm2953, 1, 0
    %v2970 = vsel %vm2954, 1, 0
    %v2971 = vsel %vm2955, 1, 0
    %v2972 = vcvt.s32.f32 %v2956
    %v2973 = vcvt.s32.f32 %v2957
    %v2974 = vcvt.s32.f32 %v2958
    %v2975 = vcvt.s32.f32 %v2959
    %v2976 = vcvt.s32.f32 %v2960
    %v2977 = vcvt.s32.f32 %v2961
    %v2978 = vcvt.s32.f32 %v2962
    %v2979 = vcvt.s32.f32 %v2963
    %v2980 = vcvt.s32.f32 %v2964
    %v2981 = vcvt.s32.f32 %v2965
    %v2982 = vcvt.s32.f32 %v2966
    %v2983 = vcvt.s32.f32 %v2967
    %v2984 = vcvt.s32.f32 %v2968
    %v2985 = vcvt.s32.f32 %v2969
    %v2986 = vcvt.s32.f32 %v2970
    %v2987 = vcvt.s32.f32 %v2971
    %v2988 = vmul.f32 %v2938, %v2972
    %v2989 = vmul.f32 %v2937, %v2973
    %v2990 = vmul.f32 %v2936, %v2974
    %v2991 = vmul.f32 %v2935, %v2975
    %v2992 = vmul.f32 %v2934, %v2976
    %v2993 = vmul.f32 %v2933, %v2977
    %v2994 = vmul.f32 %v2932, %v2978
    %v2995 = vmul.f32 %v2931, %v2979
    %v2996 = vmul.f32 %v2930, %v2980
    %v2997 = vmul.f32 %v2929, %v2981
    %v2998 = vmul.f32 %v2928, %v2982
    %v2999 = vmul.f32 %v2927, %v2983
    %v3000 = vmul.f32 %v2926, %v2984
    %v3001 = vmul.f32 %v2925, %v2985
    %v3002 = vmul.f32 %v2924, %v2986
    %v3003 = vmul.f32 %v2939, %v2987
    %v3004 = vpack.c.bf16 %v2893, %v2892
    %v3005 = vpack.c.bf16 %v2597, %v2596
    %v3006 = vpack.c.bf16 %v2989, %v2988
    %v3007 = vpack.c.bf16 %v2895, %v2894
    %v3008 = vpack.c.bf16 %v2599, %v2598
    %v3009 = vpack.c.bf16 %v2991, %v2990
    %v3010 = vpack.c.bf16 %v2897, %v2896
    %v3011 = vpack.c.bf16 %v2601, %v2600
    %v3012 = vpack.c.bf16 %v2993, %v2992
    %v3013 = vpack.c.bf16 %v2899, %v2898
    %v3014 = vpack.c.bf16 %v2603, %v2602
    %v3015 = vpack.c.bf16 %v2995, %v2994
    %v3016 = vpack.c.bf16 %v2901, %v2900
    %v3017 = vpack.c.bf16 %v2605, %v2604
    %v3018 = vpack.c.bf16 %v2997, %v2996
    %v3019 = vpack.c.bf16 %v2903, %v2902
    %v3020 = vpack.c.bf16 %v2607, %v2606
    %v3021 = vpack.c.bf16 %v2999, %v2998
    %v3022 = vpack.c.bf16 %v2905, %v2904
    %v3023 = vpack.c.bf16 %v2609, %v2608
    %v3024 = vpack.c.bf16 %v3001, %v3000
    %v3025 = vpack.c.bf16 %v2907, %v2906
    %v3026 = vpack.c.bf16 %v2611, %v2610
    %v3027 = vpack.c.bf16 %v3003, %v3002
    %v3028 = vld [vmem:[#allocation18] sm:$0xf]
    %v3029 = vld [vmem:[#allocation18 + $0x4] sm:$0xf]
    %v3030 = vld [vmem:[#allocation18 + $0x8] sm:$0xf]
    %v3031 = vld [vmem:[#allocation18 + $0xc] sm:$0xf]
    %v3032 = vld [vmem:[#allocation18 + $0x10] sm:$0xf]
    %v3033 = vld [vmem:[#allocation18 + $0x14] sm:$0xf]
    %v3034 = vld [vmem:[#allocation18 + $0x18] sm:$0xf]
    %v3035 = vld [vmem:[#allocation18 + $0x1c] sm:$0xf]
    %v3036 = vld [vmem:[#allocation18 + $0x20] sm:$0xf]
    %v3037 = vld [vmem:[#allocation18 + $0x24] sm:$0xf]
    %v3038 = vld [vmem:[#allocation18 + $0x28] sm:$0xf]
    %v3039 = vld [vmem:[#allocation18 + $0x2c] sm:$0xf]
    %v3040 = vld [vmem:[#allocation18 + $0x30] sm:$0xf]
    %v3041 = vld [vmem:[#allocation18 + $0x34] sm:$0xf]
    %v3042 = vld [vmem:[#allocation18 + $0x38] sm:$0xf]
    %v3043 = vld [vmem:[#allocation18 + $0x3c] sm:$0xf]
    %v3044 = vld [vmem:[#allocation18 + $0x40] sm:$0xf]
    %v3045 = vld [vmem:[#allocation18 + $0x44] sm:$0xf]
    %v3046 = vld [vmem:[#allocation18 + $0x48] sm:$0xf]
    %v3047 = vld [vmem:[#allocation18 + $0x4c] sm:$0xf]
    %v3048 = vld [vmem:[#allocation18 + $0x50] sm:$0xf]
    %v3049 = vld [vmem:[#allocation18 + $0x54] sm:$0xf]
    %v3050 = vld [vmem:[#allocation18 + $0x58] sm:$0xf]
    %v3051 = vld [vmem:[#allocation18 + $0x5c] sm:$0xf]
    %v3052 = vld [vmem:[#allocation18 + $0x60] sm:$0xf]
    %v3053 = vld [vmem:[#allocation18 + $0x64] sm:$0xf]
    %v3054 = vld [vmem:[#allocation18 + $0x68] sm:$0xf]
    %v3055 = vld [vmem:[#allocation18 + $0x6c] sm:$0xf]
    %v3056 = vld [vmem:[#allocation18 + $0x70] sm:$0xf]
    %v3057 = vld [vmem:[#allocation18 + $0x74] sm:$0xf]
    %v3058 = vld [vmem:[#allocation18 + $0x78] sm:$0xf]
    %v3059 = vld [vmem:[#allocation18 + $0x7c] sm:$0xf]
    %v3060 = vld [vmem:[#allocation18 + $0x80] sm:$0xf]
    %v3061 = vld [vmem:[#allocation18 + $0x84] sm:$0xf]
    %v3062 = vld [vmem:[#allocation18 + $0x88] sm:$0xf]
    %v3063 = vld [vmem:[#allocation18 + $0x8c] sm:$0xf]
    %v3064 = vld [vmem:[#allocation18 + $0x90] sm:$0xf]
    %v3065 = vld [vmem:[#allocation18 + $0x94] sm:$0xf]
    %v3066 = vld [vmem:[#allocation18 + $0x98] sm:$0xf]
    %v3067 = vld [vmem:[#allocation18 + $0x9c] sm:$0xf]
    %v3068 = vld [vmem:[#allocation18 + $0xa0] sm:$0xf]
    %v3069 = vld [vmem:[#allocation18 + $0xa4] sm:$0xf]
    %v3070 = vld [vmem:[#allocation18 + $0xa8] sm:$0xf]
    %v3071 = vld [vmem:[#allocation18 + $0xac] sm:$0xf]
    %v3072 = vld [vmem:[#allocation18 + $0xb0] sm:$0xf]
    %v3073 = vld [vmem:[#allocation18 + $0xb4] sm:$0xf]
    %v3074 = vld [vmem:[#allocation18 + $0xb8] sm:$0xf]
    %v3075 = vld [vmem:[#allocation18 + $0xbc] sm:$0xf]
    %v3124 = vunpack.c.l.b16 %v3028
    %v3125 = vunpack.c.l.b16 %v3029
    %v3126 = vunpack.c.l.b16 %v3030
    %v3127 = vunpack.c.l.b16 %v3031
    %v3128 = vunpack.c.l.b16 %v3032
    %v3129 = vunpack.c.l.b16 %v3033
    %v3130 = vunpack.c.l.b16 %v3034
    %v3131 = vunpack.c.l.b16 %v3035
    %v3132 = vunpack.c.l.b16 %v3036
    %v3133 = vunpack.c.l.b16 %v3037
    %v3134 = vunpack.c.l.b16 %v3038
    %v3135 = vunpack.c.l.b16 %v3039
    %v3136 = vunpack.c.l.b16 %v3040
    %v3137 = vunpack.c.l.b16 %v3041
    %v3138 = vunpack.c.l.b16 %v3042
    %v3139 = vunpack.c.l.b16 %v3043
    %v3140 = vunpack.c.l.b16 %v3044
    %v3141 = vunpack.c.l.b16 %v3045
    %v3142 = vunpack.c.l.b16 %v3046
    %v3143 = vunpack.c.l.b16 %v3047
    %v3144 = vunpack.c.l.b16 %v3048
    %v3145 = vunpack.c.l.b16 %v3049
    %v3146 = vunpack.c.l.b16 %v3050
    %v3147 = vunpack.c.l.b16 %v3051
    %v3148 = vunpack.c.l.b16 %v3052
    %v3149 = vunpack.c.l.b16 %v3053
    %v3150 = vunpack.c.l.b16 %v3054
    %v3151 = vunpack.c.l.b16 %v3055
    %v3152 = vunpack.c.l.b16 %v3056
    %v3153 = vunpack.c.l.b16 %v3057
    %v3154 = vunpack.c.l.b16 %v3058
    %v3155 = vunpack.c.l.b16 %v3059
    %v3156 = vunpack.c.l.b16 %v3060
    %v3157 = vunpack.c.l.b16 %v3061
    %v3158 = vunpack.c.l.b16 %v3062
    %v3159 = vunpack.c.l.b16 %v3063
    %v3160 = vunpack.c.l.b16 %v3064
    %v3161 = vunpack.c.l.b16 %v3065
    %v3162 = vunpack.c.l.b16 %v3066
    %v3163 = vunpack.c.l.b16 %v3067
    %v3164 = vunpack.c.l.b16 %v3068
    %v3165 = vunpack.c.l.b16 %v3069
    %v3166 = vunpack.c.l.b16 %v3070
    %v3167 = vunpack.c.l.b16 %v3071
    %v3168 = vunpack.c.l.b16 %v3072
    %v3169 = vunpack.c.l.b16 %v3073
    %v3170 = vunpack.c.l.b16 %v3074
    %v3171 = vunpack.c.l.b16 %v3075
    %v3172 = vpack.c.b16 %v3125, %v3124
    %v3173 = vpack.c.b16 %v3127, %v3126
    %v3174 = vpack.c.b16 %v3129, %v3128
    %v3175 = vpack.c.b16 %v3131, %v3130
    %v3176 = vpack.c.b16 %v3133, %v3132
    %v3177 = vpack.c.b16 %v3135, %v3134
    %v3178 = vpack.c.b16 %v3137, %v3136
    %v3179 = vpack.c.b16 %v3139, %v3138
    %v3180 = vpack.c.b16 %v3141, %v3140
    %v3181 = vpack.c.b16 %v3143, %v3142
    %v3182 = vpack.c.b16 %v3145, %v3144
    %v3183 = vpack.c.b16 %v3147, %v3146
    %v3184 = vpack.c.b16 %v3149, %v3148
    %v3185 = vpack.c.b16 %v3151, %v3150
    %v3186 = vpack.c.b16 %v3153, %v3152
    %v3187 = vpack.c.b16 %v3155, %v3154
    %v3188 = vpack.c.b16 %v3157, %v3156
    %v3189 = vpack.c.b16 %v3159, %v3158
    %v3190 = vpack.c.b16 %v3161, %v3160
    %v3191 = vpack.c.b16 %v3163, %v3162
    %v3192 = vpack.c.b16 %v3165, %v3164
    %v3193 = vpack.c.b16 %v3167, %v3166
    %v3194 = vpack.c.b16 %v3169, %v3168
    %v3195 = vpack.c.b16 %v3171, %v3170
    %3220 = vmatpush.bf16.msra.mxu0 %v3179
    %3221 = vmatpush.bf16.msra.mxu0 %v3178
    %3222 = vmatpush.bf16.msra.mxu0 %v3177
    %3223 = vmatpush.bf16.msra.mxu0 %v3176
    %3224 = vmatpush.bf16.msra.mxu0 %v3175
    %3225 = vmatpush.bf16.msra.mxu0 %v3174
    %3226 = vmatpush.bf16.msra.mxu0 %v3173
    %3227 = vmatpush.bf16.msra.mxu0 %v3172
    %3228 = vmatmul.bf16.gmra.mxu0 %v3004
    %v3229 = vpop.f32.mrf.mxu0
    %v3230 = vadd.f32 0.0, %v3229
    %v3231 = vpop.f32.mrf.mxu0
    %v3232 = vadd.f32 0.0, %v3231
    %3233 = vmatmul.bf16.gmra.mxu0 %v3007
    %v3234 = vpop.f32.mrf.mxu0
    %v3235 = vadd.f32 0.0, %v3234
    %v3236 = vpop.f32.mrf.mxu0
    %v3237 = vadd.f32 0.0, %v3236
    %3238 = vmatmul.bf16.gmra.mxu0 %v3010
    %v3239 = vpop.f32.mrf.mxu0
    %v3240 = vadd.f32 0.0, %v3239
    %v3241 = vpop.f32.mrf.mxu0
    %v3242 = vadd.f32 0.0, %v3241
    %3243 = vmatmul.bf16.gmra.mxu0 %v3013
    %v3244 = vpop.f32.mrf.mxu0
    %v3245 = vadd.f32 0.0, %v3244
    %v3246 = vpop.f32.mrf.mxu0
    %v3247 = vadd.f32 0.0, %v3246
    %3248 = vmatmul.bf16.gmra.mxu0 %v3016
    %v3249 = vpop.f32.mrf.mxu0
    %v3250 = vadd.f32 0.0, %v3249
    %v3251 = vpop.f32.mrf.mxu0
    %v3252 = vadd.f32 0.0, %v3251
    %3253 = vmatmul.bf16.gmra.mxu0 %v3019
    %v3254 = vpop.f32.mrf.mxu0
    %v3255 = vadd.f32 0.0, %v3254
    %v3256 = vpop.f32.mrf.mxu0
    %v3257 = vadd.f32 0.0, %v3256
    %3258 = vmatmul.bf16.gmra.mxu0 %v3022
    %v3259 = vpop.f32.mrf.mxu0
    %v3260 = vadd.f32 0.0, %v3259
    %v3261 = vpop.f32.mrf.mxu0
    %v3262 = vadd.f32 0.0, %v3261
    %3263 = vmatmul.bf16.gmra.mxu0 %v3025
    %v3264 = vpop.f32.mrf.mxu0
    %v3265 = vadd.f32 0.0, %v3264
    %v3266 = vpop.f32.mrf.mxu0
    %v3267 = vadd.f32 0.0, %v3266
    %3268 = vdwg.mxu0
    %3269 = vmatpush.bf16.msra.mxu0 %v3187
    %3270 = vmatpush.bf16.msra.mxu0 %v3186
    %3271 = vmatpush.bf16.msra.mxu0 %v3185
    %3272 = vmatpush.bf16.msra.mxu0 %v3184
    %3273 = vmatpush.bf16.msra.mxu0 %v3183
    %3274 = vmatpush.bf16.msra.mxu0 %v3182
    %3275 = vmatpush.bf16.msra.mxu0 %v3181
    %3276 = vmatpush.bf16.msra.mxu0 %v3180
    %3277 = vmatmul.bf16.gmra.mxu0 %v3005
    %v3278 = vpop.f32.mrf.mxu0
    %v3279 = vadd.f32 %v3230, %v3278
    %v3280 = vpop.f32.mrf.mxu0
    %v3281 = vadd.f32 %v3232, %v3280
    %3282 = vmatmul.bf16.gmra.mxu0 %v3008
    %v3283 = vpop.f32.mrf.mxu0
    %v3284 = vadd.f32 %v3235, %v3283
    %v3285 = vpop.f32.mrf.mxu0
    %v3286 = vadd.f32 %v3237, %v3285
    %3287 = vmatmul.bf16.gmra.mxu0 %v3011
    %v3288 = vpop.f32.mrf.mxu0
    %v3289 = vadd.f32 %v3240, %v3288
    %v3290 = vpop.f32.mrf.mxu0
    %v3291 = vadd.f32 %v3242, %v3290
    %3292 = vmatmul.bf16.gmra.mxu0 %v3014
    %v3293 = vpop.f32.mrf.mxu0
    %v3294 = vadd.f32 %v3245, %v3293
    %v3295 = vpop.f32.mrf.mxu0
    %v3296 = vadd.f32 %v3247, %v3295
    %3297 = vmatmul.bf16.gmra.mxu0 %v3017
    %v3298 = vpop.f32.mrf.mxu0
    %v3299 = vadd.f32 %v3250, %v3298
    %v3300 = vpop.f32.mrf.mxu0
    %v3301 = vadd.f32 %v3252, %v3300
    %3302 = vmatmul.bf16.gmra.mxu0 %v3020
    %v3303 = vpop.f32.mrf.mxu0
    %v3304 = vadd.f32 %v3255, %v3303
    %v3305 = vpop.f32.mrf.mxu0
    %v3306 = vadd.f32 %v3257, %v3305
    %3307 = vmatmul.bf16.gmra.mxu0 %v3023
    %v3308 = vpop.f32.mrf.mxu0
    %v3309 = vadd.f32 %v3260, %v3308
    %v3310 = vpop.f32.mrf.mxu0
    %v3311 = vadd.f32 %v3262, %v3310
    %3312 = vmatmul.bf16.gmra.mxu0 %v3026
    %v3313 = vpop.f32.mrf.mxu0
    %v3314 = vadd.f32 %v3265, %v3313
    %v3315 = vpop.f32.mrf.mxu0
    %v3316 = vadd.f32 %v3267, %v3315
    %3317 = vdwg.mxu0
    %3318 = vmatpush.bf16.msra.mxu0 %v3195
    %3319 = vmatpush.bf16.msra.mxu0 %v3194
    %3320 = vmatpush.bf16.msra.mxu0 %v3193
    %3321 = vmatpush.bf16.msra.mxu0 %v3192
    %3322 = vmatpush.bf16.msra.mxu0 %v3191
    %3323 = vmatpush.bf16.msra.mxu0 %v3190
    %3324 = vmatpush.bf16.msra.mxu0 %v3189
    %3325 = vmatpush.bf16.msra.mxu0 %v3188
    %3326 = vmatmul.bf16.gmra.mxu0 %v3006
    %v3327 = vpop.f32.mrf.mxu0
    %v3328 = vadd.f32 %v3279, %v3327
    %v3329 = vpop.f32.mrf.mxu0
    %v3330 = vadd.f32 %v3281, %v3329
    %3331 = vmatmul.bf16.gmra.mxu0 %v3009
    %v3332 = vpop.f32.mrf.mxu0
    %v3333 = vadd.f32 %v3284, %v3332
    %v3334 = vpop.f32.mrf.mxu0
    %v3335 = vadd.f32 %v3286, %v3334
    %3336 = vmatmul.bf16.gmra.mxu0 %v3012
    %v3337 = vpop.f32.mrf.mxu0
    %v3338 = vadd.f32 %v3289, %v3337
    %v3339 = vpop.f32.mrf.mxu0
    %v3340 = vadd.f32 %v3291, %v3339
    %3341 = vmatmul.bf16.gmra.mxu0 %v3015
    %v3342 = vpop.f32.mrf.mxu0
    %v3343 = vadd.f32 %v3294, %v3342
    %v3344 = vpop.f32.mrf.mxu0
    %v3345 = vadd.f32 %v3296, %v3344
    %3346 = vmatmul.bf16.gmra.mxu0 %v3018
    %v3347 = vpop.f32.mrf.mxu0
    %v3348 = vadd.f32 %v3299, %v3347
    %v3349 = vpop.f32.mrf.mxu0
    %v3350 = vadd.f32 %v3301, %v3349
    %3351 = vmatmul.bf16.gmra.mxu0 %v3021
    %v3352 = vpop.f32.mrf.mxu0
    %v3353 = vadd.f32 %v3304, %v3352
    %v3354 = vpop.f32.mrf.mxu0
    %v3355 = vadd.f32 %v3306, %v3354
    %3356 = vmatmul.bf16.gmra.mxu0 %v3024
    %v3357 = vpop.f32.mrf.mxu0
    %v3358 = vadd.f32 %v3309, %v3357
    %v3359 = vpop.f32.mrf.mxu0
    %v3360 = vadd.f32 %v3311, %v3359
    %3361 = vmatmul.bf16.gmra.mxu0 %v3027
    %v3362 = vpop.f32.mrf.mxu0
    %v3363 = vadd.f32 %v3314, %v3362
    %v3364 = vpop.f32.mrf.mxu0
    %v3365 = vadd.f32 %v3316, %v3364
    %3366 = vdwg.mxu0
    %v3367 = vadd.f32 %v3328, %v3330
    %v3368 = vadd.f32 %v3367, %v3333
    %v3369 = vadd.f32 %v3368, %v3335
    %v3370 = vadd.f32 %v3369, %v3338
    %v3371 = vadd.f32 %v3370, %v3340
    %v3372 = vadd.f32 %v3371, %v3343
    %v3373 = vadd.f32 %v3372, %v3345
    %v3374 = vadd.f32 %v3373, %v3348
    %v3375 = vadd.f32 %v3374, %v3350
    %v3376 = vadd.f32 %v3375, %v3353
    %v3377 = vadd.f32 %v3376, %v3355
    %v3378 = vadd.f32 %v3377, %v3358
    %v3379 = vadd.f32 %v3378, %v3360
    %v3380 = vadd.f32 %v3379, %v3363
    %v3381 = vadd.f32 %v3380, %v3365
    %v3382 = vrot.slane %v3381, 4
    %v3383 = vadd.f32 %v3381, %v3382
    %v3384 = vrot.slane %v3383, 2
    %v3385 = vadd.f32 %v3383, %v3384
    %v3386 = vrot.slane %v3385, 1
    %v3387 = vadd.f32 %v3385, %v3386
    %v3388 = vld [vmem:[%s57] sm:$0xff]
    %v3389 = vld [vmem:[%s57 + $0x8] sm:$0xff]
    %v3390 = vld [vmem:[%s57 + $0x10] sm:$0xff]
    %v3391 = vld [vmem:[%s57 + $0x18] sm:$0xff]
    %v3392 = vld [vmem:[%s57 + $0x20] sm:$0xff]
    %v3393 = vld [vmem:[%s57 + $0x28] sm:$0xff]
    %v3394 = vld [vmem:[%s57 + $0x30] sm:$0xff]
    %v3395 = vld [vmem:[%s57 + $0x38] sm:$0xff]
    %v3396 = vld [vmem:[%s57 + $0x40] sm:$0xff]
    %v3397 = vld [vmem:[%s57 + $0x48] sm:$0xff]
    %v3398 = vld [vmem:[%s57 + $0x50] sm:$0xff]
    %v3399 = vld [vmem:[%s57 + $0x58] sm:$0xff]
    %v3400 = vld [vmem:[%s57 + $0x60] sm:$0xff]
    %v3401 = vld [vmem:[%s57 + $0x68] sm:$0xff]
    %v3402 = vld [vmem:[%s57 + $0x70] sm:$0xff]
    %v3403 = vld [vmem:[%s57 + $0x78] sm:$0xff]
    %3404 = vmatpush.msra.mxu0 %v3403
    %3405 = vmatpush.msra.mxu0 %v3402
    %3406 = vmatpush.msra.mxu0 %v3401
    %3407 = vmatpush.msra.mxu0 %v3400
    %3408 = vmatpush.msra.mxu0 %v3399
    %3409 = vmatpush.msra.mxu0 %v3398
    %3410 = vmatpush.msra.mxu0 %v3397
    %3411 = vmatpush.msra.mxu0 %v3396
    %3412 = vmatpush.msra.mxu0 %v3395
    %3413 = vmatpush.msra.mxu0 %v3394
    %3414 = vmatpush.msra.mxu0 %v3393
    %3415 = vmatpush.msra.mxu0 %v3392
    %3416 = vmatpush.msra.mxu0 %v3391
    %3417 = vmatpush.msra.mxu0 %v3390
    %3418 = vmatpush.msra.mxu0 %v3389
    %3419 = vmatpush.msra.mxu0 %v3388
    %3420 = vmatmul.f32.gmra.mxu0 %v3387
    %v3421 = vpop.f32.mrf.mxu0
    %v3422 = vadd.f32 0.0, %v3421
    %3423 = vdwg.mxu0
    %v3424 = vmul.f32 %v3422, 0.0078125
    %v3425 = vld [vmem:[%s59] sm:$0x3]
    %vm3426 = vcmask 15360
    %v3428 = vsel %vm3426, %v3424, 0
    %v3431 = vsel %vm448, %v3425, 0
    %3433 = vmatpush.msra.mxu0 0.0
    %3434 = vmatpush.msra.mxu0 0.0
    %3435 = vmatpush.msra.mxu0 0.0
    %3436 = vmatpush.msra.mxu0 0.0
    %3437 = vmatpush.msra.mxu0 0.0
    %3438 = vmatpush.msra.mxu0 0.0
    %3439 = vmatpush.msra.mxu0 0.0
    %3440 = vmatpush.msra.mxu0 0.0
    %3441 = vmatpush.msra.mxu0 0.0
    %3442 = vmatpush.msra.mxu0 0.0
    %3443 = vmatpush.msra.mxu0 0.0
    %3444 = vmatpush.msra.mxu0 0.0
    %3445 = vmatpush.msra.mxu0 0.0
    %3446 = vmatpush.msra.mxu0 0.0
    %3447 = vmatpush.msra.mxu0 0.0
    %3448 = vmatpush.msra.mxu0 %v3431
    %3449 = vmatmul.f32.gmra.mxu0 %v3428
    %v3450 = vpop.f32.mrf.mxu0
    %v3451 = vadd.f32 0.0, %v3450
    %3452 = vdwg.mxu0
    %v3453 = vperm.slane %v3451, 0
    %v3454 = vsub.f32 %v3328, %v3453
    %v3455 = vsub.f32 %v3330, %v3453
    %v3456 = vsub.f32 %v3333, %v3453
    %v3457 = vsub.f32 %v3335, %v3453
    %v3458 = vsub.f32 %v3338, %v3453
    %v3459 = vsub.f32 %v3340, %v3453
    %v3460 = vsub.f32 %v3343, %v3453
    %v3461 = vsub.f32 %v3345, %v3453
    %v3462 = vsub.f32 %v3348, %v3453
    %v3463 = vsub.f32 %v3350, %v3453
    %v3464 = vsub.f32 %v3353, %v3453
    %v3465 = vsub.f32 %v3355, %v3453
    %v3466 = vsub.f32 %v3358, %v3453
    %v3467 = vsub.f32 %v3360, %v3453
    %v3468 = vsub.f32 %v3363, %v3453
    %v3469 = vsub.f32 %v3365, %v3453
    %v3470 = vmul.f32 %v3454, %v3454
    %v3471 = vmul.f32 %v3455, %v3455
    %v3472 = vmul.f32 %v3456, %v3456
    %v3473 = vmul.f32 %v3457, %v3457
    %v3474 = vmul.f32 %v3458, %v3458
    %v3475 = vmul.f32 %v3459, %v3459
    %v3476 = vmul.f32 %v3460, %v3460
    %v3477 = vmul.f32 %v3461, %v3461
    %v3478 = vmul.f32 %v3462, %v3462
    %v3479 = vmul.f32 %v3463, %v3463
    %v3480 = vmul.f32 %v3464, %v3464
    %v3481 = vmul.f32 %v3465, %v3465
    %v3482 = vmul.f32 %v3466, %v3466
    %v3483 = vmul.f32 %v3467, %v3467
    %v3484 = vmul.f32 %v3468, %v3468
    %v3485 = vmul.f32 %v3469, %v3469
    %v3486 = vadd.f32 %v3470, %v3471
    %v3487 = vadd.f32 %v3486, %v3472
    %v3488 = vadd.f32 %v3487, %v3473
    %v3489 = vadd.f32 %v3488, %v3474
    %v3490 = vadd.f32 %v3489, %v3475
    %v3491 = vadd.f32 %v3490, %v3476
    %v3492 = vadd.f32 %v3491, %v3477
    %v3493 = vadd.f32 %v3492, %v3478
    %v3494 = vadd.f32 %v3493, %v3479
    %v3495 = vadd.f32 %v3494, %v3480
    %v3496 = vadd.f32 %v3495, %v3481
    %v3497 = vadd.f32 %v3496, %v3482
    %v3498 = vadd.f32 %v3497, %v3483
    %v3499 = vadd.f32 %v3498, %v3484
    %v3500 = vadd.f32 %v3499, %v3485
    %v3501 = vrot.slane %v3500, 4
    %v3502 = vadd.f32 %v3500, %v3501
    %v3503 = vrot.slane %v3502, 2
    %v3504 = vadd.f32 %v3502, %v3503
    %v3505 = vrot.slane %v3504, 1
    %v3506 = vadd.f32 %v3504, %v3505
    %3507 = vmatpush.msra.mxu0 %v3403
    %3508 = vmatpush.msra.mxu0 %v3402
    %3509 = vmatpush.msra.mxu0 %v3401
    %3510 = vmatpush.msra.mxu0 %v3400
    %3511 = vmatpush.msra.mxu0 %v3399
    %3512 = vmatpush.msra.mxu0 %v3398
    %3513 = vmatpush.msra.mxu0 %v3397
    %3514 = vmatpush.msra.mxu0 %v3396
    %3515 = vmatpush.msra.mxu0 %v3395
    %3516 = vmatpush.msra.mxu0 %v3394
    %3517 = vmatpush.msra.mxu0 %v3393
    %3518 = vmatpush.msra.mxu0 %v3392
    %3519 = vmatpush.msra.mxu0 %v3391
    %3520 = vmatpush.msra.mxu0 %v3390
    %3521 = vmatpush.msra.mxu0 %v3389
    %3522 = vmatpush.msra.mxu0 %v3388
    %3523 = vmatmul.f32.gmra.mxu0 %v3506
    %v3524 = vpop.f32.mrf.mxu0
    %v3525 = vadd.f32 0.0, %v3524
    %3526 = vdwg.mxu0
    %v3527 = vmul.f32 %v3525, 0.0078125
    %v3528 = vld [vmem:[%s61] sm:$0x1]
    %v3530 = vsel %vm3426, %v3527, 0
    %3532 = vmatpush.msra.mxu0 0.0
    %3533 = vmatpush.msra.mxu0 0.0
    %3534 = vmatpush.msra.mxu0 0.0
    %3535 = vmatpush.msra.mxu0 0.0
    %3536 = vmatpush.msra.mxu0 0.0
    %3537 = vmatpush.msra.mxu0 0.0
    %3538 = vmatpush.msra.mxu0 0.0
    %3539 = vmatpush.msra.mxu0 0.0
    %3540 = vmatpush.msra.mxu0 0.0
    %3541 = vmatpush.msra.mxu0 0.0
    %3542 = vmatpush.msra.mxu0 0.0
    %3543 = vmatpush.msra.mxu0 0.0
    %3544 = vmatpush.msra.mxu0 0.0
    %3545 = vmatpush.msra.mxu0 0.0
    %3546 = vmatpush.msra.mxu0 0.0
    %3547 = vmatpush.msra.mxu0 %v3431
    %3548 = vmatmul.f32.gmra.mxu0 %v3530
    %v3549 = vpop.f32.mrf.mxu0
    %v3550 = vadd.f32 1e-05, %v3549
    %3551 = vdwg.mxu0
    %v3552 = vrsqrt.pop %v3550
    %v3553 = vmul.f32 %v3552, %v3550
    %v3554 = vmul.f32 %v3553, %v3552
    %v3555 = vmul.f32 0.5, %v3554
    %v3556 = vsub.f32 1.5, %v3555
    %v3557 = vmul.f32 %v3552, %v3556
    %vm3558 = vweird.f32 %v3550
    %vm3559 = vweird.f32 %v3552
    %vm3560 = vmor %vm3558, %vm3559
    %v3561 = vsel %vm3560, %v3552, %v3557
    %v3562 = vmul.f32 %v3528, %v3561
    %v3564 = vperm.slane %v3562, 0
    %v3566 = vmul.f32 %v3454, %v3564
    %v3567 = vmul.f32 %v3455, %v3564
    %v3568 = vmul.f32 %v3456, %v3564
    %v3569 = vmul.f32 %v3457, %v3564
    %v3570 = vmul.f32 %v3458, %v3564
    %v3571 = vmul.f32 %v3459, %v3564
    %v3572 = vmul.f32 %v3460, %v3564
    %v3573 = vmul.f32 %v3461, %v3564
    %v3574 = vmul.f32 %v3462, %v3564
    %v3575 = vmul.f32 %v3463, %v3564
    %v3576 = vmul.f32 %v3464, %v3564
    %v3577 = vmul.f32 %v3465, %v3564
    %v3578 = vmul.f32 %v3466, %v3564
    %v3579 = vmul.f32 %v3467, %v3564
    %v3580 = vmul.f32 %v3468, %v3564
    %v3581 = vmul.f32 %v3469, %v3564
    %v3582 = vld [vmem:[%s63] sm:$0x1]
    %v3584 = vperm.slane %v3582, 0
    %v3586 = vadd.f32 %v3566, %v3584
    %v3587 = vadd.f32 %v3567, %v3584
    %v3588 = vadd.f32 %v3568, %v3584
    %v3589 = vadd.f32 %v3569, %v3584
    %v3590 = vadd.f32 %v3570, %v3584
    %v3591 = vadd.f32 %v3571, %v3584
    %v3592 = vadd.f32 %v3572, %v3584
    %v3593 = vadd.f32 %v3573, %v3584
    %v3594 = vadd.f32 %v3574, %v3584
    %v3595 = vadd.f32 %v3575, %v3584
    %v3596 = vadd.f32 %v3576, %v3584
    %v3597 = vadd.f32 %v3577, %v3584
    %v3598 = vadd.f32 %v3578, %v3584
    %v3599 = vadd.f32 %v3579, %v3584
    %v3600 = vadd.f32 %v3580, %v3584
    %v3601 = vadd.f32 %v3581, %v3584
    %v3602 = vmax.f32 %v3586, 0.0
    %v3603 = vmax.f32 %v3587, 0.0
    %v3604 = vmax.f32 %v3588, 0.0
    %v3605 = vmax.f32 %v3589, 0.0
    %v3606 = vmax.f32 %v3590, 0.0
    %v3607 = vmax.f32 %v3591, 0.0
    %v3608 = vmax.f32 %v3592, 0.0
    %v3609 = vmax.f32 %v3593, 0.0
    %v3610 = vmax.f32 %v3594, 0.0
    %v3611 = vmax.f32 %v3595, 0.0
    %v3612 = vmax.f32 %v3596, 0.0
    %v3613 = vmax.f32 %v3597, 0.0
    %v3614 = vmax.f32 %v3598, 0.0
    %v3615 = vmax.f32 %v3599, 0.0
    %v3616 = vmax.f32 %v3600, 0.0
    %v3617 = vmax.f32 %v3601, 0.0
    %v3618 = vrot.slane %v3602, 7
    %v3619 = vrot.slane %v3603, 7
    %v3620 = vrot.slane %v3604, 7
    %v3621 = vrot.slane %v3605, 7
    %v3622 = vrot.slane %v3606, 7
    %v3623 = vrot.slane %v3607, 7
    %v3624 = vrot.slane %v3608, 7
    %v3625 = vrot.slane %v3609, 7
    %v3626 = vrot.slane %v3610, 7
    %v3627 = vrot.slane %v3611, 7
    %v3628 = vrot.slane %v3612, 7
    %v3629 = vrot.slane %v3613, 7
    %v3630 = vrot.slane %v3614, 7
    %v3631 = vrot.slane %v3615, 7
    %v3632 = vrot.slane %v3616, 7
    %v3633 = vrot.slane %v3617, 7
    %v3634 = vsel %vm705, %v3632, %v3633
    %v3635 = vsel %vm705, %v3631, %v3632
    %v3636 = vsel %vm705, %v3630, %v3631
    %v3637 = vsel %vm705, %v3629, %v3630
    %v3638 = vsel %vm705, %v3628, %v3629
    %v3639 = vsel %vm705, %v3627, %v3628
    %v3640 = vsel %vm705, %v3626, %v3627
    %v3641 = vsel %vm705, %v3625, %v3626
    %v3642 = vsel %vm705, %v3624, %v3625
    %v3643 = vsel %vm705, %v3623, %v3624
    %v3644 = vsel %vm705, %v3622, %v3623
    %v3645 = vsel %vm705, %v3621, %v3622
    %v3646 = vsel %vm705, %v3620, %v3621
    %v3647 = vsel %vm705, %v3619, %v3620
    %v3648 = vsel %vm705, %v3618, %v3619
    %v3649 = vsel %vm705, %v3633, %v3618
    %v3650 = vmul.f32 %v3649, %v2876
    %v3651 = vmul.f32 %v3648, %v2877
    %v3652 = vmul.f32 %v3647, %v2878
    %v3653 = vmul.f32 %v3646, %v2879
    %v3654 = vmul.f32 %v3645, %v2880
    %v3655 = vmul.f32 %v3644, %v2881
    %v3656 = vmul.f32 %v3643, %v2882
    %v3657 = vmul.f32 %v3642, %v2883
    %v3658 = vmul.f32 %v3641, %v2884
    %v3659 = vmul.f32 %v3640, %v2885
    %v3660 = vmul.f32 %v3639, %v2886
    %v3661 = vmul.f32 %v3638, %v2887
    %v3662 = vmul.f32 %v3637, %v2888
    %v3663 = vmul.f32 %v3636, %v2889
    %v3664 = vmul.f32 %v3635, %v2890
    %v3665 = vmul.f32 %v3634, %v2891
    %v3666 = vrot.slane %v3602, 1
    %v3667 = vrot.slane %v3603, 1
    %v3668 = vrot.slane %v3604, 1
    %v3669 = vrot.slane %v3605, 1
    %v3670 = vrot.slane %v3606, 1
    %v3671 = vrot.slane %v3607, 1
    %v3672 = vrot.slane %v3608, 1
    %v3673 = vrot.slane %v3609, 1
    %v3674 = vrot.slane %v3610, 1
    %v3675 = vrot.slane %v3611, 1
    %v3676 = vrot.slane %v3612, 1
    %v3677 = vrot.slane %v3613, 1
    %v3678 = vrot.slane %v3614, 1
    %v3679 = vrot.slane %v3615, 1
    %v3680 = vrot.slane %v3616, 1
    %v3681 = vrot.slane %v3617, 1
    %v3682 = vsel %vm718, %v3680, %v3681
    %v3683 = vsel %vm718, %v3679, %v3680
    %v3684 = vsel %vm718, %v3678, %v3679
    %v3685 = vsel %vm718, %v3677, %v3678
    %v3686 = vsel %vm718, %v3676, %v3677
    %v3687 = vsel %vm718, %v3675, %v3676
    %v3688 = vsel %vm718, %v3674, %v3675
    %v3689 = vsel %vm718, %v3673, %v3674
    %v3690 = vsel %vm718, %v3672, %v3673
    %v3691 = vsel %vm718, %v3671, %v3672
    %v3692 = vsel %vm718, %v3670, %v3671
    %v3693 = vsel %vm718, %v3669, %v3670
    %v3694 = vsel %vm718, %v3668, %v3669
    %v3695 = vsel %vm718, %v3667, %v3668
    %v3696 = vsel %vm718, %v3666, %v3667
    %v3697 = vsel %vm718, %v3681, %v3666
    %v3698 = vmul.f32 %v3696, %v2972
    %v3699 = vmul.f32 %v3695, %v2973
    %v3700 = vmul.f32 %v3694, %v2974
    %v3701 = vmul.f32 %v3693, %v2975
    %v3702 = vmul.f32 %v3692, %v2976
    %v3703 = vmul.f32 %v3691, %v2977
    %v3704 = vmul.f32 %v3690, %v2978
    %v3705 = vmul.f32 %v3689, %v2979
    %v3706 = vmul.f32 %v3688, %v2980
    %v3707 = vmul.f32 %v3687, %v2981
    %v3708 = vmul.f32 %v3686, %v2982
    %v3709 = vmul.f32 %v3685, %v2983
    %v3710 = vmul.f32 %v3684, %v2984
    %v3711 = vmul.f32 %v3683, %v2985
    %v3712 = vmul.f32 %v3682, %v2986
    %v3713 = vmul.f32 %v3697, %v2987
    %v3714 = vpack.c.bf16 %v3651, %v3650
    %v3715 = vpack.c.bf16 %v3603, %v3602
    %v3716 = vpack.c.bf16 %v3699, %v3698
    %v3717 = vpack.c.bf16 %v3653, %v3652
    %v3718 = vpack.c.bf16 %v3605, %v3604
    %v3719 = vpack.c.bf16 %v3701, %v3700
    %v3720 = vpack.c.bf16 %v3655, %v3654
    %v3721 = vpack.c.bf16 %v3607, %v3606
    %v3722 = vpack.c.bf16 %v3703, %v3702
    %v3723 = vpack.c.bf16 %v3657, %v3656
    %v3724 = vpack.c.bf16 %v3609, %v3608
    %v3725 = vpack.c.bf16 %v3705, %v3704
    %v3726 = vpack.c.bf16 %v3659, %v3658
    %v3727 = vpack.c.bf16 %v3611, %v3610
    %v3728 = vpack.c.bf16 %v3707, %v3706
    %v3729 = vpack.c.bf16 %v3661, %v3660
    %v3730 = vpack.c.bf16 %v3613, %v3612
    %v3731 = vpack.c.bf16 %v3709, %v3708
    %v3732 = vpack.c.bf16 %v3663, %v3662
    %v3733 = vpack.c.bf16 %v3615, %v3614
    %v3734 = vpack.c.bf16 %v3711, %v3710
    %v3735 = vpack.c.bf16 %v3665, %v3664
    %v3736 = vpack.c.bf16 %v3617, %v3616
    %v3737 = vpack.c.bf16 %v3713, %v3712
    %v3738 = vld [vmem:[#allocation19] sm:$0xff]
    %v3739 = vld [vmem:[#allocation19 + $0x8] sm:$0xff]
    %v3740 = vld [vmem:[#allocation19 + $0x10] sm:$0xff]
    %v3741 = vld [vmem:[#allocation19 + $0x18] sm:$0xff]
    %v3742 = vld [vmem:[#allocation19 + $0x20] sm:$0xff]
    %v3743 = vld [vmem:[#allocation19 + $0x28] sm:$0xff]
    %v3744 = vld [vmem:[#allocation19 + $0x30] sm:$0xff]
    %v3745 = vld [vmem:[#allocation19 + $0x38] sm:$0xff]
    %v3746 = vld [vmem:[#allocation19 + $0x40] sm:$0xff]
    %v3747 = vld [vmem:[#allocation19 + $0x48] sm:$0xff]
    %v3748 = vld [vmem:[#allocation19 + $0x50] sm:$0xff]
    %v3749 = vld [vmem:[#allocation19 + $0x58] sm:$0xff]
    %v3750 = vld [vmem:[#allocation19 + $0x60] sm:$0xff]
    %v3751 = vld [vmem:[#allocation19 + $0x68] sm:$0xff]
    %v3752 = vld [vmem:[#allocation19 + $0x70] sm:$0xff]
    %v3753 = vld [vmem:[#allocation19 + $0x78] sm:$0xff]
    %v3754 = vld [vmem:[#allocation19 + $0x80] sm:$0xff]
    %v3755 = vld [vmem:[#allocation19 + $0x88] sm:$0xff]
    %v3756 = vld [vmem:[#allocation19 + $0x90] sm:$0xff]
    %v3757 = vld [vmem:[#allocation19 + $0x98] sm:$0xff]
    %v3758 = vld [vmem:[#allocation19 + $0xa0] sm:$0xff]
    %v3759 = vld [vmem:[#allocation19 + $0xa8] sm:$0xff]
    %v3760 = vld [vmem:[#allocation19 + $0xb0] sm:$0xff]
    %v3761 = vld [vmem:[#allocation19 + $0xb8] sm:$0xff]
    %v3762 = vld [vmem:[#allocation19 + $0xc0] sm:$0xff]
    %v3763 = vld [vmem:[#allocation19 + $0xc8] sm:$0xff]
    %v3764 = vld [vmem:[#allocation19 + $0xd0] sm:$0xff]
    %v3765 = vld [vmem:[#allocation19 + $0xd8] sm:$0xff]
    %v3766 = vld [vmem:[#allocation19 + $0xe0] sm:$0xff]
    %v3767 = vld [vmem:[#allocation19 + $0xe8] sm:$0xff]
    %v3768 = vld [vmem:[#allocation19 + $0xf0] sm:$0xff]
    %v3769 = vld [vmem:[#allocation19 + $0xf8] sm:$0xff]
    %v3770 = vld [vmem:[#allocation19 + $0x100] sm:$0xff]
    %v3771 = vld [vmem:[#allocation19 + $0x108] sm:$0xff]
    %v3772 = vld [vmem:[#allocation19 + $0x110] sm:$0xff]
    %v3773 = vld [vmem:[#allocation19 + $0x118] sm:$0xff]
    %v3774 = vld [vmem:[#allocation19 + $0x120] sm:$0xff]
    %v3775 = vld [vmem:[#allocation19 + $0x128] sm:$0xff]
    %v3776 = vld [vmem:[#allocation19 + $0x130] sm:$0xff]
    %v3777 = vld [vmem:[#allocation19 + $0x138] sm:$0xff]
    %v3778 = vld [vmem:[#allocation19 + $0x140] sm:$0xff]
    %v3779 = vld [vmem:[#allocation19 + $0x148] sm:$0xff]
    %v3780 = vld [vmem:[#allocation19 + $0x150] sm:$0xff]
    %v3781 = vld [vmem:[#allocation19 + $0x158] sm:$0xff]
    %v3782 = vld [vmem:[#allocation19 + $0x160] sm:$0xff]
    %v3783 = vld [vmem:[#allocation19 + $0x168] sm:$0xff]
    %v3784 = vld [vmem:[#allocation19 + $0x170] sm:$0xff]
    %v3785 = vld [vmem:[#allocation19 + $0x178] sm:$0xff]
    %v3834 = vunpack.c.l.b16 %v3738
    %v3835 = vunpack.c.h.b16 %v3738
    %v3836 = vunpack.c.l.b16 %v3739
    %v3837 = vunpack.c.h.b16 %v3739
    %v3838 = vunpack.c.l.b16 %v3740
    %v3839 = vunpack.c.h.b16 %v3740
    %v3840 = vunpack.c.l.b16 %v3741
    %v3841 = vunpack.c.h.b16 %v3741
    %v3842 = vunpack.c.l.b16 %v3742
    %v3843 = vunpack.c.h.b16 %v3742
    %v3844 = vunpack.c.l.b16 %v3743
    %v3845 = vunpack.c.h.b16 %v3743
    %v3846 = vunpack.c.l.b16 %v3744
    %v3847 = vunpack.c.h.b16 %v3744
    %v3848 = vunpack.c.l.b16 %v3745
    %v3849 = vunpack.c.h.b16 %v3745
    %v3850 = vunpack.c.l.b16 %v3746
    %v3851 = vunpack.c.h.b16 %v3746
    %v3852 = vunpack.c.l.b16 %v3747
    %v3853 = vunpack.c.h.b16 %v3747
    %v3854 = vunpack.c.l.b16 %v3748
    %v3855 = vunpack.c.h.b16 %v3748
    %v3856 = vunpack.c.l.b16 %v3749
    %v3857 = vunpack.c.h.b16 %v3749
    %v3858 = vunpack.c.l.b16 %v3750
    %v3859 = vunpack.c.h.b16 %v3750
    %v3860 = vunpack.c.l.b16 %v3751
    %v3861 = vunpack.c.h.b16 %v3751
    %v3862 = vunpack.c.l.b16 %v3752
    %v3863 = vunpack.c.h.b16 %v3752
    %v3864 = vunpack.c.l.b16 %v3753
    %v3865 = vunpack.c.h.b16 %v3753
    %v3866 = vunpack.c.l.b16 %v3754
    %v3867 = vunpack.c.h.b16 %v3754
    %v3868 = vunpack.c.l.b16 %v3755
    %v3869 = vunpack.c.h.b16 %v3755
    %v3870 = vunpack.c.l.b16 %v3756
    %v3871 = vunpack.c.h.b16 %v3756
    %v3872 = vunpack.c.l.b16 %v3757
    %v3873 = vunpack.c.h.b16 %v3757
    %v3874 = vunpack.c.l.b16 %v3758
    %v3875 = vunpack.c.h.b16 %v3758
    %v3876 = vunpack.c.l.b16 %v3759
    %v3877 = vunpack.c.h.b16 %v3759
    %v3878 = vunpack.c.l.b16 %v3760
    %v3879 = vunpack.c.h.b16 %v3760
    %v3880 = vunpack.c.l.b16 %v3761
    %v3881 = vunpack.c.h.b16 %v3761
    %v3882 = vunpack.c.l.b16 %v3762
    %v3883 = vunpack.c.h.b16 %v3762
    %v3884 = vunpack.c.l.b16 %v3763
    %v3885 = vunpack.c.h.b16 %v3763
    %v3886 = vunpack.c.l.b16 %v3764
    %v3887 = vunpack.c.h.b16 %v3764
    %v3888 = vunpack.c.l.b16 %v3765
    %v3889 = vunpack.c.h.b16 %v3765
    %v3890 = vunpack.c.l.b16 %v3766
    %v3891 = vunpack.c.h.b16 %v3766
    %v3892 = vunpack.c.l.b16 %v3767
    %v3893 = vunpack.c.h.b16 %v3767
    %v3894 = vunpack.c.l.b16 %v3768
    %v3895 = vunpack.c.h.b16 %v3768
    %v3896 = vunpack.c.l.b16 %v3769
    %v3897 = vunpack.c.h.b16 %v3769
    %v3898 = vunpack.c.l.b16 %v3770
    %v3899 = vunpack.c.h.b16 %v3770
    %v3900 = vunpack.c.l.b16 %v3771
    %v3901 = vunpack.c.h.b16 %v3771
    %v3902 = vunpack.c.l.b16 %v3772
    %v3903 = vunpack.c.h.b16 %v3772
    %v3904 = vunpack.c.l.b16 %v3773
    %v3905 = vunpack.c.h.b16 %v3773
    %v3906 = vunpack.c.l.b16 %v3774
    %v3907 = vunpack.c.h.b16 %v3774
    %v3908 = vunpack.c.l.b16 %v3775
    %v3909 = vunpack.c.h.b16 %v3775
    %v3910 = vunpack.c.l.b16 %v3776
    %v3911 = vunpack.c.h.b16 %v3776
    %v3912 = vunpack.c.l.b16 %v3777
    %v3913 = vunpack.c.h.b16 %v3777
    %v3914 = vunpack.c.l.b16 %v3778
    %v3915 = vunpack.c.h.b16 %v3778
    %v3916 = vunpack.c.l.b16 %v3779
    %v3917 = vunpack.c.h.b16 %v3779
    %v3918 = vunpack.c.l.b16 %v3780
    %v3919 = vunpack.c.h.b16 %v3780
    %v3920 = vunpack.c.l.b16 %v3781
    %v3921 = vunpack.c.h.b16 %v3781
    %v3922 = vunpack.c.l.b16 %v3782
    %v3923 = vunpack.c.h.b16 %v3782
    %v3924 = vunpack.c.l.b16 %v3783
    %v3925 = vunpack.c.h.b16 %v3783
    %v3926 = vunpack.c.l.b16 %v3784
    %v3927 = vunpack.c.h.b16 %v3784
    %v3928 = vunpack.c.l.b16 %v3785
    %v3929 = vunpack.c.h.b16 %v3785
    %v3930 = vpack.c.b16 %v3836, %v3834
    %v3931 = vpack.c.b16 %v3837, %v3835
    %v3932 = vpack.c.b16 %v3840, %v3838
    %v3933 = vpack.c.b16 %v3841, %v3839
    %v3934 = vpack.c.b16 %v3844, %v3842
    %v3935 = vpack.c.b16 %v3845, %v3843
    %v3936 = vpack.c.b16 %v3848, %v3846
    %v3937 = vpack.c.b16 %v3849, %v3847
    %v3938 = vpack.c.b16 %v3852, %v3850
    %v3939 = vpack.c.b16 %v3853, %v3851
    %v3940 = vpack.c.b16 %v3856, %v3854
    %v3941 = vpack.c.b16 %v3857, %v3855
    %v3942 = vpack.c.b16 %v3860, %v3858
    %v3943 = vpack.c.b16 %v3861, %v3859
    %v3944 = vpack.c.b16 %v3864, %v3862
    %v3945 = vpack.c.b16 %v3865, %v3863
    %v3946 = vpack.c.b16 %v3868, %v3866
    %v3947 = vpack.c.b16 %v3869, %v3867
    %v3948 = vpack.c.b16 %v3872, %v3870
    %v3949 = vpack.c.b16 %v3873, %v3871
    %v3950 = vpack.c.b16 %v3876, %v3874
    %v3951 = vpack.c.b16 %v3877, %v3875
    %v3952 = vpack.c.b16 %v3880, %v3878
    %v3953 = vpack.c.b16 %v3881, %v3879
    %v3954 = vpack.c.b16 %v3884, %v3882
    %v3955 = vpack.c.b16 %v3885, %v3883
    %v3956 = vpack.c.b16 %v3888, %v3886
    %v3957 = vpack.c.b16 %v3889, %v3887
    %v3958 = vpack.c.b16 %v3892, %v3890
    %v3959 = vpack.c.b16 %v3893, %v3891
    %v3960 = vpack.c.b16 %v3896, %v3894
    %v3961 = vpack.c.b16 %v3897, %v3895
    %v3962 = vpack.c.b16 %v3900, %v3898
    %v3963 = vpack.c.b16 %v3901, %v3899
    %v3964 = vpack.c.b16 %v3904, %v3902
    %v3965 = vpack.c.b16 %v3905, %v3903
    %v3966 = vpack.c.b16 %v3908, %v3906
    %v3967 = vpack.c.b16 %v3909, %v3907
    %v3968 = vpack.c.b16 %v3912, %v3910
    %v3969 = vpack.c.b16 %v3913, %v3911
    %v3970 = vpack.c.b16 %v3916, %v3914
    %v3971 = vpack.c.b16 %v3917, %v3915
    %v3972 = vpack.c.b16 %v3920, %v3918
    %v3973 = vpack.c.b16 %v3921, %v3919
    %v3974 = vpack.c.b16 %v3924, %v3922
    %v3975 = vpack.c.b16 %v3925, %v3923
    %v3976 = vpack.c.b16 %v3928, %v3926
    %v3977 = vpack.c.b16 %v3929, %v3927
    %4026 = vmatpush.bf16.msra.mxu0 %v3944
    %4027 = vmatpush.bf16.msra.mxu0 %v3942
    %4028 = vmatpush.bf16.msra.mxu0 %v3940
    %4029 = vmatpush.bf16.msra.mxu0 %v3938
    %4030 = vmatpush.bf16.msra.mxu0 %v3936
    %4031 = vmatpush.bf16.msra.mxu0 %v3934
    %4032 = vmatpush.bf16.msra.mxu0 %v3932
    %4033 = vmatpush.bf16.msra.mxu0 %v3930
    %4034 = vmatmul.bf16.gmra.mxu0 %v3714
    %v4035 = vpop.f32.mrf.mxu0
    %v4036 = vadd.f32 0.0, %v4035
    %v4037 = vpop.f32.mrf.mxu0
    %v4038 = vadd.f32 0.0, %v4037
    %4039 = vmatmul.bf16.gmra.mxu0 %v3717
    %v4040 = vpop.f32.mrf.mxu0
    %v4041 = vadd.f32 0.0, %v4040
    %v4042 = vpop.f32.mrf.mxu0
    %v4043 = vadd.f32 0.0, %v4042
    %4044 = vmatmul.bf16.gmra.mxu0 %v3720
    %v4045 = vpop.f32.mrf.mxu0
    %v4046 = vadd.f32 0.0, %v4045
    %v4047 = vpop.f32.mrf.mxu0
    %v4048 = vadd.f32 0.0, %v4047
    %4049 = vmatmul.bf16.gmra.mxu0 %v3723
    %v4050 = vpop.f32.mrf.mxu0
    %v4051 = vadd.f32 0.0, %v4050
    %v4052 = vpop.f32.mrf.mxu0
    %v4053 = vadd.f32 0.0, %v4052
    %4054 = vmatmul.bf16.gmra.mxu0 %v3726
    %v4055 = vpop.f32.mrf.mxu0
    %v4056 = vadd.f32 0.0, %v4055
    %v4057 = vpop.f32.mrf.mxu0
    %v4058 = vadd.f32 0.0, %v4057
    %4059 = vmatmul.bf16.gmra.mxu0 %v3729
    %v4060 = vpop.f32.mrf.mxu0
    %v4061 = vadd.f32 0.0, %v4060
    %v4062 = vpop.f32.mrf.mxu0
    %v4063 = vadd.f32 0.0, %v4062
    %4064 = vmatmul.bf16.gmra.mxu0 %v3732
    %v4065 = vpop.f32.mrf.mxu0
    %v4066 = vadd.f32 0.0, %v4065
    %v4067 = vpop.f32.mrf.mxu0
    %v4068 = vadd.f32 0.0, %v4067
    %4069 = vmatmul.bf16.gmra.mxu0 %v3735
    %v4070 = vpop.f32.mrf.mxu0
    %v4071 = vadd.f32 0.0, %v4070
    %v4072 = vpop.f32.mrf.mxu0
    %v4073 = vadd.f32 0.0, %v4072
    %4074 = vdwg.mxu0
    %4075 = vmatpush.bf16.msra.mxu0 %v3960
    %4076 = vmatpush.bf16.msra.mxu0 %v3958
    %4077 = vmatpush.bf16.msra.mxu0 %v3956
    %4078 = vmatpush.bf16.msra.mxu0 %v3954
    %4079 = vmatpush.bf16.msra.mxu0 %v3952
    %4080 = vmatpush.bf16.msra.mxu0 %v3950
    %4081 = vmatpush.bf16.msra.mxu0 %v3948
    %4082 = vmatpush.bf16.msra.mxu0 %v3946
    %4083 = vmatmul.bf16.gmra.mxu0 %v3715
    %v4084 = vpop.f32.mrf.mxu0
    %v4085 = vadd.f32 %v4036, %v4084
    %v4086 = vpop.f32.mrf.mxu0
    %v4087 = vadd.f32 %v4038, %v4086
    %4088 = vmatmul.bf16.gmra.mxu0 %v3718
    %v4089 = vpop.f32.mrf.mxu0
    %v4090 = vadd.f32 %v4041, %v4089
    %v4091 = vpop.f32.mrf.mxu0
    %v4092 = vadd.f32 %v4043, %v4091
    %4093 = vmatmul.bf16.gmra.mxu0 %v3721
    %v4094 = vpop.f32.mrf.mxu0
    %v4095 = vadd.f32 %v4046, %v4094
    %v4096 = vpop.f32.mrf.mxu0
    %v4097 = vadd.f32 %v4048, %v4096
    %4098 = vmatmul.bf16.gmra.mxu0 %v3724
    %v4099 = vpop.f32.mrf.mxu0
    %v4100 = vadd.f32 %v4051, %v4099
    %v4101 = vpop.f32.mrf.mxu0
    %v4102 = vadd.f32 %v4053, %v4101
    %4103 = vmatmul.bf16.gmra.mxu0 %v3727
    %v4104 = vpop.f32.mrf.mxu0
    %v4105 = vadd.f32 %v4056, %v4104
    %v4106 = vpop.f32.mrf.mxu0
    %v4107 = vadd.f32 %v4058, %v4106
    %4108 = vmatmul.bf16.gmra.mxu0 %v3730
    %v4109 = vpop.f32.mrf.mxu0
    %v4110 = vadd.f32 %v4061, %v4109
    %v4111 = vpop.f32.mrf.mxu0
    %v4112 = vadd.f32 %v4063, %v4111
    %4113 = vmatmul.bf16.gmra.mxu0 %v3733
    %v4114 = vpop.f32.mrf.mxu0
    %v4115 = vadd.f32 %v4066, %v4114
    %v4116 = vpop.f32.mrf.mxu0
    %v4117 = vadd.f32 %v4068, %v4116
    %4118 = vmatmul.bf16.gmra.mxu0 %v3736
    %v4119 = vpop.f32.mrf.mxu0
    %v4120 = vadd.f32 %v4071, %v4119
    %v4121 = vpop.f32.mrf.mxu0
    %v4122 = vadd.f32 %v4073, %v4121
    %4123 = vdwg.mxu0
    %4124 = vmatpush.bf16.msra.mxu0 %v3976
    %4125 = vmatpush.bf16.msra.mxu0 %v3974
    %4126 = vmatpush.bf16.msra.mxu0 %v3972
    %4127 = vmatpush.bf16.msra.mxu0 %v3970
    %4128 = vmatpush.bf16.msra.mxu0 %v3968
    %4129 = vmatpush.bf16.msra.mxu0 %v3966
    %4130 = vmatpush.bf16.msra.mxu0 %v3964
    %4131 = vmatpush.bf16.msra.mxu0 %v3962
    %4132 = vmatmul.bf16.gmra.mxu0 %v3716
    %v4133 = vpop.f32.mrf.mxu0
    %v4134 = vadd.f32 %v4085, %v4133
    %v4135 = vpop.f32.mrf.mxu0
    %v4136 = vadd.f32 %v4087, %v4135
    %4137 = vmatmul.bf16.gmra.mxu0 %v3719
    %v4138 = vpop.f32.mrf.mxu0
    %v4139 = vadd.f32 %v4090, %v4138
    %v4140 = vpop.f32.mrf.mxu0
    %v4141 = vadd.f32 %v4092, %v4140
    %4142 = vmatmul.bf16.gmra.mxu0 %v3722
    %v4143 = vpop.f32.mrf.mxu0
    %v4144 = vadd.f32 %v4095, %v4143
    %v4145 = vpop.f32.mrf.mxu0
    %v4146 = vadd.f32 %v4097, %v4145
    %4147 = vmatmul.bf16.gmra.mxu0 %v3725
    %v4148 = vpop.f32.mrf.mxu0
    %v4149 = vadd.f32 %v4100, %v4148
    %v4150 = vpop.f32.mrf.mxu0
    %v4151 = vadd.f32 %v4102, %v4150
    %4152 = vmatmul.bf16.gmra.mxu0 %v3728
    %v4153 = vpop.f32.mrf.mxu0
    %v4154 = vadd.f32 %v4105, %v4153
    %v4155 = vpop.f32.mrf.mxu0
    %v4156 = vadd.f32 %v4107, %v4155
    %4157 = vmatmul.bf16.gmra.mxu0 %v3731
    %v4158 = vpop.f32.mrf.mxu0
    %v4159 = vadd.f32 %v4110, %v4158
    %v4160 = vpop.f32.mrf.mxu0
    %v4161 = vadd.f32 %v4112, %v4160
    %4162 = vmatmul.bf16.gmra.mxu0 %v3734
    %v4163 = vpop.f32.mrf.mxu0
    %v4164 = vadd.f32 %v4115, %v4163
    %v4165 = vpop.f32.mrf.mxu0
    %v4166 = vadd.f32 %v4117, %v4165
    %4167 = vmatmul.bf16.gmra.mxu0 %v3737
    %v4168 = vpop.f32.mrf.mxu0
    %v4169 = vadd.f32 %v4120, %v4168
    %v4170 = vpop.f32.mrf.mxu0
    %v4171 = vadd.f32 %v4122, %v4170
    %4172 = vdwg.mxu0
    %4173 = vmatpush.bf16.msra.mxu0 %v3945
    %4174 = vmatpush.bf16.msra.mxu0 %v3943
    %4175 = vmatpush.bf16.msra.mxu0 %v3941
    %4176 = vmatpush.bf16.msra.mxu0 %v3939
    %4177 = vmatpush.bf16.msra.mxu0 %v3937
    %4178 = vmatpush.bf16.msra.mxu0 %v3935
    %4179 = vmatpush.bf16.msra.mxu0 %v3933
    %4180 = vmatpush.bf16.msra.mxu0 %v3931
    %4181 = vmatmul.bf16.gmra.mxu0 %v3714
    %v4182 = vpop.f32.mrf.mxu0
    %v4183 = vadd.f32 0.0, %v4182
    %v4184 = vpop.f32.mrf.mxu0
    %v4185 = vadd.f32 0.0, %v4184
    %4186 = vmatmul.bf16.gmra.mxu0 %v3717
    %v4187 = vpop.f32.mrf.mxu0
    %v4188 = vadd.f32 0.0, %v4187
    %v4189 = vpop.f32.mrf.mxu0
    %v4190 = vadd.f32 0.0, %v4189
    %4191 = vmatmul.bf16.gmra.mxu0 %v3720
    %v4192 = vpop.f32.mrf.mxu0
    %v4193 = vadd.f32 0.0, %v4192
    %v4194 = vpop.f32.mrf.mxu0
    %v4195 = vadd.f32 0.0, %v4194
    %4196 = vmatmul.bf16.gmra.mxu0 %v3723
    %v4197 = vpop.f32.mrf.mxu0
    %v4198 = vadd.f32 0.0, %v4197
    %v4199 = vpop.f32.mrf.mxu0
    %v4200 = vadd.f32 0.0, %v4199
    %4201 = vmatmul.bf16.gmra.mxu0 %v3726
    %v4202 = vpop.f32.mrf.mxu0
    %v4203 = vadd.f32 0.0, %v4202
    %v4204 = vpop.f32.mrf.mxu0
    %v4205 = vadd.f32 0.0, %v4204
    %4206 = vmatmul.bf16.gmra.mxu0 %v3729
    %v4207 = vpop.f32.mrf.mxu0
    %v4208 = vadd.f32 0.0, %v4207
    %v4209 = vpop.f32.mrf.mxu0
    %v4210 = vadd.f32 0.0, %v4209
    %4211 = vmatmul.bf16.gmra.mxu0 %v3732
    %v4212 = vpop.f32.mrf.mxu0
    %v4213 = vadd.f32 0.0, %v4212
    %v4214 = vpop.f32.mrf.mxu0
    %v4215 = vadd.f32 0.0, %v4214
    %4216 = vmatmul.bf16.gmra.mxu0 %v3735
    %v4217 = vpop.f32.mrf.mxu0
    %v4218 = vadd.f32 0.0, %v4217
    %v4219 = vpop.f32.mrf.mxu0
    %v4220 = vadd.f32 0.0, %v4219
    %4221 = vdwg.mxu0
    %4222 = vmatpush.bf16.msra.mxu0 %v3961
    %4223 = vmatpush.bf16.msra.mxu0 %v3959
    %4224 = vmatpush.bf16.msra.mxu0 %v3957
    %4225 = vmatpush.bf16.msra.mxu0 %v3955
    %4226 = vmatpush.bf16.msra.mxu0 %v3953
    %4227 = vmatpush.bf16.msra.mxu0 %v3951
    %4228 = vmatpush.bf16.msra.mxu0 %v3949
    %4229 = vmatpush.bf16.msra.mxu0 %v3947
    %4230 = vmatmul.bf16.gmra.mxu0 %v3715
    %v4231 = vpop.f32.mrf.mxu0
    %v4232 = vadd.f32 %v4183, %v4231
    %v4233 = vpop.f32.mrf.mxu0
    %v4234 = vadd.f32 %v4185, %v4233
    %4235 = vmatmul.bf16.gmra.mxu0 %v3718
    %v4236 = vpop.f32.mrf.mxu0
    %v4237 = vadd.f32 %v4188, %v4236
    %v4238 = vpop.f32.mrf.mxu0
    %v4239 = vadd.f32 %v4190, %v4238
    %4240 = vmatmul.bf16.gmra.mxu0 %v3721
    %v4241 = vpop.f32.mrf.mxu0
    %v4242 = vadd.f32 %v4193, %v4241
    %v4243 = vpop.f32.mrf.mxu0
    %v4244 = vadd.f32 %v4195, %v4243
    %4245 = vmatmul.bf16.gmra.mxu0 %v3724
    %v4246 = vpop.f32.mrf.mxu0
    %v4247 = vadd.f32 %v4198, %v4246
    %v4248 = vpop.f32.mrf.mxu0
    %v4249 = vadd.f32 %v4200, %v4248
    %4250 = vmatmul.bf16.gmra.mxu0 %v3727
    %v4251 = vpop.f32.mrf.mxu0
    %v4252 = vadd.f32 %v4203, %v4251
    %v4253 = vpop.f32.mrf.mxu0
    %v4254 = vadd.f32 %v4205, %v4253
    %4255 = vmatmul.bf16.gmra.mxu0 %v3730
    %v4256 = vpop.f32.mrf.mxu0
    %v4257 = vadd.f32 %v4208, %v4256
    %v4258 = vpop.f32.mrf.mxu0
    %v4259 = vadd.f32 %v4210, %v4258
    %4260 = vmatmul.bf16.gmra.mxu0 %v3733
    %v4261 = vpop.f32.mrf.mxu0
    %v4262 = vadd.f32 %v4213, %v4261
    %v4263 = vpop.f32.mrf.mxu0
    %v4264 = vadd.f32 %v4215, %v4263
    %4265 = vmatmul.bf16.gmra.mxu0 %v3736
    %v4266 = vpop.f32.mrf.mxu0
    %v4267 = vadd.f32 %v4218, %v4266
    %v4268 = vpop.f32.mrf.mxu0
    %v4269 = vadd.f32 %v4220, %v4268
    %4270 = vdwg.mxu0
    %4271 = vmatpush.bf16.msra.mxu0 %v3977
    %4272 = vmatpush.bf16.msra.mxu0 %v3975
    %4273 = vmatpush.bf16.msra.mxu0 %v3973
    %4274 = vmatpush.bf16.msra.mxu0 %v3971
    %4275 = vmatpush.bf16.msra.mxu0 %v3969
    %4276 = vmatpush.bf16.msra.mxu0 %v3967
    %4277 = vmatpush.bf16.msra.mxu0 %v3965
    %4278 = vmatpush.bf16.msra.mxu0 %v3963
    %4279 = vmatmul.bf16.gmra.mxu0 %v3716
    %v4280 = vpop.f32.mrf.mxu0
    %v4281 = vadd.f32 %v4232, %v4280
    %v4282 = vpop.f32.mrf.mxu0
    %v4283 = vadd.f32 %v4234, %v4282
    %4284 = vmatmul.bf16.gmra.mxu0 %v3719
    %v4285 = vpop.f32.mrf.mxu0
    %v4286 = vadd.f32 %v4237, %v4285
    %v4287 = vpop.f32.mrf.mxu0
    %v4288 = vadd.f32 %v4239, %v4287
    %4289 = vmatmul.bf16.gmra.mxu0 %v3722
    %v4290 = vpop.f32.mrf.mxu0
    %v4291 = vadd.f32 %v4242, %v4290
    %v4292 = vpop.f32.mrf.mxu0
    %v4293 = vadd.f32 %v4244, %v4292
    %4294 = vmatmul.bf16.gmra.mxu0 %v3725
    %v4295 = vpop.f32.mrf.mxu0
    %v4296 = vadd.f32 %v4247, %v4295
    %v4297 = vpop.f32.mrf.mxu0
    %v4298 = vadd.f32 %v4249, %v4297
    %4299 = vmatmul.bf16.gmra.mxu0 %v3728
    %v4300 = vpop.f32.mrf.mxu0
    %v4301 = vadd.f32 %v4252, %v4300
    %v4302 = vpop.f32.mrf.mxu0
    %v4303 = vadd.f32 %v4254, %v4302
    %4304 = vmatmul.bf16.gmra.mxu0 %v3731
    %v4305 = vpop.f32.mrf.mxu0
    %v4306 = vadd.f32 %v4257, %v4305
    %v4307 = vpop.f32.mrf.mxu0
    %v4308 = vadd.f32 %v4259, %v4307
    %4309 = vmatmul.bf16.gmra.mxu0 %v3734
    %v4310 = vpop.f32.mrf.mxu0
    %v4311 = vadd.f32 %v4262, %v4310
    %v4312 = vpop.f32.mrf.mxu0
    %v4313 = vadd.f32 %v4264, %v4312
    %4314 = vmatmul.bf16.gmra.mxu0 %v3737
    %v4315 = vpop.f32.mrf.mxu0
    %v4316 = vadd.f32 %v4267, %v4315
    %v4317 = vpop.f32.mrf.mxu0
    %v4318 = vadd.f32 %v4269, %v4317
    %4319 = vdwg.mxu0
    %v4320 = vtanh.pop %v4134
    %v4321 = vtanh.pop %v4281
    %v4322 = vtanh.pop %v4136
    %v4323 = vtanh.pop %v4283
    %v4324 = vtanh.pop %v4139
    %v4325 = vtanh.pop %v4286
    %v4326 = vtanh.pop %v4141
    %v4327 = vtanh.pop %v4288
    %v4328 = vtanh.pop %v4144
    %v4329 = vtanh.pop %v4291
    %v4330 = vtanh.pop %v4146
    %v4331 = vtanh.pop %v4293
    %v4332 = vtanh.pop %v4149
    %v4333 = vtanh.pop %v4296
    %v4334 = vtanh.pop %v4151
    %v4335 = vtanh.pop %v4298
    %v4336 = vtanh.pop %v4154
    %v4337 = vtanh.pop %v4301
    %v4338 = vtanh.pop %v4156
    %v4339 = vtanh.pop %v4303
    %v4340 = vtanh.pop %v4159
    %v4341 = vtanh.pop %v4306
    %v4342 = vtanh.pop %v4161
    %v4343 = vtanh.pop %v4308
    %v4344 = vtanh.pop %v4164
    %v4345 = vtanh.pop %v4311
    %v4346 = vtanh.pop %v4166
    %v4347 = vtanh.pop %v4313
    %v4348 = vtanh.pop %v4169
    %v4349 = vtanh.pop %v4316
    %v4350 = vtanh.pop %v4171
    %v4351 = vtanh.pop %v4318
    %4352 = vst [vmem:[%s67] sm:$0xff] %v4320
    %4353 = vst [vmem:[%s67 + $0x8] sm:$0xff] %v4321
    %4354 = vst [vmem:[%s67 + $0x10] sm:$0xff] %v4322
    %4355 = vst [vmem:[%s67 + $0x18] sm:$0xff] %v4323
    %4356 = vst [vmem:[%s67 + $0x20] sm:$0xff] %v4324
    %4357 = vst [vmem:[%s67 + $0x28] sm:$0xff] %v4325
    %4358 = vst [vmem:[%s67 + $0x30] sm:$0xff] %v4326
    %4359 = vst [vmem:[%s67 + $0x38] sm:$0xff] %v4327
    %4360 = vst [vmem:[%s67 + $0x40] sm:$0xff] %v4328
    %4361 = vst [vmem:[%s67 + $0x48] sm:$0xff] %v4329
    %4362 = vst [vmem:[%s67 + $0x50] sm:$0xff] %v4330
    %4363 = vst [vmem:[%s67 + $0x58] sm:$0xff] %v4331
    %4364 = vst [vmem:[%s67 + $0x60] sm:$0xff] %v4332
    %4365 = vst [vmem:[%s67 + $0x68] sm:$0xff] %v4333
    %4366 = vst [vmem:[%s67 + $0x70] sm:$0xff] %v4334
    %4367 = vst [vmem:[%s67 + $0x78] sm:$0xff] %v4335
    %4368 = vst [vmem:[%s67 + $0x80] sm:$0xff] %v4336
    %4369 = vst [vmem:[%s67 + $0x88] sm:$0xff] %v4337
    %4370 = vst [vmem:[%s67 + $0x90] sm:$0xff] %v4338
    %4371 = vst [vmem:[%s67 + $0x98] sm:$0xff] %v4339
    %4372 = vst [vmem:[%s67 + $0xa0] sm:$0xff] %v4340
    %4373 = vst [vmem:[%s67 + $0xa8] sm:$0xff] %v4341
    %4374 = vst [vmem:[%s67 + $0xb0] sm:$0xff] %v4342
    %4375 = vst [vmem:[%s67 + $0xb8] sm:$0xff] %v4343
    %4376 = vst [vmem:[%s67 + $0xc0] sm:$0xff] %v4344
    %4377 = vst [vmem:[%s67 + $0xc8] sm:$0xff] %v4345
    %4378 = vst [vmem:[%s67 + $0xd0] sm:$0xff] %v4346
    %4379 = vst [vmem:[%s67 + $0xd8] sm:$0xff] %v4347
    %4380 = vst [vmem:[%s67 + $0xe0] sm:$0xff] %v4348
    %4381 = vst [vmem:[%s67 + $0xe8] sm:$0xff] %v4349
    %4382 = vst [vmem:[%s67 + $0xf0] sm:$0xff] %v4350
    %4383 = vst [vmem:[%s67 + $0xf8] sm:$0xff] %v4351
    // Predicated region
    $region174: #{stage1_generator_forward.1} parent=1 // pred_check
      _
    $region175: #{stage1_generator_forward.1} parent=1 // pred_check_branch
      %4385 = sbr.rel (0) target = $region177
    $region176: #{stage1_generator_forward.1} parent=1 // pred_region
      _
    $region177: #{stage1_generator_forward.1} parent=1 // pred_fallthru
      _
    // Predicated region
    $region178: #{stage1_generator_forward.1} parent=1 // pred_check
      _
    $region179: #{stage1_generator_forward.1} parent=1 // pred_check_branch
      %4387 = sbr.rel (0) target = $region181
    $region180: #{stage1_generator_forward.1} parent=1 // pred_region
      %4389 = vsyncadd [#allocation6], 0
      %s4391 = sshll.u32 [#allocation21], 4
      %s4392 = int_to_ptr.vmem [resolvable:$true] %s4391
      %s4393 = sshll.u32 %s69, 4
      %s4394 = int_to_ptr.hbm [resolvable:$true] %s4393
      %4396 = dma.vmem_to_hbm [thread:$0]  %s4392, 32, %s4394, [#allocation6]
    $region181: #{stage1_generator_forward.1} parent=1 // pred_fallthru
      _
    // Predicated region
    $region182: #{stage1_generator_forward.1} parent=1 // pred_check
      _
    $region183: #{stage1_generator_forward.1} parent=1 // pred_check_branch
      %4398 = sbr.rel (0) target = $region185
    $region184: #{stage1_generator_forward.1} parent=1 // pred_region
      %4400 = vsyncadd [#allocation23], 0
      %s4402 = sshll.u32 [#allocation22], 4
      %s4403 = int_to_ptr.vmem [resolvable:$true] %s4402
      %s4404 = sshll.u32 %s71, 4
      %s4405 = int_to_ptr.hbm [resolvable:$true] %s4404
      %4407 = dma.vmem_to_hbm [thread:$0]  %s4403, 32, %s4405, [#allocation23]
    $region185: #{stage1_generator_forward.1} parent=1 // pred_fallthru
      _
    // Predicated region
    $region186: #{stage1_generator_forward.1} parent=1 // pred_check
      _
    $region187: #{stage1_generator_forward.1} parent=1 // pred_check_branch
      %4409 = sbr.rel (0) target = $region189
    $region188: #{stage1_generator_forward.1} parent=1 // pred_region
      _
    $region189: #{stage1_generator_forward.1} parent=1 // pred_fallthru
      _
    // Predicated region
    $region190: #{stage1_generator_forward.1} parent=1 // pred_check
      _
    $region191: #{stage1_generator_forward.1} parent=1 // pred_check_branch
      %4411 = sbr.rel (0) target = $region193
    $region192: #{stage1_generator_forward.1} parent=1 // pred_region
      %4413 = dma.done [#allocation6], 32
    $region193: #{stage1_generator_forward.1} parent=1 // pred_fallthru
      _
    // Predicated region
    $region194: #{stage1_generator_forward.1} parent=1 // pred_check
      _
    $region195: #{stage1_generator_forward.1} parent=1 // pred_check_branch
      %4415 = sbr.rel (0) target = $region197
    $region196: #{stage1_generator_forward.1} parent=1 // pred_region
      %4417 = dma.done [#allocation23], 32
    $region197: #{stage1_generator_forward.1} parent=1 // pred_fallthru
      _
    %4418 = vsyncpa [#allocation5], 1
    %4419 = vsyncpa [#allocation8], 1
    %4420 = vsyncpa [#allocation11], 1
    %4421 = vsyncpa [#allocation14], 1
    %4422 = vsyncpa [#allocation17], 1
    %4423 = vsyncpa [#allocation20], 1
    %4424 = vsyncpa [#allocation6], 1
    %4425 = vsyncpa [#allocation23], 1

</llo_original>
